<compile_context>
chip_gen: v6e
topology: v6e:2x2x1
jax: 0.10.0
libtpu: 0.0.40
codegen_flags: <defaults>
</compile_context>

<pallas_src>
import math
import functools

import jax
import jax.numpy as jnp
from jax.experimental import pallas as pl
from jax.experimental.pallas import tpu as pltpu


# ----------------------------------------------------------------------------
# Model hyper-parameters (small, synthetic "LongT5" config)
# ----------------------------------------------------------------------------
LAYER_EMBED_DIM = 16      # layer_embedding_dim
PROMPT_LEN      = 4       # prompt_length
SEQ_LEN         = 8       # teacher-forcing target length
D_MODEL         = 32      # longt5.config.d_model
N_HEADS         = 4
D_HEAD          = D_MODEL // N_HEADS
D_FF            = 64
N_LAYERS        = 2
VOCAB           = 128     # vocab_size after resize_token_embeddings
NUM_BUCKETS     = 32
MAX_DISTANCE    = 128
BATCH           = 2

T_TOTAL = PROMPT_LEN + SEQ_LEN                 # 12
T_PAD   = ((T_TOTAL + 7) // 8) * 8             # 16 (sublane-aligned)
HDH     = N_HEADS * D_HEAD                     # 32


# ----------------------------------------------------------------------------
# The single fused decoder kernel (one grid step == one batch element)
# ----------------------------------------------------------------------------
def _decoder_kernel(latent_ref, pw_ref, pb_ref, tgt_ref, bias_ref,
                    ln1_ref, wqkv_ref, wo_ref, ln2_ref, wi_ref, wf_ref,
                    fln_ref, lm_ref, out_ref):
    f32 = jnp.float32

    def rmsnorm(x, w):
        # T5 LayerNorm: no mean subtraction, no bias; w is (1, D).
        var = jnp.mean(x * x, axis=-1, keepdims=True)
        return x * jax.lax.rsqrt(var + 1e-6) * w

    # ---- prefix projection: latent (1, LE) @ per-position weight (LE, D) ----
    latent = latent_ref[0]                                       # (1, LE)
    rows = []
    for p in range(PROMPT_LEN):
        rows.append(jnp.dot(latent, pw_ref[p],
                            preferred_element_type=f32) + pb_ref[p])  # (1, D)
    # ---- concat prefix + target embeddings + zero pad rows -> (T_PAD, D) ----
    rows.append(tgt_ref[0].astype(f32))                          # (S, D)
    if T_PAD > T_TOTAL:
        rows.append(jnp.zeros((T_PAD - T_TOTAL, D_MODEL), f32))
    h = jnp.concatenate(rows, axis=0)                            # (T_PAD, D)

    # ---- decoder layers (static unrolled; all values stay in vregs/VMEM) ----
    for l in range(N_LAYERS):
        # --- self-attention block ---
        x = rmsnorm(h, ln1_ref[l])                               # (T_PAD, D)
        qkv = jnp.dot(x, wqkv_ref[l], preferred_element_type=f32)  # (T_PAD, 3*HDH)

        heads = []
        for hd in range(N_HEADS):
            qh = qkv[:,             hd * D_HEAD:            (hd + 1) * D_HEAD]
            kh = qkv[:,     HDH +   hd * D_HEAD:    HDH +   (hd + 1) * D_HEAD]
            vh = qkv[:, 2 * HDH +   hd * D_HEAD: 2 * HDH +  (hd + 1) * D_HEAD]
            # T5 attention: no 1/sqrt(d) scaling; additive rel-pos bias + mask.
            s = jax.lax.dot_general(qh, kh, (((1,), (1,)), ((), ())),
                                    preferred_element_type=f32)  # (T_PAD, T_PAD)
            s = s + bias_ref[0, hd]
            m = jnp.max(s, axis=-1, keepdims=True)
            pexp = jnp.exp(s - m)
            denom = jnp.sum(pexp, axis=-1, keepdims=True)
            oh = jnp.dot(pexp, vh, preferred_element_type=f32)   # (T_PAD, dh)
            heads.append(oh * pl.reciprocal(denom, approx=True))
        attn = jnp.concatenate(heads, axis=-1)                   # (T_PAD, HDH)
        h = h + jnp.dot(attn, wo_ref[l], preferred_element_type=f32)

        # --- feed-forward block (fused matmul + ReLU) ---
        x = rmsnorm(h, ln2_ref[l])
        ff = jnp.maximum(jnp.dot(x, wi_ref[l], preferred_element_type=f32), 0.0)
        h = h + jnp.dot(ff, wf_ref[l], preferred_element_type=f32)

    # ---- final norm + LM head (lane-dense (T_PAD, VOCAB=128) store) ----
    x = rmsnorm(h, fln_ref[...])
    out_ref[0] = jnp.dot(x, lm_ref[...],
                         preferred_element_type=f32).astype(out_ref.dtype)


def fused_decoder(latent3, target_emb, bias, params):
    """latent3: (B,1,LE), target_emb: (B,S,D), bias: (B,H,T_PAD,T_PAD)."""
    B = latent3.shape[0]

    def full(arr):
        return pl.BlockSpec(arr.shape, lambda b, nd=arr.ndim: (0,) * nd)

    in_specs = [
        pl.BlockSpec((1, 1, LAYER_EMBED_DIM), lambda b: (b, 0, 0)),          # latent
        full(params["prefix_w"]), full(params["prefix_b"]),
        pl.BlockSpec((1, SEQ_LEN, D_MODEL), lambda b: (b, 0, 0)),            # target
        pl.BlockSpec((1, N_HEADS, T_PAD, T_PAD), lambda b: (b, 0, 0, 0)),    # bias
        full(params["ln1"]), full(params["wqkv"]), full(params["wo"]),
        full(params["ln2"]), full(params["wi"]), full(params["wf"]),
        full(params["final_ln"]), full(params["lm_head"]),
    ]
    out_spec = pl.BlockSpec((1, T_PAD, VOCAB), lambda b: (b, 0, 0))

    return pl.pallas_call(
        _decoder_kernel,
        out_shape=jax.ShapeDtypeStruct((B, T_PAD, VOCAB), jnp.float32),
        grid=(B,),
        in_specs=in_specs,
        out_specs=out_spec,
        compiler_params=pltpu.CompilerParams(dimension_semantics=("parallel",)),
    )(latent3, params["prefix_w"], params["prefix_b"], target_emb, bias,
      params["ln1"], params["wqkv"], params["wo"], params["ln2"],
      params["wi"], params["wf"], params["final_ln"], params["lm_head"])


# ----------------------------------------------------------------------------
# Glue: T5 relative-position bucketing (causal / bidirectional=False)
# ----------------------------------------------------------------------------
def _relative_position_bucket(relative_position, num_buckets, max_distance):
    relative_position = -jnp.minimum(relative_position, 0)       # >= 0
    max_exact = num_buckets // 2
    is_small = relative_position < max_exact
    rp = jnp.maximum(relative_position, 1).astype(jnp.float32)
    rel_if_large = max_exact + (
        jnp.log(rp / max_exact)
        / math.log(max_distance / max_exact)
        * (num_buckets - max_exact)
    ).astype(jnp.int32)
    rel_if_large = jnp.minimum(rel_if_large, num_buckets - 1)
    return jnp.where(is_small, relative_position, rel_if_large)


def compute_position_bias(rel_table, total_len):
    ctx = jnp.arange(total_len)[:, None]
    mem = jnp.arange(total_len)[None, :]
    buckets = _relative_position_bucket(mem - ctx, NUM_BUCKETS, MAX_DISTANCE)
    values = rel_table[buckets]                       # (T, T, H)
    return jnp.transpose(values, (2, 0, 1))[None]     # (1, H, T, T)


# ----------------------------------------------------------------------------
# Parameter init (deterministic, synthetic) — per-layer weights pre-stacked
# ----------------------------------------------------------------------------
def init_params(key):
    keys = iter(jax.random.split(key, 64))
    nrm = lambda shape, s=0.05: s * jax.random.normal(next(keys), shape, jnp.float32)

    # prefix_proj = nn.Linear(layer_embedding_dim, prompt_length * d_model)
    prefix_w = nrm((LAYER_EMBED_DIM, PROMPT_LEN * D_MODEL))
    prefix_b = nrm((PROMPT_LEN * D_MODEL,))

    params = {
        # reshaped so the kernel can index one (LE, D) slab per prefix position
        "prefix_w": jnp.transpose(
            prefix_w.reshape(LAYER_EMBED_DIM, PROMPT_LEN, D_MODEL), (1, 0, 2)),
        "prefix_b": prefix_b.reshape(PROMPT_LEN, 1, D_MODEL),
        # token embedding table (after resize_token_embeddings(vocab_size))
        "embed": nrm((VOCAB, D_MODEL), 0.1),
        # shared relative-attention bias table (layer 0 computes it in T5)
        "rel_table": nrm((NUM_BUCKETS, N_HEADS), 0.1),
        # stacked per-layer weights (leading axis = layer)
        "ln1":  jnp.ones((N_LAYERS, 1, D_MODEL), jnp.float32),
        "wqkv": nrm((N_LAYERS, D_MODEL, 3 * HDH)),     # [q heads | k heads | v heads]
        "wo":   nrm((N_LAYERS, HDH, D_MODEL)),
        "ln2":  jnp.ones((N_LAYERS, 1, D_MODEL), jnp.float32),
        "wi":   nrm((N_LAYERS, D_MODEL, D_FF)),
        "wf":   nrm((N_LAYERS, D_FF, D_MODEL)),
        # final norm + LM head
        "final_ln": jnp.ones((1, D_MODEL), jnp.float32),
        "lm_head":  nrm((D_MODEL, VOCAB)),
    }
    return params


# ----------------------------------------------------------------------------
# Forward pass (teacher-forcing branch of LayerDecoderLongT5.forward)
# ----------------------------------------------------------------------------
@jax.jit
def forward(params, layer_latent, input_ids, attention_mask):
    B = layer_latent.shape[0]
    S = input_ids.shape[1]
    T = PROMPT_LEN + S

    # target_embeddings = get_input_embeddings()(input_ids)   (XLA gather glue)
    target = params["embed"][input_ids]                       # (B, S, D)

    # full_attention_mask = cat([ones(B, P), attention_mask], dim=1), padded to T_PAD
    prefix_mask = jnp.ones((B, PROMPT_LEN), jnp.float32)
    full_mask = jnp.concatenate(
        [prefix_mask, attention_mask.astype(jnp.float32),
         jnp.zeros((B, T_PAD - T), jnp.float32)], axis=1)     # (B, T_PAD)

    # decoder self-attention bias: rel-pos bias + causal mask + padding mask
    rel_bias = compute_position_bias(params["rel_table"], T_PAD)   # (1, H, Tp, Tp)
    causal = jnp.tril(jnp.ones((T_PAD, T_PAD), jnp.float32))
    extended = causal[None, None, :, :] * full_mask[:, None, None, :]
    add_mask = (1.0 - extended) * -1e9
    bias = rel_bias + add_mask                                # (B, H, Tp, Tp)

    latent3 = layer_latent.reshape(B, 1, LAYER_EMBED_DIM)

    # TODO(synk): LongT5 cross-attention / encoder stack omitted — this forward
    # supplies no encoder inputs, so only the decoder path is modeled.
    logits_full = fused_decoder(latent3, target, bias, params)   # (B, T_PAD, V)

    # logits = outputs.logits[:, prompt_length:, :]  (pad rows are discarded too)
    return logits_full[:, PROMPT_LEN:PROMPT_LEN + S, :]


# ----------------------------------------------------------------------------
if __name__ == "__main__":
    key = jax.random.PRNGKey(0)
    k_param, k_lat, k_ids = jax.random.split(key, 3)

    params = init_params(k_param)
    layer_latent = jax.random.normal(k_lat, (BATCH, LAYER_EMBED_DIM), jnp.float32)
    input_ids = jax.random.randint(k_ids, (BATCH, SEQ_LEN), 0, VOCAB)
    attention_mask = jnp.ones((BATCH, SEQ_LEN), jnp.float32)

    logits = forward(params, layer_latent, input_ids, attention_mask)
    jax.block_until_ready(logits)

    assert logits.shape == (BATCH, SEQ_LEN, VOCAB), logits.shape
    assert logits.dtype == jnp.float32
    assert bool(jnp.all(jnp.isfinite(logits)))
    print("KERNEL_OK")
</pallas_src>

<mosaic_0001>
module attributes {stable_mosaic.version = 11 : i64} {
  func.func @_decoder_kernel(%arg0: i32, %arg1: memref<1x1x16xf32, #tpu.memory_space<vmem>>, %arg2: memref<4x16x32xf32, #tpu.memory_space<vmem>>, %arg3: memref<4x1x32xf32, #tpu.memory_space<vmem>>, %arg4: memref<1x8x32xf32, #tpu.memory_space<vmem>>, %arg5: memref<1x4x16x16xf32, #tpu.memory_space<vmem>>, %arg6: memref<2x1x32xf32, #tpu.memory_space<vmem>>, %arg7: memref<2x32x96xf32, #tpu.memory_space<vmem>>, %arg8: memref<2x32x32xf32, #tpu.memory_space<vmem>>, %arg9: memref<2x1x32xf32, #tpu.memory_space<vmem>>, %arg10: memref<2x32x64xf32, #tpu.memory_space<vmem>>, %arg11: memref<2x64x32xf32, #tpu.memory_space<vmem>>, %arg12: memref<1x32xf32, #tpu.memory_space<vmem>>, %arg13: memref<32x128xf32, #tpu.memory_space<vmem>>, %arg14: memref<1x16x128xf32, #tpu.memory_space<vmem>>) attributes {dimension_semantics = [#tpu.dimension_semantics<parallel>], iteration_bounds = array<i64: 2>, scalar_prefetch = 0 : i64, scratch_operands = 0 : i64, tpu.core_type = #tpu.core_type<tc>, window_params = [{transform_indices = @transform_0, window_bounds = array<i64: 1, 1, 16>}, {pipeline_mode = #tpu.pipeline_mode<synchronous>, transform_indices = @transform_1, window_bounds = array<i64: 4, 16, 32>}, {pipeline_mode = #tpu.pipeline_mode<synchronous>, transform_indices = @transform_2, window_bounds = array<i64: 4, 1, 32>}, {transform_indices = @transform_3, window_bounds = array<i64: 1, 8, 32>}, {transform_indices = @transform_4, window_bounds = array<i64: 1, 4, 16, 16>}, {pipeline_mode = #tpu.pipeline_mode<synchronous>, transform_indices = @transform_5, window_bounds = array<i64: 2, 1, 32>}, {pipeline_mode = #tpu.pipeline_mode<synchronous>, transform_indices = @transform_6, window_bounds = array<i64: 2, 32, 96>}, {pipeline_mode = #tpu.pipeline_mode<synchronous>, transform_indices = @transform_7, window_bounds = array<i64: 2, 32, 32>}, {pipeline_mode = #tpu.pipeline_mode<synchronous>, transform_indices = @transform_8, window_bounds = array<i64: 2, 1, 32>}, {pipeline_mode = #tpu.pipeline_mode<synchronous>, transform_indices = @transform_9, window_bounds = array<i64: 2, 32, 64>}, {pipeline_mode = #tpu.pipeline_mode<synchronous>, transform_indices = @transform_10, window_bounds = array<i64: 2, 64, 32>}, {pipeline_mode = #tpu.pipeline_mode<synchronous>, transform_indices = @transform_11, window_bounds = array<i64: 1, 32>}, {pipeline_mode = #tpu.pipeline_mode<synchronous>, transform_indices = @transform_12, window_bounds = array<i64: 32, 128>}, {transform_indices = @transform_13, window_bounds = array<i64: 1, 16, 128>}]} {
    %c0 = arith.constant 0 : index
    %c0_0 = arith.constant 0 : index
    %c0_1 = arith.constant 0 : index
    %0 = vector.load %arg1[%c0, %c0_0, %c0_1] : memref<1x1x16xf32, #tpu.memory_space<vmem>>, vector<1x1x16xf32>
    %1 = vector.shape_cast %0 : vector<1x1x16xf32> to vector<1x16xf32>
    %c0_2 = arith.constant 0 : index
    %c0_3 = arith.constant 0 : index
    %c0_4 = arith.constant 0 : index
    %2 = vector.load %arg2[%c0_2, %c0_3, %c0_4] : memref<4x16x32xf32, #tpu.memory_space<vmem>>, vector<1x16x32xf32>
    %3 = vector.shape_cast %2 : vector<1x16x32xf32> to vector<16x32xf32>
    %cst = arith.constant dense<0.000000e+00> : vector<1x32xf32>
    %4 = tpu.matmul %1, %3, %cst {dimension_numbers = #tpu.dot_dimension_numbers<[1], [0], [0], [1], [0, 0, 1, 1], [], []>} : vector<1x16xf32>, vector<16x32xf32>, vector<1x32xf32> -> vector<1x32xf32>
    %c0_5 = arith.constant 0 : index
    %c0_6 = arith.constant 0 : index
    %c0_7 = arith.constant 0 : index
    %5 = vector.load %arg3[%c0_5, %c0_6, %c0_7] : memref<4x1x32xf32, #tpu.memory_space<vmem>>, vector<1x1x32xf32>
    %6 = vector.shape_cast %5 : vector<1x1x32xf32> to vector<1x32xf32>
    %7 = arith.addf %4, %6 : vector<1x32xf32>
    %c1 = arith.constant 1 : index
    %c0_8 = arith.constant 0 : index
    %c0_9 = arith.constant 0 : index
    %8 = vector.load %arg2[%c1, %c0_8, %c0_9] : memref<4x16x32xf32, #tpu.memory_space<vmem>>, vector<1x16x32xf32>
    %9 = vector.shape_cast %8 : vector<1x16x32xf32> to vector<16x32xf32>
    %cst_10 = arith.constant dense<0.000000e+00> : vector<1x32xf32>
    %10 = tpu.matmul %1, %9, %cst_10 {dimension_numbers = #tpu.dot_dimension_numbers<[1], [0], [0], [1], [0, 0, 1, 1], [], []>} : vector<1x16xf32>, vector<16x32xf32>, vector<1x32xf32> -> vector<1x32xf32>
    %c1_11 = arith.constant 1 : index
    %c0_12 = arith.constant 0 : index
    %c0_13 = arith.constant 0 : index
    %11 = vector.load %arg3[%c1_11, %c0_12, %c0_13] : memref<4x1x32xf32, #tpu.memory_space<vmem>>, vector<1x1x32xf32>
    %12 = vector.shape_cast %11 : vector<1x1x32xf32> to vector<1x32xf32>
    %13 = arith.addf %10, %12 : vector<1x32xf32>
    %c2 = arith.constant 2 : index
    %c0_14 = arith.constant 0 : index
    %c0_15 = arith.constant 0 : index
    %14 = vector.load %arg2[%c2, %c0_14, %c0_15] : memref<4x16x32xf32, #tpu.memory_space<vmem>>, vector<1x16x32xf32>
    %15 = vector.shape_cast %14 : vector<1x16x32xf32> to vector<16x32xf32>
    %cst_16 = arith.constant dense<0.000000e+00> : vector<1x32xf32>
    %16 = tpu.matmul %1, %15, %cst_16 {dimension_numbers = #tpu.dot_dimension_numbers<[1], [0], [0], [1], [0, 0, 1, 1], [], []>} : vector<1x16xf32>, vector<16x32xf32>, vector<1x32xf32> -> vector<1x32xf32>
    %c2_17 = arith.constant 2 : index
    %c0_18 = arith.constant 0 : index
    %c0_19 = arith.constant 0 : index
    %17 = vector.load %arg3[%c2_17, %c0_18, %c0_19] : memref<4x1x32xf32, #tpu.memory_space<vmem>>, vector<1x1x32xf32>
    %18 = vector.shape_cast %17 : vector<1x1x32xf32> to vector<1x32xf32>
    %19 = arith.addf %16, %18 : vector<1x32xf32>
    %c3 = arith.constant 3 : index
    %c0_20 = arith.constant 0 : index
    %c0_21 = arith.constant 0 : index
    %20 = vector.load %arg2[%c3, %c0_20, %c0_21] : memref<4x16x32xf32, #tpu.memory_space<vmem>>, vector<1x16x32xf32>
    %21 = vector.shape_cast %20 : vector<1x16x32xf32> to vector<16x32xf32>
    %cst_22 = arith.constant dense<0.000000e+00> : vector<1x32xf32>
    %22 = tpu.matmul %1, %21, %cst_22 {dimension_numbers = #tpu.dot_dimension_numbers<[1], [0], [0], [1], [0, 0, 1, 1], [], []>} : vector<1x16xf32>, vector<16x32xf32>, vector<1x32xf32> -> vector<1x32xf32>
    %c3_23 = arith.constant 3 : index
    %c0_24 = arith.constant 0 : index
    %c0_25 = arith.constant 0 : index
    %23 = vector.load %arg3[%c3_23, %c0_24, %c0_25] : memref<4x1x32xf32, #tpu.memory_space<vmem>>, vector<1x1x32xf32>
    %24 = vector.shape_cast %23 : vector<1x1x32xf32> to vector<1x32xf32>
    %25 = arith.addf %22, %24 : vector<1x32xf32>
    %c0_26 = arith.constant 0 : index
    %c0_27 = arith.constant 0 : index
    %c0_28 = arith.constant 0 : index
    %26 = vector.load %arg4[%c0_26, %c0_27, %c0_28] : memref<1x8x32xf32, #tpu.memory_space<vmem>>, vector<1x8x32xf32>
    %27 = vector.shape_cast %26 : vector<1x8x32xf32> to vector<8x32xf32>
    %cst_29 = arith.constant 0.000000e+00 : f32
    %28 = vector.broadcast %cst_29 : f32 to vector<4x32xf32>
    %29 = tpu.concatenate %7, %13, %19, %25, %27, %28 in 0 : vector<1x32xf32>, vector<1x32xf32>, vector<1x32xf32>, vector<1x32xf32>, vector<8x32xf32>, vector<4x32xf32> -> vector<16x32xf32>
    %c0_30 = arith.constant 0 : index
    %c0_31 = arith.constant 0 : index
    %c0_32 = arith.constant 0 : index
    %30 = vector.load %arg6[%c0_30, %c0_31, %c0_32] : memref<2x1x32xf32, #tpu.memory_space<vmem>>, vector<1x1x32xf32>
    %31 = vector.shape_cast %30 : vector<1x1x32xf32> to vector<1x32xf32>
    %32 = arith.mulf %29, %29 : vector<16x32xf32>
    %cst_33 = arith.constant dense<0.000000e+00> : vector<16xf32>
    %33 = vector.multi_reduction <add>, %32, %cst_33 [1] : vector<16x32xf32> to vector<16xf32>
    %34 = vector.shape_cast %33 : vector<16xf32> to vector<16x1xf32>
    %cst_34 = arith.constant 3.200000e+01 : f32
    %35 = vector.broadcast %cst_34 : f32 to vector<16x1xf32>
    %36 = arith.divf %34, %35 : vector<16x1xf32>
    %cst_35 = arith.constant 9.99999997E-7 : f32
    %37 = vector.broadcast %cst_35 : f32 to vector<16x1xf32>
    %38 = arith.addf %36, %37 : vector<16x1xf32>
    %39 = math.rsqrt %38 : vector<16x1xf32>
    %40 = vector.broadcast %39 : vector<16x1xf32> to vector<16x32xf32>
    %41 = arith.mulf %29, %40 : vector<16x32xf32>
    %42 = vector.broadcast %31 : vector<1x32xf32> to vector<16x32xf32>
    %43 = arith.mulf %41, %42 : vector<16x32xf32>
    %c0_36 = arith.constant 0 : index
    %c0_37 = arith.constant 0 : index
    %c0_38 = arith.constant 0 : index
    %44 = vector.load %arg7[%c0_36, %c0_37, %c0_38] : memref<2x32x96xf32, #tpu.memory_space<vmem>>, vector<1x32x96xf32>
    %45 = vector.shape_cast %44 : vector<1x32x96xf32> to vector<32x96xf32>
    %cst_39 = arith.constant dense<0.000000e+00> : vector<16x96xf32>
    %46 = tpu.matmul %43, %45, %cst_39 {dimension_numbers = #tpu.dot_dimension_numbers<[1], [0], [0], [1], [0, 0, 1, 1], [], []>} : vector<16x32xf32>, vector<32x96xf32>, vector<16x96xf32> -> vector<16x96xf32>
    %47 = vector.extract_strided_slice %46 {offsets = [0, 0], sizes = [16, 8], strides = [1, 1]} : vector<16x96xf32> to vector<16x8xf32>
    %48 = vector.extract_strided_slice %46 {offsets = [0, 32], sizes = [16, 8], strides = [1, 1]} : vector<16x96xf32> to vector<16x8xf32>
    %49 = vector.extract_strided_slice %46 {offsets = [0, 64], sizes = [16, 8], strides = [1, 1]} : vector<16x96xf32> to vector<16x8xf32>
    %cst_40 = arith.constant dense<0.000000e+00> : vector<16x16xf32>
    %50 = tpu.matmul %47, %48, %cst_40 {dimension_numbers = #tpu.dot_dimension_numbers<[1], [1], [0], [0], [0, 0, 1, 0], [], []>} : vector<16x8xf32>, vector<16x8xf32>, vector<16x16xf32> -> vector<16x16xf32>
    %c0_41 = arith.constant 0 : index
    %c0_42 = arith.constant 0 : index
    %c0_43 = arith.constant 0 : index
    %c0_44 = arith.constant 0 : index
    %51 = vector.load %arg5[%c0_41, %c0_42, %c0_43, %c0_44] : memref<1x4x16x16xf32, #tpu.memory_space<vmem>>, vector<1x1x16x16xf32>
    %52 = vector.shape_cast %51 : vector<1x1x16x16xf32> to vector<16x16xf32>
    %53 = arith.addf %50, %52 : vector<16x16xf32>
    %cst_45 = arith.constant dense<0xFF800000> : vector<16xf32>
    %54 = vector.multi_reduction <maximumf>, %53, %cst_45 [1] : vector<16x16xf32> to vector<16xf32>
    %55 = vector.shape_cast %54 : vector<16xf32> to vector<16x1xf32>
    %56 = vector.broadcast %55 : vector<16x1xf32> to vector<16x16xf32>
    %57 = arith.subf %53, %56 : vector<16x16xf32>
    %58 = math.exp %57 : vector<16x16xf32>
    %cst_46 = arith.constant dense<0.000000e+00> : vector<16xf32>
    %59 = vector.multi_reduction <add>, %58, %cst_46 [1] : vector<16x16xf32> to vector<16xf32>
    %60 = vector.shape_cast %59 : vector<16xf32> to vector<16x1xf32>
    %cst_47 = arith.constant dense<0.000000e+00> : vector<16x8xf32>
    %61 = tpu.matmul %58, %49, %cst_47 {dimension_numbers = #tpu.dot_dimension_numbers<[1], [0], [0], [1], [0, 0, 1, 1], [], []>} : vector<16x16xf32>, vector<16x8xf32>, vector<16x8xf32> -> vector<16x8xf32>
    %62 = tpu.reciprocal %60 {approx = true} : vector<16x1xf32> -> vector<16x1xf32>
    %63 = vector.broadcast %62 : vector<16x1xf32> to vector<16x8xf32>
    %64 = arith.mulf %61, %63 : vector<16x8xf32>
    %65 = vector.extract_strided_slice %46 {offsets = [0, 8], sizes = [16, 8], strides = [1, 1]} : vector<16x96xf32> to vector<16x8xf32>
    %66 = vector.extract_strided_slice %46 {offsets = [0, 40], sizes = [16, 8], strides = [1, 1]} : vector<16x96xf32> to vector<16x8xf32>
    %67 = vector.extract_strided_slice %46 {offsets = [0, 72], sizes = [16, 8], strides = [1, 1]} : vector<16x96xf32> to vector<16x8xf32>
    %cst_48 = arith.constant dense<0.000000e+00> : vector<16x16xf32>
    %68 = tpu.matmul %65, %66, %cst_48 {dimension_numbers = #tpu.dot_dimension_numbers<[1], [1], [0], [0], [0, 0, 1, 0], [], []>} : vector<16x8xf32>, vector<16x8xf32>, vector<16x16xf32> -> vector<16x16xf32>
    %c0_49 = arith.constant 0 : index
    %c1_50 = arith.constant 1 : index
    %c0_51 = arith.constant 0 : index
    %c0_52 = arith.constant 0 : index
    %69 = vector.load %arg5[%c0_49, %c1_50, %c0_51, %c0_52] : memref<1x4x16x16xf32, #tpu.memory_space<vmem>>, vector<1x1x16x16xf32>
    %70 = vector.shape_cast %69 : vector<1x1x16x16xf32> to vector<16x16xf32>
    %71 = arith.addf %68, %70 : vector<16x16xf32>
    %cst_53 = arith.constant dense<0xFF800000> : vector<16xf32>
    %72 = vector.multi_reduction <maximumf>, %71, %cst_53 [1] : vector<16x16xf32> to vector<16xf32>
    %73 = vector.shape_cast %72 : vector<16xf32> to vector<16x1xf32>
    %74 = vector.broadcast %73 : vector<16x1xf32> to vector<16x16xf32>
    %75 = arith.subf %71, %74 : vector<16x16xf32>
    %76 = math.exp %75 : vector<16x16xf32>
    %cst_54 = arith.constant dense<0.000000e+00> : vector<16xf32>
    %77 = vector.multi_reduction <add>, %76, %cst_54 [1] : vector<16x16xf32> to vector<16xf32>
    %78 = vector.shape_cast %77 : vector<16xf32> to vector<16x1xf32>
    %cst_55 = arith.constant dense<0.000000e+00> : vector<16x8xf32>
    %79 = tpu.matmul %76, %67, %cst_55 {dimension_numbers = #tpu.dot_dimension_numbers<[1], [0], [0], [1], [0, 0, 1, 1], [], []>} : vector<16x16xf32>, vector<16x8xf32>, vector<16x8xf32> -> vector<16x8xf32>
    %80 = tpu.reciprocal %78 {approx = true} : vector<16x1xf32> -> vector<16x1xf32>
    %81 = vector.broadcast %80 : vector<16x1xf32> to vector<16x8xf32>
    %82 = arith.mulf %79, %81 : vector<16x8xf32>
    %83 = vector.extract_strided_slice %46 {offsets = [0, 16], sizes = [16, 8], strides = [1, 1]} : vector<16x96xf32> to vector<16x8xf32>
    %84 = vector.extract_strided_slice %46 {offsets = [0, 48], sizes = [16, 8], strides = [1, 1]} : vector<16x96xf32> to vector<16x8xf32>
    %85 = vector.extract_strided_slice %46 {offsets = [0, 80], sizes = [16, 8], strides = [1, 1]} : vector<16x96xf32> to vector<16x8xf32>
    %cst_56 = arith.constant dense<0.000000e+00> : vector<16x16xf32>
    %86 = tpu.matmul %83, %84, %cst_56 {dimension_numbers = #tpu.dot_dimension_numbers<[1], [1], [0], [0], [0, 0, 1, 0], [], []>} : vector<16x8xf32>, vector<16x8xf32>, vector<16x16xf32> -> vector<16x16xf32>
    %c0_57 = arith.constant 0 : index
    %c2_58 = arith.constant 2 : index
    %c0_59 = arith.constant 0 : index
    %c0_60 = arith.constant 0 : index
    %87 = vector.load %arg5[%c0_57, %c2_58, %c0_59, %c0_60] : memref<1x4x16x16xf32, #tpu.memory_space<vmem>>, vector<1x1x16x16xf32>
    %88 = vector.shape_cast %87 : vector<1x1x16x16xf32> to vector<16x16xf32>
    %89 = arith.addf %86, %88 : vector<16x16xf32>
    %cst_61 = arith.constant dense<0xFF800000> : vector<16xf32>
    %90 = vector.multi_reduction <maximumf>, %89, %cst_61 [1] : vector<16x16xf32> to vector<16xf32>
    %91 = vector.shape_cast %90 : vector<16xf32> to vector<16x1xf32>
    %92 = vector.broadcast %91 : vector<16x1xf32> to vector<16x16xf32>
    %93 = arith.subf %89, %92 : vector<16x16xf32>
    %94 = math.exp %93 : vector<16x16xf32>
    %cst_62 = arith.constant dense<0.000000e+00> : vector<16xf32>
    %95 = vector.multi_reduction <add>, %94, %cst_62 [1] : vector<16x16xf32> to vector<16xf32>
    %96 = vector.shape_cast %95 : vector<16xf32> to vector<16x1xf32>
    %cst_63 = arith.constant dense<0.000000e+00> : vector<16x8xf32>
    %97 = tpu.matmul %94, %85, %cst_63 {dimension_numbers = #tpu.dot_dimension_numbers<[1], [0], [0], [1], [0, 0, 1, 1], [], []>} : vector<16x16xf32>, vector<16x8xf32>, vector<16x8xf32> -> vector<16x8xf32>
    %98 = tpu.reciprocal %96 {approx = true} : vector<16x1xf32> -> vector<16x1xf32>
    %99 = vector.broadcast %98 : vector<16x1xf32> to vector<16x8xf32>
    %100 = arith.mulf %97, %99 : vector<16x8xf32>
    %101 = vector.extract_strided_slice %46 {offsets = [0, 24], sizes = [16, 8], strides = [1, 1]} : vector<16x96xf32> to vector<16x8xf32>
    %102 = vector.extract_strided_slice %46 {offsets = [0, 56], sizes = [16, 8], strides = [1, 1]} : vector<16x96xf32> to vector<16x8xf32>
    %103 = vector.extract_strided_slice %46 {offsets = [0, 88], sizes = [16, 8], strides = [1, 1]} : vector<16x96xf32> to vector<16x8xf32>
    %cst_64 = arith.constant dense<0.000000e+00> : vector<16x16xf32>
    %104 = tpu.matmul %101, %102, %cst_64 {dimension_numbers = #tpu.dot_dimension_numbers<[1], [1], [0], [0], [0, 0, 1, 0], [], []>} : vector<16x8xf32>, vector<16x8xf32>, vector<16x16xf32> -> vector<16x16xf32>
    %c0_65 = arith.constant 0 : index
    %c3_66 = arith.constant 3 : index
    %c0_67 = arith.constant 0 : index
    %c0_68 = arith.constant 0 : index
    %105 = vector.load %arg5[%c0_65, %c3_66, %c0_67, %c0_68] : memref<1x4x16x16xf32, #tpu.memory_space<vmem>>, vector<1x1x16x16xf32>
    %106 = vector.shape_cast %105 : vector<1x1x16x16xf32> to vector<16x16xf32>
    %107 = arith.addf %104, %106 : vector<16x16xf32>
    %cst_69 = arith.constant dense<0xFF800000> : vector<16xf32>
    %108 = vector.multi_reduction <maximumf>, %107, %cst_69 [1] : vector<16x16xf32> to vector<16xf32>
    %109 = vector.shape_cast %108 : vector<16xf32> to vector<16x1xf32>
    %110 = vector.broadcast %109 : vector<16x1xf32> to vector<16x16xf32>
    %111 = arith.subf %107, %110 : vector<16x16xf32>
    %112 = math.exp %111 : vector<16x16xf32>
    %cst_70 = arith.constant dense<0.000000e+00> : vector<16xf32>
    %113 = vector.multi_reduction <add>, %112, %cst_70 [1] : vector<16x16xf32> to vector<16xf32>
    %114 = vector.shape_cast %113 : vector<16xf32> to vector<16x1xf32>
    %cst_71 = arith.constant dense<0.000000e+00> : vector<16x8xf32>
    %115 = tpu.matmul %112, %103, %cst_71 {dimension_numbers = #tpu.dot_dimension_numbers<[1], [0], [0], [1], [0, 0, 1, 1], [], []>} : vector<16x16xf32>, vector<16x8xf32>, vector<16x8xf32> -> vector<16x8xf32>
    %116 = tpu.reciprocal %114 {approx = true} : vector<16x1xf32> -> vector<16x1xf32>
    %117 = vector.broadcast %116 : vector<16x1xf32> to vector<16x8xf32>
    %118 = arith.mulf %115, %117 : vector<16x8xf32>
    %119 = tpu.concatenate %64, %82, %100, %118 in 1 : vector<16x8xf32>, vector<16x8xf32>, vector<16x8xf32>, vector<16x8xf32> -> vector<16x32xf32>
    %c0_72 = arith.constant 0 : index
    %c0_73 = arith.constant 0 : index
    %c0_74 = arith.constant 0 : index
    %120 = vector.load %arg8[%c0_72, %c0_73, %c0_74] : memref<2x32x32xf32, #tpu.memory_space<vmem>>, vector<1x32x32xf32>
    %121 = vector.shape_cast %120 : vector<1x32x32xf32> to vector<32x32xf32>
    %cst_75 = arith.constant dense<0.000000e+00> : vector<16x32xf32>
    %122 = tpu.matmul %119, %121, %cst_75 {dimension_numbers = #tpu.dot_dimension_numbers<[1], [0], [0], [1], [0, 0, 1, 1], [], []>} : vector<16x32xf32>, vector<32x32xf32>, vector<16x32xf32> -> vector<16x32xf32>
    %123 = arith.addf %29, %122 : vector<16x32xf32>
    %c0_76 = arith.constant 0 : index
    %c0_77 = arith.constant 0 : index
    %c0_78 = arith.constant 0 : index
    %124 = vector.load %arg9[%c0_76, %c0_77, %c0_78] : memref<2x1x32xf32, #tpu.memory_space<vmem>>, vector<1x1x32xf32>
    %125 = vector.shape_cast %124 : vector<1x1x32xf32> to vector<1x32xf32>
    %126 = arith.mulf %123, %123 : vector<16x32xf32>
    %cst_79 = arith.constant dense<0.000000e+00> : vector<16xf32>
    %127 = vector.multi_reduction <add>, %126, %cst_79 [1] : vector<16x32xf32> to vector<16xf32>
    %128 = vector.shape_cast %127 : vector<16xf32> to vector<16x1xf32>
    %cst_80 = arith.constant 3.200000e+01 : f32
    %129 = vector.broadcast %cst_80 : f32 to vector<16x1xf32>
    %130 = arith.divf %128, %129 : vector<16x1xf32>
    %cst_81 = arith.constant 9.99999997E-7 : f32
    %131 = vector.broadcast %cst_81 : f32 to vector<16x1xf32>
    %132 = arith.addf %130, %131 : vector<16x1xf32>
    %133 = math.rsqrt %132 : vector<16x1xf32>
    %134 = vector.broadcast %133 : vector<16x1xf32> to vector<16x32xf32>
    %135 = arith.mulf %123, %134 : vector<16x32xf32>
    %136 = vector.broadcast %125 : vector<1x32xf32> to vector<16x32xf32>
    %137 = arith.mulf %135, %136 : vector<16x32xf32>
    %c0_82 = arith.constant 0 : index
    %c0_83 = arith.constant 0 : index
    %c0_84 = arith.constant 0 : index
    %138 = vector.load %arg10[%c0_82, %c0_83, %c0_84] : memref<2x32x64xf32, #tpu.memory_space<vmem>>, vector<1x32x64xf32>
    %139 = vector.shape_cast %138 : vector<1x32x64xf32> to vector<32x64xf32>
    %cst_85 = arith.constant dense<0.000000e+00> : vector<16x64xf32>
    %140 = tpu.matmul %137, %139, %cst_85 {dimension_numbers = #tpu.dot_dimension_numbers<[1], [0], [0], [1], [0, 0, 1, 1], [], []>} : vector<16x32xf32>, vector<32x64xf32>, vector<16x64xf32> -> vector<16x64xf32>
    %cst_86 = arith.constant 0.000000e+00 : f32
    %141 = vector.broadcast %cst_86 : f32 to vector<16x64xf32>
    %142 = arith.maximumf %140, %141 : vector<16x64xf32>
    %c0_87 = arith.constant 0 : index
    %c0_88 = arith.constant 0 : index
    %c0_89 = arith.constant 0 : index
    %143 = vector.load %arg11[%c0_87, %c0_88, %c0_89] : memref<2x64x32xf32, #tpu.memory_space<vmem>>, vector<1x64x32xf32>
    %144 = vector.shape_cast %143 : vector<1x64x32xf32> to vector<64x32xf32>
    %cst_90 = arith.constant dense<0.000000e+00> : vector<16x32xf32>
    %145 = tpu.matmul %142, %144, %cst_90 {dimension_numbers = #tpu.dot_dimension_numbers<[1], [0], [0], [1], [0, 0, 1, 1], [], []>} : vector<16x64xf32>, vector<64x32xf32>, vector<16x32xf32> -> vector<16x32xf32>
    %146 = arith.addf %123, %145 : vector<16x32xf32>
    %c1_91 = arith.constant 1 : index
    %c0_92 = arith.constant 0 : index
    %c0_93 = arith.constant 0 : index
    %147 = vector.load %arg6[%c1_91, %c0_92, %c0_93] : memref<2x1x32xf32, #tpu.memory_space<vmem>>, vector<1x1x32xf32>
    %148 = vector.shape_cast %147 : vector<1x1x32xf32> to vector<1x32xf32>
    %149 = arith.mulf %146, %146 : vector<16x32xf32>
    %cst_94 = arith.constant dense<0.000000e+00> : vector<16xf32>
    %150 = vector.multi_reduction <add>, %149, %cst_94 [1] : vector<16x32xf32> to vector<16xf32>
    %151 = vector.shape_cast %150 : vector<16xf32> to vector<16x1xf32>
    %cst_95 = arith.constant 3.200000e+01 : f32
    %152 = vector.broadcast %cst_95 : f32 to vector<16x1xf32>
    %153 = arith.divf %151, %152 : vector<16x1xf32>
    %cst_96 = arith.constant 9.99999997E-7 : f32
    %154 = vector.broadcast %cst_96 : f32 to vector<16x1xf32>
    %155 = arith.addf %153, %154 : vector<16x1xf32>
    %156 = math.rsqrt %155 : vector<16x1xf32>
    %157 = vector.broadcast %156 : vector<16x1xf32> to vector<16x32xf32>
    %158 = arith.mulf %146, %157 : vector<16x32xf32>
    %159 = vector.broadcast %148 : vector<1x32xf32> to vector<16x32xf32>
    %160 = arith.mulf %158, %159 : vector<16x32xf32>
    %c1_97 = arith.constant 1 : index
    %c0_98 = arith.constant 0 : index
    %c0_99 = arith.constant 0 : index
    %161 = vector.load %arg7[%c1_97, %c0_98, %c0_99] : memref<2x32x96xf32, #tpu.memory_space<vmem>>, vector<1x32x96xf32>
    %162 = vector.shape_cast %161 : vector<1x32x96xf32> to vector<32x96xf32>
    %cst_100 = arith.constant dense<0.000000e+00> : vector<16x96xf32>
    %163 = tpu.matmul %160, %162, %cst_100 {dimension_numbers = #tpu.dot_dimension_numbers<[1], [0], [0], [1], [0, 0, 1, 1], [], []>} : vector<16x32xf32>, vector<32x96xf32>, vector<16x96xf32> -> vector<16x96xf32>
    %164 = vector.extract_strided_slice %163 {offsets = [0, 0], sizes = [16, 8], strides = [1, 1]} : vector<16x96xf32> to vector<16x8xf32>
    %165 = vector.extract_strided_slice %163 {offsets = [0, 32], sizes = [16, 8], strides = [1, 1]} : vector<16x96xf32> to vector<16x8xf32>
    %166 = vector.extract_strided_slice %163 {offsets = [0, 64], sizes = [16, 8], strides = [1, 1]} : vector<16x96xf32> to vector<16x8xf32>
    %cst_101 = arith.constant dense<0.000000e+00> : vector<16x16xf32>
    %167 = tpu.matmul %164, %165, %cst_101 {dimension_numbers = #tpu.dot_dimension_numbers<[1], [1], [0], [0], [0, 0, 1, 0], [], []>} : vector<16x8xf32>, vector<16x8xf32>, vector<16x16xf32> -> vector<16x16xf32>
    %c0_102 = arith.constant 0 : index
    %c0_103 = arith.constant 0 : index
    %c0_104 = arith.constant 0 : index
    %c0_105 = arith.constant 0 : index
    %168 = vector.load %arg5[%c0_102, %c0_103, %c0_104, %c0_105] : memref<1x4x16x16xf32, #tpu.memory_space<vmem>>, vector<1x1x16x16xf32>
    %169 = vector.shape_cast %168 : vector<1x1x16x16xf32> to vector<16x16xf32>
    %170 = arith.addf %167, %169 : vector<16x16xf32>
    %cst_106 = arith.constant dense<0xFF800000> : vector<16xf32>
    %171 = vector.multi_reduction <maximumf>, %170, %cst_106 [1] : vector<16x16xf32> to vector<16xf32>
    %172 = vector.shape_cast %171 : vector<16xf32> to vector<16x1xf32>
    %173 = vector.broadcast %172 : vector<16x1xf32> to vector<16x16xf32>
    %174 = arith.subf %170, %173 : vector<16x16xf32>
    %175 = math.exp %174 : vector<16x16xf32>
    %cst_107 = arith.constant dense<0.000000e+00> : vector<16xf32>
    %176 = vector.multi_reduction <add>, %175, %cst_107 [1] : vector<16x16xf32> to vector<16xf32>
    %177 = vector.shape_cast %176 : vector<16xf32> to vector<16x1xf32>
    %cst_108 = arith.constant dense<0.000000e+00> : vector<16x8xf32>
    %178 = tpu.matmul %175, %166, %cst_108 {dimension_numbers = #tpu.dot_dimension_numbers<[1], [0], [0], [1], [0, 0, 1, 1], [], []>} : vector<16x16xf32>, vector<16x8xf32>, vector<16x8xf32> -> vector<16x8xf32>
    %179 = tpu.reciprocal %177 {approx = true} : vector<16x1xf32> -> vector<16x1xf32>
    %180 = vector.broadcast %179 : vector<16x1xf32> to vector<16x8xf32>
    %181 = arith.mulf %178, %180 : vector<16x8xf32>
    %182 = vector.extract_strided_slice %163 {offsets = [0, 8], sizes = [16, 8], strides = [1, 1]} : vector<16x96xf32> to vector<16x8xf32>
    %183 = vector.extract_strided_slice %163 {offsets = [0, 40], sizes = [16, 8], strides = [1, 1]} : vector<16x96xf32> to vector<16x8xf32>
    %184 = vector.extract_strided_slice %163 {offsets = [0, 72], sizes = [16, 8], strides = [1, 1]} : vector<16x96xf32> to vector<16x8xf32>
    %cst_109 = arith.constant dense<0.000000e+00> : vector<16x16xf32>
    %185 = tpu.matmul %182, %183, %cst_109 {dimension_numbers = #tpu.dot_dimension_numbers<[1], [1], [0], [0], [0, 0, 1, 0], [], []>} : vector<16x8xf32>, vector<16x8xf32>, vector<16x16xf32> -> vector<16x16xf32>
    %c0_110 = arith.constant 0 : index
    %c1_111 = arith.constant 1 : index
    %c0_112 = arith.constant 0 : index
    %c0_113 = arith.constant 0 : index
    %186 = vector.load %arg5[%c0_110, %c1_111, %c0_112, %c0_113] : memref<1x4x16x16xf32, #tpu.memory_space<vmem>>, vector<1x1x16x16xf32>
    %187 = vector.shape_cast %186 : vector<1x1x16x16xf32> to vector<16x16xf32>
    %188 = arith.addf %185, %187 : vector<16x16xf32>
    %cst_114 = arith.constant dense<0xFF800000> : vector<16xf32>
    %189 = vector.multi_reduction <maximumf>, %188, %cst_114 [1] : vector<16x16xf32> to vector<16xf32>
    %190 = vector.shape_cast %189 : vector<16xf32> to vector<16x1xf32>
    %191 = vector.broadcast %190 : vector<16x1xf32> to vector<16x16xf32>
    %192 = arith.subf %188, %191 : vector<16x16xf32>
    %193 = math.exp %192 : vector<16x16xf32>
    %cst_115 = arith.constant dense<0.000000e+00> : vector<16xf32>
    %194 = vector.multi_reduction <add>, %193, %cst_115 [1] : vector<16x16xf32> to vector<16xf32>
    %195 = vector.shape_cast %194 : vector<16xf32> to vector<16x1xf32>
    %cst_116 = arith.constant dense<0.000000e+00> : vector<16x8xf32>
    %196 = tpu.matmul %193, %184, %cst_116 {dimension_numbers = #tpu.dot_dimension_numbers<[1], [0], [0], [1], [0, 0, 1, 1], [], []>} : vector<16x16xf32>, vector<16x8xf32>, vector<16x8xf32> -> vector<16x8xf32>
    %197 = tpu.reciprocal %195 {approx = true} : vector<16x1xf32> -> vector<16x1xf32>
    %198 = vector.broadcast %197 : vector<16x1xf32> to vector<16x8xf32>
    %199 = arith.mulf %196, %198 : vector<16x8xf32>
    %200 = vector.extract_strided_slice %163 {offsets = [0, 16], sizes = [16, 8], strides = [1, 1]} : vector<16x96xf32> to vector<16x8xf32>
    %201 = vector.extract_strided_slice %163 {offsets = [0, 48], sizes = [16, 8], strides = [1, 1]} : vector<16x96xf32> to vector<16x8xf32>
    %202 = vector.extract_strided_slice %163 {offsets = [0, 80], sizes = [16, 8], strides = [1, 1]} : vector<16x96xf32> to vector<16x8xf32>
    %cst_117 = arith.constant dense<0.000000e+00> : vector<16x16xf32>
    %203 = tpu.matmul %200, %201, %cst_117 {dimension_numbers = #tpu.dot_dimension_numbers<[1], [1], [0], [0], [0, 0, 1, 0], [], []>} : vector<16x8xf32>, vector<16x8xf32>, vector<16x16xf32> -> vector<16x16xf32>
    %c0_118 = arith.constant 0 : index
    %c2_119 = arith.constant 2 : index
    %c0_120 = arith.constant 0 : index
    %c0_121 = arith.constant 0 : index
    %204 = vector.load %arg5[%c0_118, %c2_119, %c0_120, %c0_121] : memref<1x4x16x16xf32, #tpu.memory_space<vmem>>, vector<1x1x16x16xf32>
    %205 = vector.shape_cast %204 : vector<1x1x16x16xf32> to vector<16x16xf32>
    %206 = arith.addf %203, %205 : vector<16x16xf32>
    %cst_122 = arith.constant dense<0xFF800000> : vector<16xf32>
    %207 = vector.multi_reduction <maximumf>, %206, %cst_122 [1] : vector<16x16xf32> to vector<16xf32>
    %208 = vector.shape_cast %207 : vector<16xf32> to vector<16x1xf32>
    %209 = vector.broadcast %208 : vector<16x1xf32> to vector<16x16xf32>
    %210 = arith.subf %206, %209 : vector<16x16xf32>
    %211 = math.exp %210 : vector<16x16xf32>
    %cst_123 = arith.constant dense<0.000000e+00> : vector<16xf32>
    %212 = vector.multi_reduction <add>, %211, %cst_123 [1] : vector<16x16xf32> to vector<16xf32>
    %213 = vector.shape_cast %212 : vector<16xf32> to vector<16x1xf32>
    %cst_124 = arith.constant dense<0.000000e+00> : vector<16x8xf32>
    %214 = tpu.matmul %211, %202, %cst_124 {dimension_numbers = #tpu.dot_dimension_numbers<[1], [0], [0], [1], [0, 0, 1, 1], [], []>} : vector<16x16xf32>, vector<16x8xf32>, vector<16x8xf32> -> vector<16x8xf32>
    %215 = tpu.reciprocal %213 {approx = true} : vector<16x1xf32> -> vector<16x1xf32>
    %216 = vector.broadcast %215 : vector<16x1xf32> to vector<16x8xf32>
    %217 = arith.mulf %214, %216 : vector<16x8xf32>
    %218 = vector.extract_strided_slice %163 {offsets = [0, 24], sizes = [16, 8], strides = [1, 1]} : vector<16x96xf32> to vector<16x8xf32>
    %219 = vector.extract_strided_slice %163 {offsets = [0, 56], sizes = [16, 8], strides = [1, 1]} : vector<16x96xf32> to vector<16x8xf32>
    %220 = vector.extract_strided_slice %163 {offsets = [0, 88], sizes = [16, 8], strides = [1, 1]} : vector<16x96xf32> to vector<16x8xf32>
    %cst_125 = arith.constant dense<0.000000e+00> : vector<16x16xf32>
    %221 = tpu.matmul %218, %219, %cst_125 {dimension_numbers = #tpu.dot_dimension_numbers<[1], [1], [0], [0], [0, 0, 1, 0], [], []>} : vector<16x8xf32>, vector<16x8xf32>, vector<16x16xf32> -> vector<16x16xf32>
    %c0_126 = arith.constant 0 : index
    %c3_127 = arith.constant 3 : index
    %c0_128 = arith.constant 0 : index
    %c0_129 = arith.constant 0 : index
    %222 = vector.load %arg5[%c0_126, %c3_127, %c0_128, %c0_129] : memref<1x4x16x16xf32, #tpu.memory_space<vmem>>, vector<1x1x16x16xf32>
    %223 = vector.shape_cast %222 : vector<1x1x16x16xf32> to vector<16x16xf32>
    %224 = arith.addf %221, %223 : vector<16x16xf32>
    %cst_130 = arith.constant dense<0xFF800000> : vector<16xf32>
    %225 = vector.multi_reduction <maximumf>, %224, %cst_130 [1] : vector<16x16xf32> to vector<16xf32>
    %226 = vector.shape_cast %225 : vector<16xf32> to vector<16x1xf32>
    %227 = vector.broadcast %226 : vector<16x1xf32> to vector<16x16xf32>
    %228 = arith.subf %224, %227 : vector<16x16xf32>
    %229 = math.exp %228 : vector<16x16xf32>
    %cst_131 = arith.constant dense<0.000000e+00> : vector<16xf32>
    %230 = vector.multi_reduction <add>, %229, %cst_131 [1] : vector<16x16xf32> to vector<16xf32>
    %231 = vector.shape_cast %230 : vector<16xf32> to vector<16x1xf32>
    %cst_132 = arith.constant dense<0.000000e+00> : vector<16x8xf32>
    %232 = tpu.matmul %229, %220, %cst_132 {dimension_numbers = #tpu.dot_dimension_numbers<[1], [0], [0], [1], [0, 0, 1, 1], [], []>} : vector<16x16xf32>, vector<16x8xf32>, vector<16x8xf32> -> vector<16x8xf32>
    %233 = tpu.reciprocal %231 {approx = true} : vector<16x1xf32> -> vector<16x1xf32>
    %234 = vector.broadcast %233 : vector<16x1xf32> to vector<16x8xf32>
    %235 = arith.mulf %232, %234 : vector<16x8xf32>
    %236 = tpu.concatenate %181, %199, %217, %235 in 1 : vector<16x8xf32>, vector<16x8xf32>, vector<16x8xf32>, vector<16x8xf32> -> vector<16x32xf32>
    %c1_133 = arith.constant 1 : index
    %c0_134 = arith.constant 0 : index
    %c0_135 = arith.constant 0 : index
    %237 = vector.load %arg8[%c1_133, %c0_134, %c0_135] : memref<2x32x32xf32, #tpu.memory_space<vmem>>, vector<1x32x32xf32>
    %238 = vector.shape_cast %237 : vector<1x32x32xf32> to vector<32x32xf32>
    %cst_136 = arith.constant dense<0.000000e+00> : vector<16x32xf32>
    %239 = tpu.matmul %236, %238, %cst_136 {dimension_numbers = #tpu.dot_dimension_numbers<[1], [0], [0], [1], [0, 0, 1, 1], [], []>} : vector<16x32xf32>, vector<32x32xf32>, vector<16x32xf32> -> vector<16x32xf32>
    %240 = arith.addf %146, %239 : vector<16x32xf32>
    %c1_137 = arith.constant 1 : index
    %c0_138 = arith.constant 0 : index
    %c0_139 = arith.constant 0 : index
    %241 = vector.load %arg9[%c1_137, %c0_138, %c0_139] : memref<2x1x32xf32, #tpu.memory_space<vmem>>, vector<1x1x32xf32>
    %242 = vector.shape_cast %241 : vector<1x1x32xf32> to vector<1x32xf32>
    %243 = arith.mulf %240, %240 : vector<16x32xf32>
    %cst_140 = arith.constant dense<0.000000e+00> : vector<16xf32>
    %244 = vector.multi_reduction <add>, %243, %cst_140 [1] : vector<16x32xf32> to vector<16xf32>
    %245 = vector.shape_cast %244 : vector<16xf32> to vector<16x1xf32>
    %cst_141 = arith.constant 3.200000e+01 : f32
    %246 = vector.broadcast %cst_141 : f32 to vector<16x1xf32>
    %247 = arith.divf %245, %246 : vector<16x1xf32>
    %cst_142 = arith.constant 9.99999997E-7 : f32
    %248 = vector.broadcast %cst_142 : f32 to vector<16x1xf32>
    %249 = arith.addf %247, %248 : vector<16x1xf32>
    %250 = math.rsqrt %249 : vector<16x1xf32>
    %251 = vector.broadcast %250 : vector<16x1xf32> to vector<16x32xf32>
    %252 = arith.mulf %240, %251 : vector<16x32xf32>
    %253 = vector.broadcast %242 : vector<1x32xf32> to vector<16x32xf32>
    %254 = arith.mulf %252, %253 : vector<16x32xf32>
    %c1_143 = arith.constant 1 : index
    %c0_144 = arith.constant 0 : index
    %c0_145 = arith.constant 0 : index
    %255 = vector.load %arg10[%c1_143, %c0_144, %c0_145] : memref<2x32x64xf32, #tpu.memory_space<vmem>>, vector<1x32x64xf32>
    %256 = vector.shape_cast %255 : vector<1x32x64xf32> to vector<32x64xf32>
    %cst_146 = arith.constant dense<0.000000e+00> : vector<16x64xf32>
    %257 = tpu.matmul %254, %256, %cst_146 {dimension_numbers = #tpu.dot_dimension_numbers<[1], [0], [0], [1], [0, 0, 1, 1], [], []>} : vector<16x32xf32>, vector<32x64xf32>, vector<16x64xf32> -> vector<16x64xf32>
    %cst_147 = arith.constant 0.000000e+00 : f32
    %258 = vector.broadcast %cst_147 : f32 to vector<16x64xf32>
    %259 = arith.maximumf %257, %258 : vector<16x64xf32>
    %c1_148 = arith.constant 1 : index
    %c0_149 = arith.constant 0 : index
    %c0_150 = arith.constant 0 : index
    %260 = vector.load %arg11[%c1_148, %c0_149, %c0_150] : memref<2x64x32xf32, #tpu.memory_space<vmem>>, vector<1x64x32xf32>
    %261 = vector.shape_cast %260 : vector<1x64x32xf32> to vector<64x32xf32>
    %cst_151 = arith.constant dense<0.000000e+00> : vector<16x32xf32>
    %262 = tpu.matmul %259, %261, %cst_151 {dimension_numbers = #tpu.dot_dimension_numbers<[1], [0], [0], [1], [0, 0, 1, 1], [], []>} : vector<16x64xf32>, vector<64x32xf32>, vector<16x32xf32> -> vector<16x32xf32>
    %263 = arith.addf %240, %262 : vector<16x32xf32>
    %c0_152 = arith.constant 0 : index
    %c0_153 = arith.constant 0 : index
    %264 = vector.load %arg12[%c0_152, %c0_153] : memref<1x32xf32, #tpu.memory_space<vmem>>, vector<1x32xf32>
    %265 = arith.mulf %263, %263 : vector<16x32xf32>
    %cst_154 = arith.constant dense<0.000000e+00> : vector<16xf32>
    %266 = vector.multi_reduction <add>, %265, %cst_154 [1] : vector<16x32xf32> to vector<16xf32>
    %267 = vector.shape_cast %266 : vector<16xf32> to vector<16x1xf32>
    %cst_155 = arith.constant 3.200000e+01 : f32
    %268 = vector.broadcast %cst_155 : f32 to vector<16x1xf32>
    %269 = arith.divf %267, %268 : vector<16x1xf32>
    %cst_156 = arith.constant 9.99999997E-7 : f32
    %270 = vector.broadcast %cst_156 : f32 to vector<16x1xf32>
    %271 = arith.addf %269, %270 : vector<16x1xf32>
    %272 = math.rsqrt %271 : vector<16x1xf32>
    %273 = vector.broadcast %272 : vector<16x1xf32> to vector<16x32xf32>
    %274 = arith.mulf %263, %273 : vector<16x32xf32>
    %275 = vector.broadcast %264 : vector<1x32xf32> to vector<16x32xf32>
    %276 = arith.mulf %274, %275 : vector<16x32xf32>
    %c0_157 = arith.constant 0 : index
    %c0_158 = arith.constant 0 : index
    %277 = vector.load %arg13[%c0_157, %c0_158] : memref<32x128xf32, #tpu.memory_space<vmem>>, vector<32x128xf32>
    %cst_159 = arith.constant dense<0.000000e+00> : vector<16x128xf32>
    %278 = tpu.matmul %276, %277, %cst_159 {dimension_numbers = #tpu.dot_dimension_numbers<[1], [0], [0], [1], [0, 0, 1, 1], [], []>} : vector<16x32xf32>, vector<32x128xf32>, vector<16x128xf32> -> vector<16x128xf32>
    %c0_160 = arith.constant 0 : index
    %c0_161 = arith.constant 0 : index
    %c0_162 = arith.constant 0 : index
    %279 = vector.load %arg14[%c0_160, %c0_161, %c0_162] : memref<1x16x128xf32, #tpu.memory_space<vmem>>, vector<1x16x128xf32>
    %280 = vector.shape_cast %279 : vector<1x16x128xf32> to vector<16x128xf32>
    %281 = vector.shape_cast %278 : vector<16x128xf32> to vector<1x16x128xf32>
    tpu.vector_store %arg14[%c0_160, %c0_161, %c0_162], %281 {strides = array<i32>} : memref<1x16x128xf32, #tpu.memory_space<vmem>>, vector<1x16x128xf32>,
    return
  }
  func.func @transform_0(%arg0: i32) -> (i32, i32, i32) {
    %c0_i32 = arith.constant 0 : i32
    %c0_i32_0 = arith.constant 0 : i32
    %c0_i32_1 = arith.constant 0 : i32
    return %arg0, %c0_i32, %c0_i32_0 : i32, i32, i32
  }
  func.func @transform_1(%arg0: i32) -> (i32, i32, i32) {
    %c0_i32 = arith.constant 0 : i32
    %c0_i32_0 = arith.constant 0 : i32
    %c0_i32_1 = arith.constant 0 : i32
    %c0_i32_2 = arith.constant 0 : i32
    return %c0_i32, %c0_i32_0, %c0_i32_1 : i32, i32, i32
  }
  func.func @transform_2(%arg0: i32) -> (i32, i32, i32) {
    %c0_i32 = arith.constant 0 : i32
    %c0_i32_0 = arith.constant 0 : i32
    %c0_i32_1 = arith.constant 0 : i32
    %c0_i32_2 = arith.constant 0 : i32
    return %c0_i32, %c0_i32_0, %c0_i32_1 : i32, i32, i32
  }
  func.func @transform_3(%arg0: i32) -> (i32, i32, i32) {
    %c0_i32 = arith.constant 0 : i32
    %c0_i32_0 = arith.constant 0 : i32
    %c0_i32_1 = arith.constant 0 : i32
    return %arg0, %c0_i32, %c0_i32_0 : i32, i32, i32
  }
  func.func @transform_4(%arg0: i32) -> (i32, i32, i32, i32) {
    %c0_i32 = arith.constant 0 : i32
    %c0_i32_0 = arith.constant 0 : i32
    %c0_i32_1 = arith.constant 0 : i32
    %c0_i32_2 = arith.constant 0 : i32
    return %arg0, %c0_i32, %c0_i32_0, %c0_i32_1 : i32, i32, i32, i32
  }
  func.func @transform_5(%arg0: i32) -> (i32, i32, i32) {
    %c0_i32 = arith.constant 0 : i32
    %c0_i32_0 = arith.constant 0 : i32
    %c0_i32_1 = arith.constant 0 : i32
    %c0_i32_2 = arith.constant 0 : i32
    return %c0_i32, %c0_i32_0, %c0_i32_1 : i32, i32, i32
  }
  func.func @transform_6(%arg0: i32) -> (i32, i32, i32) {
    %c0_i32 = arith.constant 0 : i32
    %c0_i32_0 = arith.constant 0 : i32
    %c0_i32_1 = arith.constant 0 : i32
    %c0_i32_2 = arith.constant 0 : i32
    return %c0_i32, %c0_i32_0, %c0_i32_1 : i32, i32, i32
  }
  func.func @transform_7(%arg0: i32) -> (i32, i32, i32) {
    %c0_i32 = arith.constant 0 : i32
    %c0_i32_0 = arith.constant 0 : i32
    %c0_i32_1 = arith.constant 0 : i32
    %c0_i32_2 = arith.constant 0 : i32
    return %c0_i32, %c0_i32_0, %c0_i32_1 : i32, i32, i32
  }
  func.func @transform_8(%arg0: i32) -> (i32, i32, i32) {
    %c0_i32 = arith.constant 0 : i32
    %c0_i32_0 = arith.constant 0 : i32
    %c0_i32_1 = arith.constant 0 : i32
    %c0_i32_2 = arith.constant 0 : i32
    return %c0_i32, %c0_i32_0, %c0_i32_1 : i32, i32, i32
  }
  func.func @transform_9(%arg0: i32) -> (i32, i32, i32) {
    %c0_i32 = arith.constant 0 : i32
    %c0_i32_0 = arith.constant 0 : i32
    %c0_i32_1 = arith.constant 0 : i32
    %c0_i32_2 = arith.constant 0 : i32
    return %c0_i32, %c0_i32_0, %c0_i32_1 : i32, i32, i32
  }
  func.func @transform_10(%arg0: i32) -> (i32, i32, i32) {
    %c0_i32 = arith.constant 0 : i32
    %c0_i32_0 = arith.constant 0 : i32
    %c0_i32_1 = arith.constant 0 : i32
    %c0_i32_2 = arith.constant 0 : i32
    return %c0_i32, %c0_i32_0, %c0_i32_1 : i32, i32, i32
  }
  func.func @transform_11(%arg0: i32) -> (i32, i32) {
    %c0_i32 = arith.constant 0 : i32
    %c0_i32_0 = arith.constant 0 : i32
    %c0_i32_1 = arith.constant 0 : i32
    return %c0_i32, %c0_i32_0 : i32, i32
  }
  func.func @transform_12(%arg0: i32) -> (i32, i32) {
    %c0_i32 = arith.constant 0 : i32
    %c0_i32_0 = arith.constant 0 : i32
    %c0_i32_1 = arith.constant 0 : i32
    return %c0_i32, %c0_i32_0 : i32, i32
  }
  func.func @transform_13(%arg0: i32) -> (i32, i32, i32) {
    %c0_i32 = arith.constant 0 : i32
    %c0_i32_0 = arith.constant 0 : i32
    %c0_i32_1 = arith.constant 0 : i32
    return %arg0, %c0_i32, %c0_i32_0 : i32, i32, i32
  }
}

</mosaic_0001>

<llo_original>
// kernel: forward.1
$region0: #{forward.1}
  #allocation0 [shape = 'u32[]', space=smem, size = 0x4, offset = 0x4, fixed_abs, tag = 'smem constant byte address 0x4 - core index']
  #allocation1 [shape = 'u32[144,128]{1,0:T(1,128)}', space=vmem, size = 0x12000, scoped, tag = 'internal scratch']
  %s0 = inlined_call_operand.vmem [shape: f32[2,1,16], index: 0, kind: input, shape index: {}]
  %s1 = inlined_call_operand.vmem [shape: f32[4,16,32], index: 1, kind: input, shape index: {}]
  %s2 = inlined_call_operand.vmem [shape: f32[4,1,32], index: 2, kind: input, shape index: {}]
  %s3 = inlined_call_operand.vmem [shape: f32[2,8,32], index: 3, kind: input, shape index: {}]
  %s4 = inlined_call_operand.vmem [shape: f32[2,4,16,16], index: 4, kind: input, shape index: {}]
  %s5 = inlined_call_operand.vmem [shape: f32[2,1,32], index: 5, kind: input, shape index: {}]
  %s6 = inlined_call_operand.vmem [shape: f32[2,32,96], index: 6, kind: input, shape index: {}]
  %s7 = inlined_call_operand.vmem [shape: f32[2,32,32], index: 7, kind: input, shape index: {}]
  %s8 = inlined_call_operand.vmem [shape: f32[2,1,32], index: 8, kind: input, shape index: {}]
  %s9 = inlined_call_operand.vmem [shape: f32[2,32,64], index: 9, kind: input, shape index: {}]
  %s10 = inlined_call_operand.vmem [shape: f32[2,64,32], index: 10, kind: input, shape index: {}]
  %s11 = inlined_call_operand.vmem [shape: f32[1,32], index: 11, kind: input, shape index: {}]
  %s12 = inlined_call_operand.vmem [shape: f32[32,128], index: 12, kind: input, shape index: {}]
  %s13 = inlined_call_operand.vmem [shape: f32[2,16,128], index: 13, kind: output, shape index: {}]
  %s14 = sld [smem:[#allocation0]]
  $region85: #{forward.1} parent=0
    _
  %s16 = ssub.s32 1, %s14
  %s17 = scalar_select 0, %s16, %s14
  loop: start=0, step=1, limit=4
  $region2: #{forward.1} parent=0 // loop_pre_header
    _
  $region3: #{forward.1} parent=0 // loop_header
    %s19 = sphi 0, %s23
    %p20 = scmp.ge.s32.totalorder %s19, 4
    %s29 = sphi 0, %s31
    %s32 = sphi 0, %s29
    %s33 = sphi 0, %s32
    %s49 = sphi 0, %s33
    %s53 = sphi 0, %s53
    %s55 = sphi 0, %s53
    %s56 = sphi 0, %s55
    %s70 = sphi 0, %s56
    %s74 = sphi 0, %s74
    %s76 = sphi 0, %s74
    %s77 = sphi 0, %s76
    %s91 = sphi 0, %s77
    %s97 = sphi 0, %s99
    %s100 = sphi 0, %s97
    %s101 = sphi 0, %s100
    %s117 = sphi 0, %s101
    %s123 = sphi 0, %s125
    %s126 = sphi 0, %s123
    %s127 = sphi 0, %s126
    %s143 = sphi 0, %s127
    %s147 = sphi 0, %s147
    %s149 = sphi 0, %s147
    %s150 = sphi 0, %s149
    %s164 = sphi 0, %s150
    %s168 = sphi 0, %s168
    %s170 = sphi 0, %s168
    %s171 = sphi 0, %s170
    %s185 = sphi 0, %s171
    %s189 = sphi 0, %s189
    %s191 = sphi 0, %s189
    %s192 = sphi 0, %s191
    %s206 = sphi 0, %s192
    %s210 = sphi 0, %s210
    %s212 = sphi 0, %s210
    %s213 = sphi 0, %s212
    %s227 = sphi 0, %s213
    %s231 = sphi 0, %s231
    %s233 = sphi 0, %s231
    %s234 = sphi 0, %s233
    %s248 = sphi 0, %s234
    %s252 = sphi 0, %s252
    %s254 = sphi 0, %s252
    %s255 = sphi 0, %s254
    %s269 = sphi 0, %s255
    %s273 = sphi 0, %s273
    %s275 = sphi 0, %s273
    %s276 = sphi 0, %s275
    %s290 = sphi 0, %s276
    %s294 = sphi 0, %s294
    %s296 = sphi 0, %s294
    %s297 = sphi 0, %s296
    %s311 = sphi 0, %s297
    %s317 = sphi 0, %s319
    %s320 = sphi 0, %s317
    %s321 = sphi 0, %s320
    %s337 = sphi 0, %s321
  $region4: #{forward.1} parent=0 // loop_header_branch
    %22 = sbr.rel (%p20) target = $region8
  $region5: #{forward.1} parent=0 // loop_body
    %s24 = ssub.s32 %s19, 1
    %s25 = ssub.s32 %s19, 2
    %s26 = sadd.s32 %s19, 1
    %s27 = ssub.s32 %s19, %s26
    %p28 = scmp.eq.s32.totalorder %s27, 0
    %s30 = sadd.s32 %s29, 1
    %s31 = scalar_select %p28, %s29, %s30
    %p34 = pneg %p28
    %p35 = scmp.eq.s32.totalorder %s19, 1
    %p36 = por %p34, %p35
    %p37 = scmp.ne.s32.totalorder %s29, %s32
    %p38 = scmp.eq.s32.totalorder %s19, 0
    %p39 = por %p37, %p38
    %p40 = scmp.ne.s32.totalorder %s29, %s32
    %p41 = scmp.eq.s32.totalorder %s24, 1
    %p42 = por %p40, %p41
    %p43 = scmp.ne.s32.totalorder %s32, %s33
    %p44 = scmp.eq.s32.totalorder %s24, 0
    %p45 = por %p43, %p44
    %p46 = scmp.ne.s32.totalorder %s32, %s33
    %p47 = scmp.eq.s32.totalorder %s25, 1
    %p48 = por %p46, %p47
    %p50 = scmp.ne.s32.totalorder %s33, %s49
    %p51 = scmp.eq.s32.totalorder %s25, 0
    %p52 = por %p50, %p51
    %s54 = sadd.s32 %s53, 1
    %p57 = scmp.eq.s32.totalorder %s19, 1
    %p58 = scmp.ne.s32.totalorder %s53, %s55
    %p59 = scmp.eq.s32.totalorder %s19, 0
    %p60 = por %p58, %p59
    %p61 = scmp.ne.s32.totalorder %s53, %s55
    %p62 = scmp.eq.s32.totalorder %s24, 1
    %p63 = por %p61, %p62
    %p64 = scmp.ne.s32.totalorder %s55, %s56
    %p65 = scmp.eq.s32.totalorder %s24, 0
    %p66 = por %p64, %p65
    %p67 = scmp.ne.s32.totalorder %s55, %s56
    %p68 = scmp.eq.s32.totalorder %s25, 1
    %p69 = por %p67, %p68
    %p71 = scmp.ne.s32.totalorder %s56, %s70
    %p72 = scmp.eq.s32.totalorder %s25, 0
    %p73 = por %p71, %p72
    %s75 = sadd.s32 %s74, 1
    %p78 = scmp.eq.s32.totalorder %s19, 1
    %p79 = scmp.ne.s32.totalorder %s74, %s76
    %p80 = scmp.eq.s32.totalorder %s19, 0
    %p81 = por %p79, %p80
    %p82 = scmp.ne.s32.totalorder %s74, %s76
    %p83 = scmp.eq.s32.totalorder %s24, 1
    %p84 = por %p82, %p83
    %p85 = scmp.ne.s32.totalorder %s76, %s77
    %p86 = scmp.eq.s32.totalorder %s24, 0
    %p87 = por %p85, %p86
    %p88 = scmp.ne.s32.totalorder %s76, %s77
    %p89 = scmp.eq.s32.totalorder %s25, 1
    %p90 = por %p88, %p89
    %p92 = scmp.ne.s32.totalorder %s77, %s91
    %p93 = scmp.eq.s32.totalorder %s25, 0
    %p94 = por %p92, %p93
    %s95 = ssub.s32 %s19, %s26
    %p96 = scmp.eq.s32.totalorder %s95, 0
    %s98 = sadd.s32 %s97, 1
    %s99 = scalar_select %p96, %s97, %s98
    %p102 = pneg %p96
    %p103 = scmp.eq.s32.totalorder %s19, 1
    %p104 = por %p102, %p103
    %p105 = scmp.ne.s32.totalorder %s97, %s100
    %p106 = scmp.eq.s32.totalorder %s19, 0
    %p107 = por %p105, %p106
    %p108 = scmp.ne.s32.totalorder %s97, %s100
    %p109 = scmp.eq.s32.totalorder %s24, 1
    %p110 = por %p108, %p109
    %p111 = scmp.ne.s32.totalorder %s100, %s101
    %p112 = scmp.eq.s32.totalorder %s24, 0
    %p113 = por %p111, %p112
    %p114 = scmp.ne.s32.totalorder %s100, %s101
    %p115 = scmp.eq.s32.totalorder %s25, 1
    %p116 = por %p114, %p115
    %p118 = scmp.ne.s32.totalorder %s101, %s117
    %p119 = scmp.eq.s32.totalorder %s25, 0
    %p120 = por %p118, %p119
    %s121 = ssub.s32 %s19, %s26
    %p122 = scmp.eq.s32.totalorder %s121, 0
    %s124 = sadd.s32 %s123, 1
    %s125 = scalar_select %p122, %s123, %s124
    %p128 = pneg %p122
    %p129 = scmp.eq.s32.totalorder %s19, 1
    %p130 = por %p128, %p129
    %p131 = scmp.ne.s32.totalorder %s123, %s126
    %p132 = scmp.eq.s32.totalorder %s19, 0
    %p133 = por %p131, %p132
    %p134 = scmp.ne.s32.totalorder %s123, %s126
    %p135 = scmp.eq.s32.totalorder %s24, 1
    %p136 = por %p134, %p135
    %p137 = scmp.ne.s32.totalorder %s126, %s127
    %p138 = scmp.eq.s32.totalorder %s24, 0
    %p139 = por %p137, %p138
    %p140 = scmp.ne.s32.totalorder %s126, %s127
    %p141 = scmp.eq.s32.totalorder %s25, 1
    %p142 = por %p140, %p141
    %p144 = scmp.ne.s32.totalorder %s127, %s143
    %p145 = scmp.eq.s32.totalorder %s25, 0
    %p146 = por %p144, %p145
    %s148 = sadd.s32 %s147, 1
    %p151 = scmp.eq.s32.totalorder %s19, 1
    %p152 = scmp.ne.s32.totalorder %s147, %s149
    %p153 = scmp.eq.s32.totalorder %s19, 0
    %p154 = por %p152, %p153
    %p155 = scmp.ne.s32.totalorder %s147, %s149
    %p156 = scmp.eq.s32.totalorder %s24, 1
    %p157 = por %p155, %p156
    %p158 = scmp.ne.s32.totalorder %s149, %s150
    %p159 = scmp.eq.s32.totalorder %s24, 0
    %p160 = por %p158, %p159
    %p161 = scmp.ne.s32.totalorder %s149, %s150
    %p162 = scmp.eq.s32.totalorder %s25, 1
    %p163 = por %p161, %p162
    %p165 = scmp.ne.s32.totalorder %s150, %s164
    %p166 = scmp.eq.s32.totalorder %s25, 0
    %p167 = por %p165, %p166
    %s169 = sadd.s32 %s168, 1
    %p172 = scmp.eq.s32.totalorder %s19, 1
    %p173 = scmp.ne.s32.totalorder %s168, %s170
    %p174 = scmp.eq.s32.totalorder %s19, 0
    %p175 = por %p173, %p174
    %p176 = scmp.ne.s32.totalorder %s168, %s170
    %p177 = scmp.eq.s32.totalorder %s24, 1
    %p178 = por %p176, %p177
    %p179 = scmp.ne.s32.totalorder %s170, %s171
    %p180 = scmp.eq.s32.totalorder %s24, 0
    %p181 = por %p179, %p180
    %p182 = scmp.ne.s32.totalorder %s170, %s171
    %p183 = scmp.eq.s32.totalorder %s25, 1
    %p184 = por %p182, %p183
    %p186 = scmp.ne.s32.totalorder %s171, %s185
    %p187 = scmp.eq.s32.totalorder %s25, 0
    %p188 = por %p186, %p187
    %s190 = sadd.s32 %s189, 1
    %p193 = scmp.eq.s32.totalorder %s19, 1
    %p194 = scmp.ne.s32.totalorder %s189, %s191
    %p195 = scmp.eq.s32.totalorder %s19, 0
    %p196 = por %p194, %p195
    %p197 = scmp.ne.s32.totalorder %s189, %s191
    %p198 = scmp.eq.s32.totalorder %s24, 1
    %p199 = por %p197, %p198
    %p200 = scmp.ne.s32.totalorder %s191, %s192
    %p201 = scmp.eq.s32.totalorder %s24, 0
    %p202 = por %p200, %p201
    %p203 = scmp.ne.s32.totalorder %s191, %s192
    %p204 = scmp.eq.s32.totalorder %s25, 1
    %p205 = por %p203, %p204
    %p207 = scmp.ne.s32.totalorder %s192, %s206
    %p208 = scmp.eq.s32.totalorder %s25, 0
    %p209 = por %p207, %p208
    %s211 = sadd.s32 %s210, 1
    %p214 = scmp.eq.s32.totalorder %s19, 1
    %p215 = scmp.ne.s32.totalorder %s210, %s212
    %p216 = scmp.eq.s32.totalorder %s19, 0
    %p217 = por %p215, %p216
    %p218 = scmp.ne.s32.totalorder %s210, %s212
    %p219 = scmp.eq.s32.totalorder %s24, 1
    %p220 = por %p218, %p219
    %p221 = scmp.ne.s32.totalorder %s212, %s213
    %p222 = scmp.eq.s32.totalorder %s24, 0
    %p223 = por %p221, %p222
    %p224 = scmp.ne.s32.totalorder %s212, %s213
    %p225 = scmp.eq.s32.totalorder %s25, 1
    %p226 = por %p224, %p225
    %p228 = scmp.ne.s32.totalorder %s213, %s227
    %p229 = scmp.eq.s32.totalorder %s25, 0
    %p230 = por %p228, %p229
    %s232 = sadd.s32 %s231, 1
    %p235 = scmp.eq.s32.totalorder %s19, 1
    %p236 = scmp.ne.s32.totalorder %s231, %s233
    %p237 = scmp.eq.s32.totalorder %s19, 0
    %p238 = por %p236, %p237
    %p239 = scmp.ne.s32.totalorder %s231, %s233
    %p240 = scmp.eq.s32.totalorder %s24, 1
    %p241 = por %p239, %p240
    %p242 = scmp.ne.s32.totalorder %s233, %s234
    %p243 = scmp.eq.s32.totalorder %s24, 0
    %p244 = por %p242, %p243
    %p245 = scmp.ne.s32.totalorder %s233, %s234
    %p246 = scmp.eq.s32.totalorder %s25, 1
    %p247 = por %p245, %p246
    %p249 = scmp.ne.s32.totalorder %s234, %s248
    %p250 = scmp.eq.s32.totalorder %s25, 0
    %p251 = por %p249, %p250
    %s253 = sadd.s32 %s252, 1
    %p256 = scmp.eq.s32.totalorder %s19, 1
    %p257 = scmp.ne.s32.totalorder %s252, %s254
    %p258 = scmp.eq.s32.totalorder %s19, 0
    %p259 = por %p257, %p258
    %p260 = scmp.ne.s32.totalorder %s252, %s254
    %p261 = scmp.eq.s32.totalorder %s24, 1
    %p262 = por %p260, %p261
    %p263 = scmp.ne.s32.totalorder %s254, %s255
    %p264 = scmp.eq.s32.totalorder %s24, 0
    %p265 = por %p263, %p264
    %p266 = scmp.ne.s32.totalorder %s254, %s255
    %p267 = scmp.eq.s32.totalorder %s25, 1
    %p268 = por %p266, %p267
    %p270 = scmp.ne.s32.totalorder %s255, %s269
    %p271 = scmp.eq.s32.totalorder %s25, 0
    %p272 = por %p270, %p271
    %s274 = sadd.s32 %s273, 1
    %p277 = scmp.eq.s32.totalorder %s19, 1
    %p278 = scmp.ne.s32.totalorder %s273, %s275
    %p279 = scmp.eq.s32.totalorder %s19, 0
    %p280 = por %p278, %p279
    %p281 = scmp.ne.s32.totalorder %s273, %s275
    %p282 = scmp.eq.s32.totalorder %s24, 1
    %p283 = por %p281, %p282
    %p284 = scmp.ne.s32.totalorder %s275, %s276
    %p285 = scmp.eq.s32.totalorder %s24, 0
    %p286 = por %p284, %p285
    %p287 = scmp.ne.s32.totalorder %s275, %s276
    %p288 = scmp.eq.s32.totalorder %s25, 1
    %p289 = por %p287, %p288
    %p291 = scmp.ne.s32.totalorder %s276, %s290
    %p292 = scmp.eq.s32.totalorder %s25, 0
    %p293 = por %p291, %p292
    %s295 = sadd.s32 %s294, 1
    %p298 = scmp.eq.s32.totalorder %s19, 1
    %p299 = scmp.ne.s32.totalorder %s294, %s296
    %p300 = scmp.eq.s32.totalorder %s19, 0
    %p301 = por %p299, %p300
    %p302 = scmp.ne.s32.totalorder %s294, %s296
    %p303 = scmp.eq.s32.totalorder %s24, 1
    %p304 = por %p302, %p303
    %p305 = scmp.ne.s32.totalorder %s296, %s297
    %p306 = scmp.eq.s32.totalorder %s24, 0
    %p307 = por %p305, %p306
    %p308 = scmp.ne.s32.totalorder %s296, %s297
    %p309 = scmp.eq.s32.totalorder %s25, 1
    %p310 = por %p308, %p309
    %p312 = scmp.ne.s32.totalorder %s297, %s311
    %p313 = scmp.eq.s32.totalorder %s25, 0
    %p314 = por %p312, %p313
    %s315 = ssub.s32 %s19, %s26
    %p316 = scmp.eq.s32.totalorder %s315, 0
    %s318 = sadd.s32 %s317, 1
    %s319 = scalar_select %p316, %s317, %s318
    %p322 = pneg %p316
    %p323 = scmp.eq.s32.totalorder %s19, 1
    %p324 = por %p322, %p323
    %p325 = scmp.ne.s32.totalorder %s317, %s320
    %p326 = scmp.eq.s32.totalorder %s19, 0
    %p327 = por %p325, %p326
    %p328 = scmp.ne.s32.totalorder %s317, %s320
    %p329 = scmp.eq.s32.totalorder %s24, 1
    %p330 = por %p328, %p329
    %p331 = scmp.ne.s32.totalorder %s320, %s321
    %p332 = scmp.eq.s32.totalorder %s24, 0
    %p333 = por %p331, %p332
    %p334 = scmp.ne.s32.totalorder %s320, %s321
    %p335 = scmp.eq.s32.totalorder %s25, 1
    %p336 = por %p334, %p335
    %p338 = scmp.ne.s32.totalorder %s321, %s337
    %p339 = scmp.eq.s32.totalorder %s25, 0
    %p340 = por %p338, %p339
    %p341 = scmp.le.s32.totalorder 1, %s19
    %p342 = scmp.lt.s32.totalorder %s19, 3
    %p343 = pnand %p341, %p342
    %p344 = pneg %p343
    // Predicated region
    $region9: #{forward.1} parent=5 // pred_check
      _
    $region10: #{forward.1} parent=5 // pred_check_branch
      %346 = sbr.rel (%p343) target = $region12
    $region11: #{forward.1} parent=5 // pred_region
      %s347 = ssub.s32 %s19, 1
      // Predicated region
      $region13: #{forward.1} parent=11 // pred_check
        %p348 = pneg %p66
      $region14: #{forward.1} parent=11 // pred_check_branch
        %350 = sbr.rel (%p348) target = $region16
      $region15: #{forward.1} parent=11 // pred_region
        _
      $region16: #{forward.1} parent=11 // pred_fallthru
        _
      // Predicated region
      $region17: #{forward.1} parent=11 // pred_check
        %p351 = pneg %p87
      $region18: #{forward.1} parent=11 // pred_check_branch
        %353 = sbr.rel (%p351) target = $region20
      $region19: #{forward.1} parent=11 // pred_region
        _
      $region20: #{forward.1} parent=11 // pred_fallthru
        _
      // Predicated region
      $region21: #{forward.1} parent=11 // pred_check
        %p354 = pneg %p160
      $region22: #{forward.1} parent=11 // pred_check_branch
        %356 = sbr.rel (%p354) target = $region24
      $region23: #{forward.1} parent=11 // pred_region
        _
      $region24: #{forward.1} parent=11 // pred_fallthru
        _
      // Predicated region
      $region25: #{forward.1} parent=11 // pred_check
        %p357 = pneg %p181
      $region26: #{forward.1} parent=11 // pred_check_branch
        %359 = sbr.rel (%p357) target = $region28
      $region27: #{forward.1} parent=11 // pred_region
        _
      $region28: #{forward.1} parent=11 // pred_fallthru
        _
      // Predicated region
      $region29: #{forward.1} parent=11 // pred_check
        %p360 = pneg %p202
      $region30: #{forward.1} parent=11 // pred_check_branch
        %362 = sbr.rel (%p360) target = $region32
      $region31: #{forward.1} parent=11 // pred_region
        _
      $region32: #{forward.1} parent=11 // pred_fallthru
        _
      // Predicated region
      $region33: #{forward.1} parent=11 // pred_check
        %p363 = pneg %p223
      $region34: #{forward.1} parent=11 // pred_check_branch
        %365 = sbr.rel (%p363) target = $region36
      $region35: #{forward.1} parent=11 // pred_region
        _
      $region36: #{forward.1} parent=11 // pred_fallthru
        _
      // Predicated region
      $region37: #{forward.1} parent=11 // pred_check
        %p366 = pneg %p244
      $region38: #{forward.1} parent=11 // pred_check_branch
        %368 = sbr.rel (%p366) target = $region40
      $region39: #{forward.1} parent=11 // pred_region
        _
      $region40: #{forward.1} parent=11 // pred_fallthru
        _
      // Predicated region
      $region41: #{forward.1} parent=11 // pred_check
        %p369 = pneg %p265
      $region42: #{forward.1} parent=11 // pred_check_branch
        %371 = sbr.rel (%p369) target = $region44
      $region43: #{forward.1} parent=11 // pred_region
        _
      $region44: #{forward.1} parent=11 // pred_fallthru
        _
      // Predicated region
      $region45: #{forward.1} parent=11 // pred_check
        %p372 = pneg %p286
      $region46: #{forward.1} parent=11 // pred_check_branch
        %374 = sbr.rel (%p372) target = $region48
      $region47: #{forward.1} parent=11 // pred_region
        _
      $region48: #{forward.1} parent=11 // pred_fallthru
        _
      // Predicated region
      $region49: #{forward.1} parent=11 // pred_check
        %p375 = pneg %p307
      $region50: #{forward.1} parent=11 // pred_check_branch
        %377 = sbr.rel (%p375) target = $region52
      $region51: #{forward.1} parent=11 // pred_region
        _
      $region52: #{forward.1} parent=11 // pred_fallthru
        _
    $region12: #{forward.1} parent=5 // pred_fallthru
      _
    %p378 = scmp.lt.s32.totalorder %s19, 2
    // Predicated region
    $region53: #{forward.1} parent=5 // pred_check
      %p379 = pneg %p378
    $region54: #{forward.1} parent=5 // pred_check_branch
      %381 = sbr.rel (%p379) target = $region56
    $region55: #{forward.1} parent=5 // pred_region
      // Predicated region
      $region57: #{forward.1} parent=55 // pred_check
        %p382 = pneg %p39
      $region58: #{forward.1} parent=55 // pred_check_branch
        %384 = sbr.rel (%p382) target = $region60
      $region59: #{forward.1} parent=55 // pred_region
        %p385 = scmp.lt.s32.totalorder %s19, 1
        %s386 = scalar_select %p385, %s19, 1
        %s387 = scalar_lea.vmem %s0, %s386
      $region60: #{forward.1} parent=55 // pred_fallthru
        _
      // Predicated region
      $region61: #{forward.1} parent=55 // pred_check
        %p388 = pneg %p107
      $region62: #{forward.1} parent=55 // pred_check_branch
        %390 = sbr.rel (%p388) target = $region64
      $region63: #{forward.1} parent=55 // pred_region
        %p391 = scmp.lt.s32.totalorder %s19, 1
        %s392 = scalar_select %p391, %s19, 1
        %s393 = smul.addr %s392, 8
        %s394 = scalar_lea.vmem %s3, %s393
      $region64: #{forward.1} parent=55 // pred_fallthru
        _
      // Predicated region
      $region65: #{forward.1} parent=55 // pred_check
        %p395 = pneg %p133
      $region66: #{forward.1} parent=55 // pred_check_branch
        %397 = sbr.rel (%p395) target = $region68
      $region67: #{forward.1} parent=55 // pred_region
        %p398 = scmp.lt.s32.totalorder %s19, 1
        %s399 = scalar_select %p398, %s19, 1
        %s400 = smul.addr %s399, 8
        %s401 = smul.addr %s400, 8
        %s402 = scalar_lea.vmem %s4, %s401
      $region68: #{forward.1} parent=55 // pred_fallthru
        _
    $region56: #{forward.1} parent=5 // pred_fallthru
      _
    %p403 = scmp.le.s32.totalorder 1, %s19
    %p404 = scmp.lt.s32.totalorder %s19, 3
    %p405 = pnand %p403, %p404
    %p406 = pneg %p405
    // Predicated region
    $region69: #{forward.1} parent=5 // pred_check
      _
    $region70: #{forward.1} parent=5 // pred_check_branch
      %408 = sbr.rel (%p405) target = $region72
    $region71: #{forward.1} parent=5 // pred_region
      %s409 = ssub.s32 %s19, 1
      %p410 = scmp.lt.s32.totalorder %s24, 1
      %s411 = scalar_select %p410, %s24, 1
      %s412 = scalar_lea.vmem %s0, %s411
      %p413 = pneg %p45
      %p414 = pneg %p42
      %p415 = pneg %p66
      %p416 = pneg %p63
      %p417 = pneg %p87
      %p418 = pneg %p84
      %p419 = scmp.lt.s32.totalorder %s24, 1
      %s420 = scalar_select %p419, %s24, 1
      %s421 = smul.addr %s420, 8
      %s422 = scalar_lea.vmem %s3, %s421
      %p423 = pneg %p113
      %p424 = pneg %p110
      %p425 = scmp.lt.s32.totalorder %s24, 1
      %s426 = scalar_select %p425, %s24, 1
      %s427 = smul.addr %s426, 8
      %s428 = smul.addr %s427, 8
      %s429 = scalar_lea.vmem %s4, %s428
      %p430 = pneg %p139
      %p431 = pneg %p136
      %p432 = pneg %p160
      %p433 = pneg %p157
      %p434 = pneg %p181
      %p435 = pneg %p178
      %p436 = pneg %p202
      %p437 = pneg %p199
      %p438 = pneg %p223
      %p439 = pneg %p220
      %p440 = pneg %p244
      %p441 = pneg %p241
      %p442 = pneg %p265
      %p443 = pneg %p262
      %p444 = pneg %p286
      %p445 = pneg %p283
      %p446 = pneg %p307
      %p447 = pneg %p304
      %p448 = pneg %p333
      %p449 = pneg %p330
      %p450 = scmp.lt.s32.totalorder %s24, 1
      %s451 = scalar_select %p450, %s24, 1
      %s452 = smul.addr %s451, 2
      %s453 = smul.addr %s452, 8
      %s454 = scalar_lea.vmem %s13, %s453
      %p455 = scmp.lt.s32.totalorder %s24, 1
      %s456 = scalar_select %p455, %s24, 1
      %s457 = scalar_lea.vmem %s0, %s456
      %p458 = scmp.lt.s32.totalorder %s24, 1
      %s459 = scalar_select %p458, %s24, 1
      %s460 = smul.addr %s459, 8
      %s461 = scalar_lea.vmem %s3, %s460
      %p462 = scmp.lt.s32.totalorder %s24, 1
      %s463 = scalar_select %p462, %s24, 1
      %s464 = smul.addr %s463, 8
      %s465 = smul.addr %s464, 8
      %s466 = scalar_lea.vmem %s4, %s465
      %p467 = scmp.lt.s32.totalorder %s24, 1
      %s468 = scalar_select %p467, %s24, 1
      %s469 = smul.addr %s468, 2
      %s470 = smul.addr %s469, 8
      %s471 = scalar_lea.vmem %s13, %s470
      %v472 = vld [vmem:[%s457] sm:$0x1]
      %v473 = vld [vmem:[%s1] sm:$0xff]
      %v474 = vld [vmem:[%s1 + $0x8] sm:$0xff]
      %v475 = vld [vmem:[%s2] sm:$0x1]
      %vm476 = vcmask 130048
      %v478 = vsel %vm476, %v472, 0
      %480 = vmatprep.subr.mxu0 0.0
      %481 = vmatpush1.msra.mxu0 0.0
      %482 = vmatprep.subr.mxu0 0.0
      %483 = vmatpush1.msra.mxu0 0.0
      %484 = vmatprep.subr.mxu0 0.0
      %485 = vmatpush1.msra.mxu0 0.0
      %486 = vmatprep.subr.mxu0 0.0
      %487 = vmatpush1.msra.mxu0 0.0
      %488 = vmatprep.subr.mxu0 0.0
      %489 = vmatpush1.msra.mxu0 0.0
      %490 = vmatprep.subr.mxu0 0.0
      %491 = vmatpush1.msra.mxu0 0.0
      %492 = vmatprep.subr.mxu0 0.0
      %493 = vmatpush1.msra.mxu0 0.0
      %494 = vmatprep.subr.mxu0 0.0
      %495 = vmatpush1.msra.mxu0 0.0
      %496 = vmatprep.subr.mxu0 0.0
      %497 = vmatpush1.msra.mxu0 0.0
      %498 = vmatprep.subr.mxu0 0.0
      %499 = vmatpush1.msra.mxu0 0.0
      %500 = vmatprep.subr.mxu0 0.0
      %501 = vmatpush1.msra.mxu0 0.0
      %502 = vmatprep.subr.mxu0 0.0
      %503 = vmatpush1.msra.mxu0 0.0
      %504 = vmatprep.subr.mxu0 0.0
      %505 = vmatpush1.msra.mxu0 0.0
      %506 = vmatprep.subr.mxu0 0.0
      %507 = vmatpush1.msra.mxu0 0.0
      %508 = vmatprep.subr.mxu0 0.0
      %509 = vmatpush1.msra.mxu0 %v474
      %510 = vmatprep.subr.mxu0 0.0
      %511 = vmatpush1.msra.mxu0 %v473
      %512 = vmatprep.subr.mxu0 0.0
      %513 = vmatpush2.msra.mxu0 0.0
      %514 = vmatprep.subr.mxu0 0.0
      %515 = vmatpush2.msra.mxu0 0.0
      %516 = vmatprep.subr.mxu0 0.0
      %517 = vmatpush2.msra.mxu0 0.0
      %518 = vmatprep.subr.mxu0 0.0
      %519 = vmatpush2.msra.mxu0 0.0
      %520 = vmatprep.subr.mxu0 0.0
      %521 = vmatpush2.msra.mxu0 0.0
      %522 = vmatprep.subr.mxu0 0.0
      %523 = vmatpush2.msra.mxu0 0.0
      %524 = vmatprep.subr.mxu0 0.0
      %525 = vmatpush2.msra.mxu0 0.0
      %526 = vmatprep.subr.mxu0 0.0
      %527 = vmatpush2.msra.mxu0 0.0
      %528 = vmatprep.subr.mxu0 0.0
      %529 = vmatpush2.msra.mxu0 0.0
      %530 = vmatprep.subr.mxu0 0.0
      %531 = vmatpush2.msra.mxu0 0.0
      %532 = vmatprep.subr.mxu0 0.0
      %533 = vmatpush2.msra.mxu0 0.0
      %534 = vmatprep.subr.mxu0 0.0
      %535 = vmatpush2.msra.mxu0 0.0
      %536 = vmatprep.subr.mxu0 0.0
      %537 = vmatpush2.msra.mxu0 0.0
      %538 = vmatprep.subr.mxu0 0.0
      %539 = vmatpush2.msra.mxu0 0.0
      %540 = vmatprep.subr.mxu0 0.0
      %541 = vmatpush2.msra.mxu0 0.0
      %542 = vmatprep.subr.mxu0 0.0
      %543 = vmatpush2.msra.mxu0 0.0
      %544 = vmatprep.mubr.f32.mxu0 0.0
      %545 = vmatmul.mubr.f32.gmra.mxu0 %v478
      %v546 = vpop.f32.mrf.mxu0
      %v547 = vadd.f32 %v475, %v546
      %v548 = vpop.f32.mrf.mxu0
      %549 = vdwg.mxu0
      %s550 = scalar_lea.vmem %s1, 16
      %v551 = vld [vmem:[%s550] sm:$0xff]
      %v552 = vld [vmem:[%s550 + $0x8] sm:$0xff]
      %s553 = scalar_lea.vmem %s2, 1
      %v554 = vld [vmem:[%s553] sm:$0x1]
      %555 = vmatprep.subr.mxu0 0.0
      %556 = vmatpush1.msra.mxu0 0.0
      %557 = vmatprep.subr.mxu0 0.0
      %558 = vmatpush1.msra.mxu0 0.0
      %559 = vmatprep.subr.mxu0 0.0
      %560 = vmatpush1.msra.mxu0 0.0
      %561 = vmatprep.subr.mxu0 0.0
      %562 = vmatpush1.msra.mxu0 0.0
      %563 = vmatprep.subr.mxu0 0.0
      %564 = vmatpush1.msra.mxu0 0.0
      %565 = vmatprep.subr.mxu0 0.0
      %566 = vmatpush1.msra.mxu0 0.0
      %567 = vmatprep.subr.mxu0 0.0
      %568 = vmatpush1.msra.mxu0 0.0
      %569 = vmatprep.subr.mxu0 0.0
      %570 = vmatpush1.msra.mxu0 0.0
      %571 = vmatprep.subr.mxu0 0.0
      %572 = vmatpush1.msra.mxu0 0.0
      %573 = vmatprep.subr.mxu0 0.0
      %574 = vmatpush1.msra.mxu0 0.0
      %575 = vmatprep.subr.mxu0 0.0
      %576 = vmatpush1.msra.mxu0 0.0
      %577 = vmatprep.subr.mxu0 0.0
      %578 = vmatpush1.msra.mxu0 0.0
      %579 = vmatprep.subr.mxu0 0.0
      %580 = vmatpush1.msra.mxu0 0.0
      %581 = vmatprep.subr.mxu0 0.0
      %582 = vmatpush1.msra.mxu0 0.0
      %583 = vmatprep.subr.mxu0 0.0
      %584 = vmatpush1.msra.mxu0 %v552
      %585 = vmatprep.subr.mxu0 0.0
      %586 = vmatpush1.msra.mxu0 %v551
      %587 = vmatprep.subr.mxu0 0.0
      %588 = vmatpush2.msra.mxu0 0.0
      %589 = vmatprep.subr.mxu0 0.0
      %590 = vmatpush2.msra.mxu0 0.0
      %591 = vmatprep.subr.mxu0 0.0
      %592 = vmatpush2.msra.mxu0 0.0
      %593 = vmatprep.subr.mxu0 0.0
      %594 = vmatpush2.msra.mxu0 0.0
      %595 = vmatprep.subr.mxu0 0.0
      %596 = vmatpush2.msra.mxu0 0.0
      %597 = vmatprep.subr.mxu0 0.0
      %598 = vmatpush2.msra.mxu0 0.0
      %599 = vmatprep.subr.mxu0 0.0
      %600 = vmatpush2.msra.mxu0 0.0
      %601 = vmatprep.subr.mxu0 0.0
      %602 = vmatpush2.msra.mxu0 0.0
      %603 = vmatprep.subr.mxu0 0.0
      %604 = vmatpush2.msra.mxu0 0.0
      %605 = vmatprep.subr.mxu0 0.0
      %606 = vmatpush2.msra.mxu0 0.0
      %607 = vmatprep.subr.mxu0 0.0
      %608 = vmatpush2.msra.mxu0 0.0
      %609 = vmatprep.subr.mxu0 0.0
      %610 = vmatpush2.msra.mxu0 0.0
      %611 = vmatprep.subr.mxu0 0.0
      %612 = vmatpush2.msra.mxu0 0.0
      %613 = vmatprep.subr.mxu0 0.0
      %614 = vmatpush2.msra.mxu0 0.0
      %615 = vmatprep.subr.mxu0 0.0
      %616 = vmatpush2.msra.mxu0 0.0
      %617 = vmatprep.subr.mxu0 0.0
      %618 = vmatpush2.msra.mxu0 0.0
      %619 = vmatprep.mubr.f32.mxu0 0.0
      %620 = vmatmul.mubr.f32.gmra.mxu0 %v478
      %v621 = vpop.f32.mrf.mxu0
      %v622 = vadd.f32 %v554, %v621
      %v623 = vpop.f32.mrf.mxu0
      %624 = vdwg.mxu0
      %s625 = scalar_lea.vmem %s1, 32
      %v626 = vld [vmem:[%s625] sm:$0xff]
      %v627 = vld [vmem:[%s625 + $0x8] sm:$0xff]
      %s628 = scalar_lea.vmem %s2, 2
      %v629 = vld [vmem:[%s628] sm:$0x1]
      %630 = vmatprep.subr.mxu0 0.0
      %631 = vmatpush1.msra.mxu0 0.0
      %632 = vmatprep.subr.mxu0 0.0
      %633 = vmatpush1.msra.mxu0 0.0
      %634 = vmatprep.subr.mxu0 0.0
      %635 = vmatpush1.msra.mxu0 0.0
      %636 = vmatprep.subr.mxu0 0.0
      %637 = vmatpush1.msra.mxu0 0.0
      %638 = vmatprep.subr.mxu0 0.0
      %639 = vmatpush1.msra.mxu0 0.0
      %640 = vmatprep.subr.mxu0 0.0
      %641 = vmatpush1.msra.mxu0 0.0
      %642 = vmatprep.subr.mxu0 0.0
      %643 = vmatpush1.msra.mxu0 0.0
      %644 = vmatprep.subr.mxu0 0.0
      %645 = vmatpush1.msra.mxu0 0.0
      %646 = vmatprep.subr.mxu0 0.0
      %647 = vmatpush1.msra.mxu0 0.0
      %648 = vmatprep.subr.mxu0 0.0
      %649 = vmatpush1.msra.mxu0 0.0
      %650 = vmatprep.subr.mxu0 0.0
      %651 = vmatpush1.msra.mxu0 0.0
      %652 = vmatprep.subr.mxu0 0.0
      %653 = vmatpush1.msra.mxu0 0.0
      %654 = vmatprep.subr.mxu0 0.0
      %655 = vmatpush1.msra.mxu0 0.0
      %656 = vmatprep.subr.mxu0 0.0
      %657 = vmatpush1.msra.mxu0 0.0
      %658 = vmatprep.subr.mxu0 0.0
      %659 = vmatpush1.msra.mxu0 %v627
      %660 = vmatprep.subr.mxu0 0.0
      %661 = vmatpush1.msra.mxu0 %v626
      %662 = vmatprep.subr.mxu0 0.0
      %663 = vmatpush2.msra.mxu0 0.0
      %664 = vmatprep.subr.mxu0 0.0
      %665 = vmatpush2.msra.mxu0 0.0
      %666 = vmatprep.subr.mxu0 0.0
      %667 = vmatpush2.msra.mxu0 0.0
      %668 = vmatprep.subr.mxu0 0.0
      %669 = vmatpush2.msra.mxu0 0.0
      %670 = vmatprep.subr.mxu0 0.0
      %671 = vmatpush2.msra.mxu0 0.0
      %672 = vmatprep.subr.mxu0 0.0
      %673 = vmatpush2.msra.mxu0 0.0
      %674 = vmatprep.subr.mxu0 0.0
      %675 = vmatpush2.msra.mxu0 0.0
      %676 = vmatprep.subr.mxu0 0.0
      %677 = vmatpush2.msra.mxu0 0.0
      %678 = vmatprep.subr.mxu0 0.0
      %679 = vmatpush2.msra.mxu0 0.0
      %680 = vmatprep.subr.mxu0 0.0
      %681 = vmatpush2.msra.mxu0 0.0
      %682 = vmatprep.subr.mxu0 0.0
      %683 = vmatpush2.msra.mxu0 0.0
      %684 = vmatprep.subr.mxu0 0.0
      %685 = vmatpush2.msra.mxu0 0.0
      %686 = vmatprep.subr.mxu0 0.0
      %687 = vmatpush2.msra.mxu0 0.0
      %688 = vmatprep.subr.mxu0 0.0
      %689 = vmatpush2.msra.mxu0 0.0
      %690 = vmatprep.subr.mxu0 0.0
      %691 = vmatpush2.msra.mxu0 0.0
      %692 = vmatprep.subr.mxu0 0.0
      %693 = vmatpush2.msra.mxu0 0.0
      %694 = vmatprep.mubr.f32.mxu0 0.0
      %695 = vmatmul.mubr.f32.gmra.mxu0 %v478
      %v696 = vpop.f32.mrf.mxu0
      %v697 = vadd.f32 %v629, %v696
      %v698 = vpop.f32.mrf.mxu0
      %699 = vdwg.mxu0
      %s700 = scalar_lea.vmem %s1, 48
      %v701 = vld [vmem:[%s700] sm:$0xff]
      %v702 = vld [vmem:[%s700 + $0x8] sm:$0xff]
      %s703 = scalar_lea.vmem %s2, 3
      %v704 = vld [vmem:[%s703] sm:$0x1]
      %705 = vmatprep.subr.mxu0 0.0
      %706 = vmatpush1.msra.mxu0 0.0
      %707 = vmatprep.subr.mxu0 0.0
      %708 = vmatpush1.msra.mxu0 0.0
      %709 = vmatprep.subr.mxu0 0.0
      %710 = vmatpush1.msra.mxu0 0.0
      %711 = vmatprep.subr.mxu0 0.0
      %712 = vmatpush1.msra.mxu0 0.0
      %713 = vmatprep.subr.mxu0 0.0
      %714 = vmatpush1.msra.mxu0 0.0
      %715 = vmatprep.subr.mxu0 0.0
      %716 = vmatpush1.msra.mxu0 0.0
      %717 = vmatprep.subr.mxu0 0.0
      %718 = vmatpush1.msra.mxu0 0.0
      %719 = vmatprep.subr.mxu0 0.0
      %720 = vmatpush1.msra.mxu0 0.0
      %721 = vmatprep.subr.mxu0 0.0
      %722 = vmatpush1.msra.mxu0 0.0
      %723 = vmatprep.subr.mxu0 0.0
      %724 = vmatpush1.msra.mxu0 0.0
      %725 = vmatprep.subr.mxu0 0.0
      %726 = vmatpush1.msra.mxu0 0.0
      %727 = vmatprep.subr.mxu0 0.0
      %728 = vmatpush1.msra.mxu0 0.0
      %729 = vmatprep.subr.mxu0 0.0
      %730 = vmatpush1.msra.mxu0 0.0
      %731 = vmatprep.subr.mxu0 0.0
      %732 = vmatpush1.msra.mxu0 0.0
      %733 = vmatprep.subr.mxu0 0.0
      %734 = vmatpush1.msra.mxu0 %v702
      %735 = vmatprep.subr.mxu0 0.0
      %736 = vmatpush1.msra.mxu0 %v701
      %737 = vmatprep.subr.mxu0 0.0
      %738 = vmatpush2.msra.mxu0 0.0
      %739 = vmatprep.subr.mxu0 0.0
      %740 = vmatpush2.msra.mxu0 0.0
      %741 = vmatprep.subr.mxu0 0.0
      %742 = vmatpush2.msra.mxu0 0.0
      %743 = vmatprep.subr.mxu0 0.0
      %744 = vmatpush2.msra.mxu0 0.0
      %745 = vmatprep.subr.mxu0 0.0
      %746 = vmatpush2.msra.mxu0 0.0
      %747 = vmatprep.subr.mxu0 0.0
      %748 = vmatpush2.msra.mxu0 0.0
      %749 = vmatprep.subr.mxu0 0.0
      %750 = vmatpush2.msra.mxu0 0.0
      %751 = vmatprep.subr.mxu0 0.0
      %752 = vmatpush2.msra.mxu0 0.0
      %753 = vmatprep.subr.mxu0 0.0
      %754 = vmatpush2.msra.mxu0 0.0
      %755 = vmatprep.subr.mxu0 0.0
      %756 = vmatpush2.msra.mxu0 0.0
      %757 = vmatprep.subr.mxu0 0.0
      %758 = vmatpush2.msra.mxu0 0.0
      %759 = vmatprep.subr.mxu0 0.0
      %760 = vmatpush2.msra.mxu0 0.0
      %761 = vmatprep.subr.mxu0 0.0
      %762 = vmatpush2.msra.mxu0 0.0
      %763 = vmatprep.subr.mxu0 0.0
      %764 = vmatpush2.msra.mxu0 0.0
      %765 = vmatprep.subr.mxu0 0.0
      %766 = vmatpush2.msra.mxu0 0.0
      %767 = vmatprep.subr.mxu0 0.0
      %768 = vmatpush2.msra.mxu0 0.0
      %769 = vmatprep.mubr.f32.mxu0 0.0
      %770 = vmatmul.mubr.f32.gmra.mxu0 %v478
      %v771 = vpop.f32.mrf.mxu0
      %v772 = vadd.f32 %v704, %v771
      %v773 = vpop.f32.mrf.mxu0
      %774 = vdwg.mxu0
      %v775 = vld [vmem:[%s461] sm:$0xff]
      %v777 = vrot.slane %v622, 7
      %v780 = vrot.slane %v697, 6
      %v783 = vrot.slane %v772, 5
      %v786 = vrot.slane %v775, 4
      %vm788 = vcmask 1040384
      %v789 = vsel %vm788, %v547, %v777
      %vm790 = vcmask 1041408
      %v791 = vsel %vm790, %v789, %v780
      %vm792 = vcmask 1042432
      %v793 = vsel %vm792, %v791, %v783
      %vm794 = vcmask 1043456
      %v795 = vsel %vm794, %v793, %v786
      %v796 = vsel %vm794, %v786, 0.0
      %v797 = vld [vmem:[%s5] sm:$0x1]
      %v798 = vmul.f32 %v795, %v795
      %v799 = vmul.f32 %v796, %v796
      %vm800 = vcmask 261120
      %v801 = vsel %vm800, %v798, 0.0
      %802 = vadd.xlane.f32.xlu0 %v801
      %v803 = vpop.xlane.xlu0 %802
      %v804 = vsel %vm800, %v799, 0.0
      %805 = vadd.xlane.f32.xlu0 %v804
      %v806 = vpop.xlane.xlu0 %805
      %v807 = vrcp.pop 32.0
      %v808 = vmul.f32 %v803, %v807
      %v809 = vmul.f32 %v806, %v807
      %v810 = vadd.f32 %v808, 1e-06
      %v811 = vadd.f32 %v809, 1e-06
      %v812 = vrsqrt.pop %v810
      %v813 = vrsqrt.pop %v811
      %v814 = vmul.f32 %v795, %v812
      %v815 = vmul.f32 %v796, %v813
      %v817 = vlaneseq
      %v818 = vshrl.u32 %v817, 7
      %v819 = vsub.s32 0, %v818
      %v820 = vrot.slane %v797, %v819
      %v822 = vmul.f32 %v814, %v820
      %v823 = vmul.f32 %v815, %v820
      %v824 = vld [vmem:[%s6] sm:$0xff]
      %v825 = vld [vmem:[%s6 + $0x8] sm:$0xff]
      %v826 = vld [vmem:[%s6 + $0x10] sm:$0xff]
      %v827 = vld [vmem:[%s6 + $0x18] sm:$0xff]
      %v829 = vsel %vm800, %v822, 0
      %v832 = vsel %vm800, %v823, 0
      %834 = vmatprep.subr.mxu0 0.0
      %835 = vmatpush1.msra.mxu0 0.0
      %836 = vmatprep.subr.mxu0 0.0
      %837 = vmatpush1.msra.mxu0 0.0
      %838 = vmatprep.subr.mxu0 0.0
      %839 = vmatpush1.msra.mxu0 0.0
      %840 = vmatprep.subr.mxu0 0.0
      %841 = vmatpush1.msra.mxu0 0.0
      %842 = vmatprep.subr.mxu0 0.0
      %843 = vmatpush1.msra.mxu0 0.0
      %844 = vmatprep.subr.mxu0 0.0
      %845 = vmatpush1.msra.mxu0 0.0
      %846 = vmatprep.subr.mxu0 0.0
      %847 = vmatpush1.msra.mxu0 0.0
      %848 = vmatprep.subr.mxu0 0.0
      %849 = vmatpush1.msra.mxu0 0.0
      %850 = vmatprep.subr.mxu0 0.0
      %851 = vmatpush1.msra.mxu0 0.0
      %852 = vmatprep.subr.mxu0 0.0
      %853 = vmatpush1.msra.mxu0 0.0
      %854 = vmatprep.subr.mxu0 0.0
      %855 = vmatpush1.msra.mxu0 0.0
      %856 = vmatprep.subr.mxu0 0.0
      %857 = vmatpush1.msra.mxu0 0.0
      %858 = vmatprep.subr.mxu0 0.0
      %859 = vmatpush1.msra.mxu0 %v827
      %860 = vmatprep.subr.mxu0 0.0
      %861 = vmatpush1.msra.mxu0 %v826
      %862 = vmatprep.subr.mxu0 0.0
      %863 = vmatpush1.msra.mxu0 %v825
      %864 = vmatprep.subr.mxu0 0.0
      %865 = vmatpush1.msra.mxu0 %v824
      %866 = vmatprep.subr.mxu0 0.0
      %867 = vmatpush2.msra.mxu0 0.0
      %868 = vmatprep.subr.mxu0 0.0
      %869 = vmatpush2.msra.mxu0 0.0
      %870 = vmatprep.subr.mxu0 0.0
      %871 = vmatpush2.msra.mxu0 0.0
      %872 = vmatprep.subr.mxu0 0.0
      %873 = vmatpush2.msra.mxu0 0.0
      %874 = vmatprep.subr.mxu0 0.0
      %875 = vmatpush2.msra.mxu0 0.0
      %876 = vmatprep.subr.mxu0 0.0
      %877 = vmatpush2.msra.mxu0 0.0
      %878 = vmatprep.subr.mxu0 0.0
      %879 = vmatpush2.msra.mxu0 0.0
      %880 = vmatprep.subr.mxu0 0.0
      %881 = vmatpush2.msra.mxu0 0.0
      %882 = vmatprep.subr.mxu0 0.0
      %883 = vmatpush2.msra.mxu0 0.0
      %884 = vmatprep.subr.mxu0 0.0
      %885 = vmatpush2.msra.mxu0 0.0
      %886 = vmatprep.subr.mxu0 0.0
      %887 = vmatpush2.msra.mxu0 0.0
      %888 = vmatprep.subr.mxu0 0.0
      %889 = vmatpush2.msra.mxu0 0.0
      %890 = vmatprep.subr.mxu0 0.0
      %891 = vmatpush2.msra.mxu0 0.0
      %892 = vmatprep.subr.mxu0 0.0
      %893 = vmatpush2.msra.mxu0 0.0
      %894 = vmatprep.subr.mxu0 0.0
      %895 = vmatpush2.msra.mxu0 0.0
      %896 = vmatprep.subr.mxu0 0.0
      %897 = vmatpush2.msra.mxu0 0.0
      %898 = vmatprep.mubr.f32.mxu0 0.0
      %899 = vmatmul.mubr.f32.gmra.mxu0 %v829
      %v900 = vpop.f32.mrf.mxu0
      %v901 = vadd.f32 0.0, %v900
      %v902 = vpop.f32.mrf.mxu0
      %903 = vmatprep.mubr.f32.mxu0 0.0
      %904 = vmatmul.mubr.f32.gmra.mxu0 %v832
      %v905 = vpop.f32.mrf.mxu0
      %v906 = vadd.f32 0.0, %v905
      %v907 = vpop.f32.mrf.mxu0
      %908 = vdwg.mxu0
      %v909 = vld [vmem:[%s466] sm:$0xff]
      %v910 = vld [vmem:[%s466 + $0x8] sm:$0xff]
      %913 = vrot.lane.b32.xlu0 %v901, 96
      %v914 = vpop.permute.xlu0 %913
      %915 = vrot.lane.b32.xlu0 %v906, 96
      %v916 = vpop.permute.xlu0 %915
      %vm917 = vcmask 64512
      %v918 = vsel %vm917, %v901, 0
      %v920 = vsel %vm917, %v906, 0
      %v922 = vsel %vm917, %v914, 0
      %v924 = vsel %vm917, %v916, 0
      %926 = vmatprep.subr.mxu0 0.0
      %927 = vmatpush1.xpose.msra.mxu0 0.0
      %928 = vmatprep.subr.mxu0 0.0
      %929 = vmatpush1.xpose.msra.mxu0 0.0
      %930 = vmatprep.subr.mxu0 0.0
      %931 = vmatpush1.xpose.msra.mxu0 0.0
      %932 = vmatprep.subr.mxu0 0.0
      %933 = vmatpush1.xpose.msra.mxu0 0.0
      %934 = vmatprep.subr.mxu0 0.0
      %935 = vmatpush1.xpose.msra.mxu0 0.0
      %936 = vmatprep.subr.mxu0 0.0
      %937 = vmatpush1.xpose.msra.mxu0 0.0
      %938 = vmatprep.subr.mxu0 0.0
      %939 = vmatpush1.xpose.msra.mxu0 0.0
      %940 = vmatprep.subr.mxu0 0.0
      %941 = vmatpush1.xpose.msra.mxu0 0.0
      %942 = vmatprep.subr.mxu0 0.0
      %943 = vmatpush1.xpose.msra.mxu0 0.0
      %944 = vmatprep.subr.mxu0 0.0
      %945 = vmatpush1.xpose.msra.mxu0 0.0
      %946 = vmatprep.subr.mxu0 0.0
      %947 = vmatpush1.xpose.msra.mxu0 0.0
      %948 = vmatprep.subr.mxu0 0.0
      %949 = vmatpush1.xpose.msra.mxu0 0.0
      %950 = vmatprep.subr.mxu0 0.0
      %951 = vmatpush1.xpose.msra.mxu0 0.0
      %952 = vmatprep.subr.mxu0 0.0
      %953 = vmatpush1.xpose.msra.mxu0 0.0
      %954 = vmatprep.subr.mxu0 0.0
      %955 = vmatpush1.xpose.msra.mxu0 %v924
      %956 = vmatprep.subr.mxu0 0.0
      %957 = vmatpush1.xpose.msra.mxu0 %v922
      %958 = vmatprep.subr.mxu0 0.0
      %959 = vmatpush2.xpose.msra.mxu0 0.0
      %960 = vmatprep.subr.mxu0 0.0
      %961 = vmatpush2.xpose.msra.mxu0 0.0
      %962 = vmatprep.subr.mxu0 0.0
      %963 = vmatpush2.xpose.msra.mxu0 0.0
      %964 = vmatprep.subr.mxu0 0.0
      %965 = vmatpush2.xpose.msra.mxu0 0.0
      %966 = vmatprep.subr.mxu0 0.0
      %967 = vmatpush2.xpose.msra.mxu0 0.0
      %968 = vmatprep.subr.mxu0 0.0
      %969 = vmatpush2.xpose.msra.mxu0 0.0
      %970 = vmatprep.subr.mxu0 0.0
      %971 = vmatpush2.xpose.msra.mxu0 0.0
      %972 = vmatprep.subr.mxu0 0.0
      %973 = vmatpush2.xpose.msra.mxu0 0.0
      %974 = vmatprep.subr.mxu0 0.0
      %975 = vmatpush2.xpose.msra.mxu0 0.0
      %976 = vmatprep.subr.mxu0 0.0
      %977 = vmatpush2.xpose.msra.mxu0 0.0
      %978 = vmatprep.subr.mxu0 0.0
      %979 = vmatpush2.xpose.msra.mxu0 0.0
      %980 = vmatprep.subr.mxu0 0.0
      %981 = vmatpush2.xpose.msra.mxu0 0.0
      %982 = vmatprep.subr.mxu0 0.0
      %983 = vmatpush2.xpose.msra.mxu0 0.0
      %984 = vmatprep.subr.mxu0 0.0
      %985 = vmatpush2.xpose.msra.mxu0 0.0
      %986 = vmatprep.subr.mxu0 0.0
      %987 = vmatpush2.xpose.msra.mxu0 0.0
      %988 = vmatprep.subr.mxu0 0.0
      %989 = vmatpush2.xpose.msra.mxu0 0.0
      %990 = vmatprep.mubr.f32.mxu0 0.0
      %991 = vmatmul.mubr.f32.gmra.mxu0 %v918
      %v992 = vpop.f32.mrf.mxu0
      %v993 = vadd.f32 %v909, %v992
      %v994 = vpop.f32.mrf.mxu0
      %995 = vmatprep.mubr.f32.mxu0 0.0
      %996 = vmatmul.mubr.f32.gmra.mxu0 %v920
      %v997 = vpop.f32.mrf.mxu0
      %v998 = vadd.f32 %v910, %v997
      %v999 = vpop.f32.mrf.mxu0
      %1000 = vdwg.mxu0
      %v1001 = vsel %vm476, %v993, -inf
      %1002 = vmax.xlane.f32.xlu0 %v1001
      %v1003 = vpop.xlane.xlu0 %1002
      %v1004 = vsel %vm476, %v998, -inf
      %1005 = vmax.xlane.f32.xlu0 %v1004
      %v1006 = vpop.xlane.xlu0 %1005
      %v1007 = vsub.f32 %v993, %v1003
      %v1008 = vsub.f32 %v998, %v1006
      %v1009 = vmul.f32 %v1007, 1.442695
      %v1010 = vpow.pop %v1009
      %v1011 = vmul.f32 %v1008, 1.442695
      %v1012 = vpow.pop %v1011
      %v1013 = vsel %vm476, %v1010, 0.0
      %1014 = vadd.xlane.f32.xlu0 %v1013
      %v1015 = vpop.xlane.xlu0 %1014
      %v1016 = vsel %vm476, %v1012, 0.0
      %1017 = vadd.xlane.f32.xlu0 %v1016
      %v1018 = vpop.xlane.xlu0 %1017
      %1019 = vrot.lane.b32.xlu0 %v901, 64
      %v1020 = vpop.permute.xlu0 %1019
      %1021 = vrot.lane.b32.xlu0 %v906, 64
      %v1022 = vpop.permute.xlu0 %1021
      %v1026 = vsel %vm476, %v1010, 0
      %v1029 = vsel %vm476, %v1012, 0
      %1031 = vmatprep.subr.mxu0 0.0
      %1032 = vmatpush1.msra.mxu0 0.0
      %1033 = vmatprep.subr.mxu0 0.0
      %1034 = vmatpush1.msra.mxu0 0.0
      %1035 = vmatprep.subr.mxu0 0.0
      %1036 = vmatpush1.msra.mxu0 0.0
      %1037 = vmatprep.subr.mxu0 0.0
      %1038 = vmatpush1.msra.mxu0 0.0
      %1039 = vmatprep.subr.mxu0 0.0
      %1040 = vmatpush1.msra.mxu0 0.0
      %1041 = vmatprep.subr.mxu0 0.0
      %1042 = vmatpush1.msra.mxu0 0.0
      %1043 = vmatprep.subr.mxu0 0.0
      %1044 = vmatpush1.msra.mxu0 0.0
      %1045 = vmatprep.subr.mxu0 0.0
      %1046 = vmatpush1.msra.mxu0 0.0
      %1047 = vmatprep.subr.mxu0 0.0
      %1048 = vmatpush1.msra.mxu0 0.0
      %1049 = vmatprep.subr.mxu0 0.0
      %1050 = vmatpush1.msra.mxu0 0.0
      %1051 = vmatprep.subr.mxu0 0.0
      %1052 = vmatpush1.msra.mxu0 0.0
      %1053 = vmatprep.subr.mxu0 0.0
      %1054 = vmatpush1.msra.mxu0 0.0
      %1055 = vmatprep.subr.mxu0 0.0
      %1056 = vmatpush1.msra.mxu0 0.0
      %1057 = vmatprep.subr.mxu0 0.0
      %1058 = vmatpush1.msra.mxu0 0.0
      %1059 = vmatprep.subr.mxu0 0.0
      %1060 = vmatpush1.msra.mxu0 %v1022
      %1061 = vmatprep.subr.mxu0 0.0
      %1062 = vmatpush1.msra.mxu0 %v1020
      %1063 = vmatprep.subr.mxu0 0.0
      %1064 = vmatpush2.msra.mxu0 0.0
      %1065 = vmatprep.subr.mxu0 0.0
      %1066 = vmatpush2.msra.mxu0 0.0
      %1067 = vmatprep.subr.mxu0 0.0
      %1068 = vmatpush2.msra.mxu0 0.0
      %1069 = vmatprep.subr.mxu0 0.0
      %1070 = vmatpush2.msra.mxu0 0.0
      %1071 = vmatprep.subr.mxu0 0.0
      %1072 = vmatpush2.msra.mxu0 0.0
      %1073 = vmatprep.subr.mxu0 0.0
      %1074 = vmatpush2.msra.mxu0 0.0
      %1075 = vmatprep.subr.mxu0 0.0
      %1076 = vmatpush2.msra.mxu0 0.0
      %1077 = vmatprep.subr.mxu0 0.0
      %1078 = vmatpush2.msra.mxu0 0.0
      %1079 = vmatprep.subr.mxu0 0.0
      %1080 = vmatpush2.msra.mxu0 0.0
      %1081 = vmatprep.subr.mxu0 0.0
      %1082 = vmatpush2.msra.mxu0 0.0
      %1083 = vmatprep.subr.mxu0 0.0
      %1084 = vmatpush2.msra.mxu0 0.0
      %1085 = vmatprep.subr.mxu0 0.0
      %1086 = vmatpush2.msra.mxu0 0.0
      %1087 = vmatprep.subr.mxu0 0.0
      %1088 = vmatpush2.msra.mxu0 0.0
      %1089 = vmatprep.subr.mxu0 0.0
      %1090 = vmatpush2.msra.mxu0 0.0
      %1091 = vmatprep.subr.mxu0 0.0
      %1092 = vmatpush2.msra.mxu0 0.0
      %1093 = vmatprep.subr.mxu0 0.0
      %1094 = vmatpush2.msra.mxu0 0.0
      %1095 = vmatprep.mubr.f32.mxu0 0.0
      %1096 = vmatmul.mubr.f32.gmra.mxu0 %v1026
      %v1097 = vpop.f32.mrf.mxu0
      %v1098 = vadd.f32 0.0, %v1097
      %v1099 = vpop.f32.mrf.mxu0
      %1100 = vmatprep.mubr.f32.mxu0 0.0
      %1101 = vmatmul.mubr.f32.gmra.mxu0 %v1029
      %v1102 = vpop.f32.mrf.mxu0
      %v1103 = vadd.f32 0.0, %v1102
      %v1104 = vpop.f32.mrf.mxu0
      %1105 = vdwg.mxu0
      %v1106 = vrcp.pop %v1015
      %v1107 = vrcp.pop %v1018
      %v1108 = vmul.f32 %v1098, %v1106
      %v1109 = vmul.f32 %v1103, %v1107
      %s1110 = scalar_lea.vmem %s466, 16
      %v1111 = vld [vmem:[%s1110] sm:$0xff]
      %v1112 = vld [vmem:[%s1110 + $0x8] sm:$0xff]
      %1113 = vrot.lane.b32.xlu0 %v901, 120
      %v1114 = vpop.permute.xlu0 %1113
      %1115 = vrot.lane.b32.xlu0 %v906, 120
      %v1116 = vpop.permute.xlu0 %1115
      %1117 = vrot.lane.b32.xlu0 %v901, 88
      %v1118 = vpop.permute.xlu0 %1117
      %1119 = vrot.lane.b32.xlu0 %v906, 88
      %v1120 = vpop.permute.xlu0 %1119
      %v1121 = vsel %vm917, %v1114, 0
      %v1123 = vsel %vm917, %v1116, 0
      %v1125 = vsel %vm917, %v1118, 0
      %v1127 = vsel %vm917, %v1120, 0
      %1129 = vmatprep.subr.mxu0 0.0
      %1130 = vmatpush1.xpose.msra.mxu0 0.0
      %1131 = vmatprep.subr.mxu0 0.0
      %1132 = vmatpush1.xpose.msra.mxu0 0.0
      %1133 = vmatprep.subr.mxu0 0.0
      %1134 = vmatpush1.xpose.msra.mxu0 0.0
      %1135 = vmatprep.subr.mxu0 0.0
      %1136 = vmatpush1.xpose.msra.mxu0 0.0
      %1137 = vmatprep.subr.mxu0 0.0
      %1138 = vmatpush1.xpose.msra.mxu0 0.0
      %1139 = vmatprep.subr.mxu0 0.0
      %1140 = vmatpush1.xpose.msra.mxu0 0.0
      %1141 = vmatprep.subr.mxu0 0.0
      %1142 = vmatpush1.xpose.msra.mxu0 0.0
      %1143 = vmatprep.subr.mxu0 0.0
      %1144 = vmatpush1.xpose.msra.mxu0 0.0
      %1145 = vmatprep.subr.mxu0 0.0
      %1146 = vmatpush1.xpose.msra.mxu0 0.0
      %1147 = vmatprep.subr.mxu0 0.0
      %1148 = vmatpush1.xpose.msra.mxu0 0.0
      %1149 = vmatprep.subr.mxu0 0.0
      %1150 = vmatpush1.xpose.msra.mxu0 0.0
      %1151 = vmatprep.subr.mxu0 0.0
      %1152 = vmatpush1.xpose.msra.mxu0 0.0
      %1153 = vmatprep.subr.mxu0 0.0
      %1154 = vmatpush1.xpose.msra.mxu0 0.0
      %1155 = vmatprep.subr.mxu0 0.0
      %1156 = vmatpush1.xpose.msra.mxu0 0.0
      %1157 = vmatprep.subr.mxu0 0.0
      %1158 = vmatpush1.xpose.msra.mxu0 %v1127
      %1159 = vmatprep.subr.mxu0 0.0
      %1160 = vmatpush1.xpose.msra.mxu0 %v1125
      %1161 = vmatprep.subr.mxu0 0.0
      %1162 = vmatpush2.xpose.msra.mxu0 0.0
      %1163 = vmatprep.subr.mxu0 0.0
      %1164 = vmatpush2.xpose.msra.mxu0 0.0
      %1165 = vmatprep.subr.mxu0 0.0
      %1166 = vmatpush2.xpose.msra.mxu0 0.0
      %1167 = vmatprep.subr.mxu0 0.0
      %1168 = vmatpush2.xpose.msra.mxu0 0.0
      %1169 = vmatprep.subr.mxu0 0.0
      %1170 = vmatpush2.xpose.msra.mxu0 0.0
      %1171 = vmatprep.subr.mxu0 0.0
      %1172 = vmatpush2.xpose.msra.mxu0 0.0
      %1173 = vmatprep.subr.mxu0 0.0
      %1174 = vmatpush2.xpose.msra.mxu0 0.0
      %1175 = vmatprep.subr.mxu0 0.0
      %1176 = vmatpush2.xpose.msra.mxu0 0.0
      %1177 = vmatprep.subr.mxu0 0.0
      %1178 = vmatpush2.xpose.msra.mxu0 0.0
      %1179 = vmatprep.subr.mxu0 0.0
      %1180 = vmatpush2.xpose.msra.mxu0 0.0
      %1181 = vmatprep.subr.mxu0 0.0
      %1182 = vmatpush2.xpose.msra.mxu0 0.0
      %1183 = vmatprep.subr.mxu0 0.0
      %1184 = vmatpush2.xpose.msra.mxu0 0.0
      %1185 = vmatprep.subr.mxu0 0.0
      %1186 = vmatpush2.xpose.msra.mxu0 0.0
      %1187 = vmatprep.subr.mxu0 0.0
      %1188 = vmatpush2.xpose.msra.mxu0 0.0
      %1189 = vmatprep.subr.mxu0 0.0
      %1190 = vmatpush2.xpose.msra.mxu0 0.0
      %1191 = vmatprep.subr.mxu0 0.0
      %1192 = vmatpush2.xpose.msra.mxu0 0.0
      %1193 = vmatprep.mubr.f32.mxu0 0.0
      %1194 = vmatmul.mubr.f32.gmra.mxu0 %v1121
      %v1195 = vpop.f32.mrf.mxu0
      %v1196 = vadd.f32 %v1111, %v1195
      %v1197 = vpop.f32.mrf.mxu0
      %1198 = vmatprep.mubr.f32.mxu0 0.0
      %1199 = vmatmul.mubr.f32.gmra.mxu0 %v1123
      %v1200 = vpop.f32.mrf.mxu0
      %v1201 = vadd.f32 %v1112, %v1200
      %v1202 = vpop.f32.mrf.mxu0
      %1203 = vdwg.mxu0
      %v1204 = vsel %vm476, %v1196, -inf
      %1205 = vmax.xlane.f32.xlu0 %v1204
      %v1206 = vpop.xlane.xlu0 %1205
      %v1207 = vsel %vm476, %v1201, -inf
      %1208 = vmax.xlane.f32.xlu0 %v1207
      %v1209 = vpop.xlane.xlu0 %1208
      %v1210 = vsub.f32 %v1196, %v1206
      %v1211 = vsub.f32 %v1201, %v1209
      %v1212 = vmul.f32 %v1210, 1.442695
      %v1213 = vpow.pop %v1212
      %v1214 = vmul.f32 %v1211, 1.442695
      %v1215 = vpow.pop %v1214
      %v1216 = vsel %vm476, %v1213, 0.0
      %1217 = vadd.xlane.f32.xlu0 %v1216
      %v1218 = vpop.xlane.xlu0 %1217
      %v1219 = vsel %vm476, %v1215, 0.0
      %1220 = vadd.xlane.f32.xlu0 %v1219
      %v1221 = vpop.xlane.xlu0 %1220
      %1222 = vrot.lane.b32.xlu0 %v901, 56
      %v1223 = vpop.permute.xlu0 %1222
      %1224 = vrot.lane.b32.xlu0 %v906, 56
      %v1225 = vpop.permute.xlu0 %1224
      %v1229 = vsel %vm476, %v1213, 0
      %v1232 = vsel %vm476, %v1215, 0
      %1234 = vmatprep.subr.mxu0 0.0
      %1235 = vmatpush1.msra.mxu0 0.0
      %1236 = vmatprep.subr.mxu0 0.0
      %1237 = vmatpush1.msra.mxu0 0.0
      %1238 = vmatprep.subr.mxu0 0.0
      %1239 = vmatpush1.msra.mxu0 0.0
      %1240 = vmatprep.subr.mxu0 0.0
      %1241 = vmatpush1.msra.mxu0 0.0
      %1242 = vmatprep.subr.mxu0 0.0
      %1243 = vmatpush1.msra.mxu0 0.0
      %1244 = vmatprep.subr.mxu0 0.0
      %1245 = vmatpush1.msra.mxu0 0.0
      %1246 = vmatprep.subr.mxu0 0.0
      %1247 = vmatpush1.msra.mxu0 0.0
      %1248 = vmatprep.subr.mxu0 0.0
      %1249 = vmatpush1.msra.mxu0 0.0
      %1250 = vmatprep.subr.mxu0 0.0
      %1251 = vmatpush1.msra.mxu0 0.0
      %1252 = vmatprep.subr.mxu0 0.0
      %1253 = vmatpush1.msra.mxu0 0.0
      %1254 = vmatprep.subr.mxu0 0.0
      %1255 = vmatpush1.msra.mxu0 0.0
      %1256 = vmatprep.subr.mxu0 0.0
      %1257 = vmatpush1.msra.mxu0 0.0
      %1258 = vmatprep.subr.mxu0 0.0
      %1259 = vmatpush1.msra.mxu0 0.0
      %1260 = vmatprep.subr.mxu0 0.0
      %1261 = vmatpush1.msra.mxu0 0.0
      %1262 = vmatprep.subr.mxu0 0.0
      %1263 = vmatpush1.msra.mxu0 %v1225
      %1264 = vmatprep.subr.mxu0 0.0
      %1265 = vmatpush1.msra.mxu0 %v1223
      %1266 = vmatprep.subr.mxu0 0.0
      %1267 = vmatpush2.msra.mxu0 0.0
      %1268 = vmatprep.subr.mxu0 0.0
      %1269 = vmatpush2.msra.mxu0 0.0
      %1270 = vmatprep.subr.mxu0 0.0
      %1271 = vmatpush2.msra.mxu0 0.0
      %1272 = vmatprep.subr.mxu0 0.0
      %1273 = vmatpush2.msra.mxu0 0.0
      %1274 = vmatprep.subr.mxu0 0.0
      %1275 = vmatpush2.msra.mxu0 0.0
      %1276 = vmatprep.subr.mxu0 0.0
      %1277 = vmatpush2.msra.mxu0 0.0
      %1278 = vmatprep.subr.mxu0 0.0
      %1279 = vmatpush2.msra.mxu0 0.0
      %1280 = vmatprep.subr.mxu0 0.0
      %1281 = vmatpush2.msra.mxu0 0.0
      %1282 = vmatprep.subr.mxu0 0.0
      %1283 = vmatpush2.msra.mxu0 0.0
      %1284 = vmatprep.subr.mxu0 0.0
      %1285 = vmatpush2.msra.mxu0 0.0
      %1286 = vmatprep.subr.mxu0 0.0
      %1287 = vmatpush2.msra.mxu0 0.0
      %1288 = vmatprep.subr.mxu0 0.0
      %1289 = vmatpush2.msra.mxu0 0.0
      %1290 = vmatprep.subr.mxu0 0.0
      %1291 = vmatpush2.msra.mxu0 0.0
      %1292 = vmatprep.subr.mxu0 0.0
      %1293 = vmatpush2.msra.mxu0 0.0
      %1294 = vmatprep.subr.mxu0 0.0
      %1295 = vmatpush2.msra.mxu0 0.0
      %1296 = vmatprep.subr.mxu0 0.0
      %1297 = vmatpush2.msra.mxu0 0.0
      %1298 = vmatprep.mubr.f32.mxu0 0.0
      %1299 = vmatmul.mubr.f32.gmra.mxu0 %v1229
      %v1300 = vpop.f32.mrf.mxu0
      %v1301 = vadd.f32 0.0, %v1300
      %v1302 = vpop.f32.mrf.mxu0
      %1303 = vmatprep.mubr.f32.mxu0 0.0
      %1304 = vmatmul.mubr.f32.gmra.mxu0 %v1232
      %v1305 = vpop.f32.mrf.mxu0
      %v1306 = vadd.f32 0.0, %v1305
      %v1307 = vpop.f32.mrf.mxu0
      %1308 = vdwg.mxu0
      %v1309 = vrcp.pop %v1218
      %v1310 = vrcp.pop %v1221
      %v1311 = vmul.f32 %v1301, %v1309
      %v1312 = vmul.f32 %v1306, %v1310
      %s1313 = scalar_lea.vmem %s466, 32
      %v1314 = vld [vmem:[%s1313] sm:$0xff]
      %v1315 = vld [vmem:[%s1313 + $0x8] sm:$0xff]
      %1316 = vrot.lane.b32.xlu0 %v901, 112
      %v1317 = vpop.permute.xlu0 %1316
      %1318 = vrot.lane.b32.xlu0 %v906, 112
      %v1319 = vpop.permute.xlu0 %1318
      %1320 = vrot.lane.b32.xlu0 %v901, 80
      %v1321 = vpop.permute.xlu0 %1320
      %1322 = vrot.lane.b32.xlu0 %v906, 80
      %v1323 = vpop.permute.xlu0 %1322
      %v1324 = vsel %vm917, %v1317, 0
      %v1326 = vsel %vm917, %v1319, 0
      %v1328 = vsel %vm917, %v1321, 0
      %v1330 = vsel %vm917, %v1323, 0
      %1332 = vmatprep.subr.mxu0 0.0
      %1333 = vmatpush1.xpose.msra.mxu0 0.0
      %1334 = vmatprep.subr.mxu0 0.0
      %1335 = vmatpush1.xpose.msra.mxu0 0.0
      %1336 = vmatprep.subr.mxu0 0.0
      %1337 = vmatpush1.xpose.msra.mxu0 0.0
      %1338 = vmatprep.subr.mxu0 0.0
      %1339 = vmatpush1.xpose.msra.mxu0 0.0
      %1340 = vmatprep.subr.mxu0 0.0
      %1341 = vmatpush1.xpose.msra.mxu0 0.0
      %1342 = vmatprep.subr.mxu0 0.0
      %1343 = vmatpush1.xpose.msra.mxu0 0.0
      %1344 = vmatprep.subr.mxu0 0.0
      %1345 = vmatpush1.xpose.msra.mxu0 0.0
      %1346 = vmatprep.subr.mxu0 0.0
      %1347 = vmatpush1.xpose.msra.mxu0 0.0
      %1348 = vmatprep.subr.mxu0 0.0
      %1349 = vmatpush1.xpose.msra.mxu0 0.0
      %1350 = vmatprep.subr.mxu0 0.0
      %1351 = vmatpush1.xpose.msra.mxu0 0.0
      %1352 = vmatprep.subr.mxu0 0.0
      %1353 = vmatpush1.xpose.msra.mxu0 0.0
      %1354 = vmatprep.subr.mxu0 0.0
      %1355 = vmatpush1.xpose.msra.mxu0 0.0
      %1356 = vmatprep.subr.mxu0 0.0
      %1357 = vmatpush1.xpose.msra.mxu0 0.0
      %1358 = vmatprep.subr.mxu0 0.0
      %1359 = vmatpush1.xpose.msra.mxu0 0.0
      %1360 = vmatprep.subr.mxu0 0.0
      %1361 = vmatpush1.xpose.msra.mxu0 %v1330
      %1362 = vmatprep.subr.mxu0 0.0
      %1363 = vmatpush1.xpose.msra.mxu0 %v1328
      %1364 = vmatprep.subr.mxu0 0.0
      %1365 = vmatpush2.xpose.msra.mxu0 0.0
      %1366 = vmatprep.subr.mxu0 0.0
      %1367 = vmatpush2.xpose.msra.mxu0 0.0
      %1368 = vmatprep.subr.mxu0 0.0
      %1369 = vmatpush2.xpose.msra.mxu0 0.0
      %1370 = vmatprep.subr.mxu0 0.0
      %1371 = vmatpush2.xpose.msra.mxu0 0.0
      %1372 = vmatprep.subr.mxu0 0.0
      %1373 = vmatpush2.xpose.msra.mxu0 0.0
      %1374 = vmatprep.subr.mxu0 0.0
      %1375 = vmatpush2.xpose.msra.mxu0 0.0
      %1376 = vmatprep.subr.mxu0 0.0
      %1377 = vmatpush2.xpose.msra.mxu0 0.0
      %1378 = vmatprep.subr.mxu0 0.0
      %1379 = vmatpush2.xpose.msra.mxu0 0.0
      %1380 = vmatprep.subr.mxu0 0.0
      %1381 = vmatpush2.xpose.msra.mxu0 0.0
      %1382 = vmatprep.subr.mxu0 0.0
      %1383 = vmatpush2.xpose.msra.mxu0 0.0
      %1384 = vmatprep.subr.mxu0 0.0
      %1385 = vmatpush2.xpose.msra.mxu0 0.0
      %1386 = vmatprep.subr.mxu0 0.0
      %1387 = vmatpush2.xpose.msra.mxu0 0.0
      %1388 = vmatprep.subr.mxu0 0.0
      %1389 = vmatpush2.xpose.msra.mxu0 0.0
      %1390 = vmatprep.subr.mxu0 0.0
      %1391 = vmatpush2.xpose.msra.mxu0 0.0
      %1392 = vmatprep.subr.mxu0 0.0
      %1393 = vmatpush2.xpose.msra.mxu0 0.0
      %1394 = vmatprep.subr.mxu0 0.0
      %1395 = vmatpush2.xpose.msra.mxu0 0.0
      %1396 = vmatprep.mubr.f32.mxu0 0.0
      %1397 = vmatmul.mubr.f32.gmra.mxu0 %v1324
      %v1398 = vpop.f32.mrf.mxu0
      %v1399 = vadd.f32 %v1314, %v1398
      %v1400 = vpop.f32.mrf.mxu0
      %1401 = vmatprep.mubr.f32.mxu0 0.0
      %1402 = vmatmul.mubr.f32.gmra.mxu0 %v1326
      %v1403 = vpop.f32.mrf.mxu0
      %v1404 = vadd.f32 %v1315, %v1403
      %v1405 = vpop.f32.mrf.mxu0
      %1406 = vdwg.mxu0
      %v1407 = vsel %vm476, %v1399, -inf
      %1408 = vmax.xlane.f32.xlu0 %v1407
      %v1409 = vpop.xlane.xlu0 %1408
      %v1410 = vsel %vm476, %v1404, -inf
      %1411 = vmax.xlane.f32.xlu0 %v1410
      %v1412 = vpop.xlane.xlu0 %1411
      %v1413 = vsub.f32 %v1399, %v1409
      %v1414 = vsub.f32 %v1404, %v1412
      %v1415 = vmul.f32 %v1413, 1.442695
      %v1416 = vpow.pop %v1415
      %v1417 = vmul.f32 %v1414, 1.442695
      %v1418 = vpow.pop %v1417
      %v1419 = vsel %vm476, %v1416, 0.0
      %1420 = vadd.xlane.f32.xlu0 %v1419
      %v1421 = vpop.xlane.xlu0 %1420
      %v1422 = vsel %vm476, %v1418, 0.0
      %1423 = vadd.xlane.f32.xlu0 %v1422
      %v1424 = vpop.xlane.xlu0 %1423
      %1425 = vrot.lane.b32.xlu0 %v901, 48
      %v1426 = vpop.permute.xlu0 %1425
      %1427 = vrot.lane.b32.xlu0 %v906, 48
      %v1428 = vpop.permute.xlu0 %1427
      %v1432 = vsel %vm476, %v1416, 0
      %v1435 = vsel %vm476, %v1418, 0
      %1437 = vmatprep.subr.mxu0 0.0
      %1438 = vmatpush1.msra.mxu0 0.0
      %1439 = vmatprep.subr.mxu0 0.0
      %1440 = vmatpush1.msra.mxu0 0.0
      %1441 = vmatprep.subr.mxu0 0.0
      %1442 = vmatpush1.msra.mxu0 0.0
      %1443 = vmatprep.subr.mxu0 0.0
      %1444 = vmatpush1.msra.mxu0 0.0
      %1445 = vmatprep.subr.mxu0 0.0
      %1446 = vmatpush1.msra.mxu0 0.0
      %1447 = vmatprep.subr.mxu0 0.0
      %1448 = vmatpush1.msra.mxu0 0.0
      %1449 = vmatprep.subr.mxu0 0.0
      %1450 = vmatpush1.msra.mxu0 0.0
      %1451 = vmatprep.subr.mxu0 0.0
      %1452 = vmatpush1.msra.mxu0 0.0
      %1453 = vmatprep.subr.mxu0 0.0
      %1454 = vmatpush1.msra.mxu0 0.0
      %1455 = vmatprep.subr.mxu0 0.0
      %1456 = vmatpush1.msra.mxu0 0.0
      %1457 = vmatprep.subr.mxu0 0.0
      %1458 = vmatpush1.msra.mxu0 0.0
      %1459 = vmatprep.subr.mxu0 0.0
      %1460 = vmatpush1.msra.mxu0 0.0
      %1461 = vmatprep.subr.mxu0 0.0
      %1462 = vmatpush1.msra.mxu0 0.0
      %1463 = vmatprep.subr.mxu0 0.0
      %1464 = vmatpush1.msra.mxu0 0.0
      %1465 = vmatprep.subr.mxu0 0.0
      %1466 = vmatpush1.msra.mxu0 %v1428
      %1467 = vmatprep.subr.mxu0 0.0
      %1468 = vmatpush1.msra.mxu0 %v1426
      %1469 = vmatprep.subr.mxu0 0.0
      %1470 = vmatpush2.msra.mxu0 0.0
      %1471 = vmatprep.subr.mxu0 0.0
      %1472 = vmatpush2.msra.mxu0 0.0
      %1473 = vmatprep.subr.mxu0 0.0
      %1474 = vmatpush2.msra.mxu0 0.0
      %1475 = vmatprep.subr.mxu0 0.0
      %1476 = vmatpush2.msra.mxu0 0.0
      %1477 = vmatprep.subr.mxu0 0.0
      %1478 = vmatpush2.msra.mxu0 0.0
      %1479 = vmatprep.subr.mxu0 0.0
      %1480 = vmatpush2.msra.mxu0 0.0
      %1481 = vmatprep.subr.mxu0 0.0
      %1482 = vmatpush2.msra.mxu0 0.0
      %1483 = vmatprep.subr.mxu0 0.0
      %1484 = vmatpush2.msra.mxu0 0.0
      %1485 = vmatprep.subr.mxu0 0.0
      %1486 = vmatpush2.msra.mxu0 0.0
      %1487 = vmatprep.subr.mxu0 0.0
      %1488 = vmatpush2.msra.mxu0 0.0
      %1489 = vmatprep.subr.mxu0 0.0
      %1490 = vmatpush2.msra.mxu0 0.0
      %1491 = vmatprep.subr.mxu0 0.0
      %1492 = vmatpush2.msra.mxu0 0.0
      %1493 = vmatprep.subr.mxu0 0.0
      %1494 = vmatpush2.msra.mxu0 0.0
      %1495 = vmatprep.subr.mxu0 0.0
      %1496 = vmatpush2.msra.mxu0 0.0
      %1497 = vmatprep.subr.mxu0 0.0
      %1498 = vmatpush2.msra.mxu0 0.0
      %1499 = vmatprep.subr.mxu0 0.0
      %1500 = vmatpush2.msra.mxu0 0.0
      %1501 = vmatprep.mubr.f32.mxu0 0.0
      %1502 = vmatmul.mubr.f32.gmra.mxu0 %v1432
      %v1503 = vpop.f32.mrf.mxu0
      %v1504 = vadd.f32 0.0, %v1503
      %v1505 = vpop.f32.mrf.mxu0
      %1506 = vmatprep.mubr.f32.mxu0 0.0
      %1507 = vmatmul.mubr.f32.gmra.mxu0 %v1435
      %v1508 = vpop.f32.mrf.mxu0
      %v1509 = vadd.f32 0.0, %v1508
      %v1510 = vpop.f32.mrf.mxu0
      %1511 = vdwg.mxu0
      %v1512 = vrcp.pop %v1421
      %v1513 = vrcp.pop %v1424
      %v1514 = vmul.f32 %v1504, %v1512
      %v1515 = vmul.f32 %v1509, %v1513
      %s1516 = scalar_lea.vmem %s466, 48
      %v1517 = vld [vmem:[%s1516] sm:$0xff]
      %v1518 = vld [vmem:[%s1516 + $0x8] sm:$0xff]
      %1519 = vrot.lane.b32.xlu0 %v901, 104
      %v1520 = vpop.permute.xlu0 %1519
      %1521 = vrot.lane.b32.xlu0 %v906, 104
      %v1522 = vpop.permute.xlu0 %1521
      %1523 = vrot.lane.b32.xlu0 %v901, 72
      %v1524 = vpop.permute.xlu0 %1523
      %1525 = vrot.lane.b32.xlu0 %v906, 72
      %v1526 = vpop.permute.xlu0 %1525
      %v1527 = vsel %vm917, %v1520, 0
      %v1529 = vsel %vm917, %v1522, 0
      %v1531 = vsel %vm917, %v1524, 0
      %v1533 = vsel %vm917, %v1526, 0
      %1535 = vmatprep.subr.mxu0 0.0
      %1536 = vmatpush1.xpose.msra.mxu0 0.0
      %1537 = vmatprep.subr.mxu0 0.0
      %1538 = vmatpush1.xpose.msra.mxu0 0.0
      %1539 = vmatprep.subr.mxu0 0.0
      %1540 = vmatpush1.xpose.msra.mxu0 0.0
      %1541 = vmatprep.subr.mxu0 0.0
      %1542 = vmatpush1.xpose.msra.mxu0 0.0
      %1543 = vmatprep.subr.mxu0 0.0
      %1544 = vmatpush1.xpose.msra.mxu0 0.0
      %1545 = vmatprep.subr.mxu0 0.0
      %1546 = vmatpush1.xpose.msra.mxu0 0.0
      %1547 = vmatprep.subr.mxu0 0.0
      %1548 = vmatpush1.xpose.msra.mxu0 0.0
      %1549 = vmatprep.subr.mxu0 0.0
      %1550 = vmatpush1.xpose.msra.mxu0 0.0
      %1551 = vmatprep.subr.mxu0 0.0
      %1552 = vmatpush1.xpose.msra.mxu0 0.0
      %1553 = vmatprep.subr.mxu0 0.0
      %1554 = vmatpush1.xpose.msra.mxu0 0.0
      %1555 = vmatprep.subr.mxu0 0.0
      %1556 = vmatpush1.xpose.msra.mxu0 0.0
      %1557 = vmatprep.subr.mxu0 0.0
      %1558 = vmatpush1.xpose.msra.mxu0 0.0
      %1559 = vmatprep.subr.mxu0 0.0
      %1560 = vmatpush1.xpose.msra.mxu0 0.0
      %1561 = vmatprep.subr.mxu0 0.0
      %1562 = vmatpush1.xpose.msra.mxu0 0.0
      %1563 = vmatprep.subr.mxu0 0.0
      %1564 = vmatpush1.xpose.msra.mxu0 %v1533
      %1565 = vmatprep.subr.mxu0 0.0
      %1566 = vmatpush1.xpose.msra.mxu0 %v1531
      %1567 = vmatprep.subr.mxu0 0.0
      %1568 = vmatpush2.xpose.msra.mxu0 0.0
      %1569 = vmatprep.subr.mxu0 0.0
      %1570 = vmatpush2.xpose.msra.mxu0 0.0
      %1571 = vmatprep.subr.mxu0 0.0
      %1572 = vmatpush2.xpose.msra.mxu0 0.0
      %1573 = vmatprep.subr.mxu0 0.0
      %1574 = vmatpush2.xpose.msra.mxu0 0.0
      %1575 = vmatprep.subr.mxu0 0.0
      %1576 = vmatpush2.xpose.msra.mxu0 0.0
      %1577 = vmatprep.subr.mxu0 0.0
      %1578 = vmatpush2.xpose.msra.mxu0 0.0
      %1579 = vmatprep.subr.mxu0 0.0
      %1580 = vmatpush2.xpose.msra.mxu0 0.0
      %1581 = vmatprep.subr.mxu0 0.0
      %1582 = vmatpush2.xpose.msra.mxu0 0.0
      %1583 = vmatprep.subr.mxu0 0.0
      %1584 = vmatpush2.xpose.msra.mxu0 0.0
      %1585 = vmatprep.subr.mxu0 0.0
      %1586 = vmatpush2.xpose.msra.mxu0 0.0
      %1587 = vmatprep.subr.mxu0 0.0
      %1588 = vmatpush2.xpose.msra.mxu0 0.0
      %1589 = vmatprep.subr.mxu0 0.0
      %1590 = vmatpush2.xpose.msra.mxu0 0.0
      %1591 = vmatprep.subr.mxu0 0.0
      %1592 = vmatpush2.xpose.msra.mxu0 0.0
      %1593 = vmatprep.subr.mxu0 0.0
      %1594 = vmatpush2.xpose.msra.mxu0 0.0
      %1595 = vmatprep.subr.mxu0 0.0
      %1596 = vmatpush2.xpose.msra.mxu0 0.0
      %1597 = vmatprep.subr.mxu0 0.0
      %1598 = vmatpush2.xpose.msra.mxu0 0.0
      %1599 = vmatprep.mubr.f32.mxu0 0.0
      %1600 = vmatmul.mubr.f32.gmra.mxu0 %v1527
      %v1601 = vpop.f32.mrf.mxu0
      %v1602 = vadd.f32 %v1517, %v1601
      %v1603 = vpop.f32.mrf.mxu0
      %1604 = vmatprep.mubr.f32.mxu0 0.0
      %1605 = vmatmul.mubr.f32.gmra.mxu0 %v1529
      %v1606 = vpop.f32.mrf.mxu0
      %v1607 = vadd.f32 %v1518, %v1606
      %v1608 = vpop.f32.mrf.mxu0
      %1609 = vdwg.mxu0
      %v1610 = vsel %vm476, %v1602, -inf
      %1611 = vmax.xlane.f32.xlu0 %v1610
      %v1612 = vpop.xlane.xlu0 %1611
      %v1613 = vsel %vm476, %v1607, -inf
      %1614 = vmax.xlane.f32.xlu0 %v1613
      %v1615 = vpop.xlane.xlu0 %1614
      %v1616 = vsub.f32 %v1602, %v1612
      %v1617 = vsub.f32 %v1607, %v1615
      %v1618 = vmul.f32 %v1616, 1.442695
      %v1619 = vpow.pop %v1618
      %v1620 = vmul.f32 %v1617, 1.442695
      %v1621 = vpow.pop %v1620
      %v1622 = vsel %vm476, %v1619, 0.0
      %1623 = vadd.xlane.f32.xlu0 %v1622
      %v1624 = vpop.xlane.xlu0 %1623
      %v1625 = vsel %vm476, %v1621, 0.0
      %1626 = vadd.xlane.f32.xlu0 %v1625
      %v1627 = vpop.xlane.xlu0 %1626
      %1628 = vrot.lane.b32.xlu0 %v901, 40
      %v1629 = vpop.permute.xlu0 %1628
      %1630 = vrot.lane.b32.xlu0 %v906, 40
      %v1631 = vpop.permute.xlu0 %1630
      %v1635 = vsel %vm476, %v1619, 0
      %v1638 = vsel %vm476, %v1621, 0
      %1640 = vmatprep.subr.mxu0 0.0
      %1641 = vmatpush1.msra.mxu0 0.0
      %1642 = vmatprep.subr.mxu0 0.0
      %1643 = vmatpush1.msra.mxu0 0.0
      %1644 = vmatprep.subr.mxu0 0.0
      %1645 = vmatpush1.msra.mxu0 0.0
      %1646 = vmatprep.subr.mxu0 0.0
      %1647 = vmatpush1.msra.mxu0 0.0
      %1648 = vmatprep.subr.mxu0 0.0
      %1649 = vmatpush1.msra.mxu0 0.0
      %1650 = vmatprep.subr.mxu0 0.0
      %1651 = vmatpush1.msra.mxu0 0.0
      %1652 = vmatprep.subr.mxu0 0.0
      %1653 = vmatpush1.msra.mxu0 0.0
      %1654 = vmatprep.subr.mxu0 0.0
      %1655 = vmatpush1.msra.mxu0 0.0
      %1656 = vmatprep.subr.mxu0 0.0
      %1657 = vmatpush1.msra.mxu0 0.0
      %1658 = vmatprep.subr.mxu0 0.0
      %1659 = vmatpush1.msra.mxu0 0.0
      %1660 = vmatprep.subr.mxu0 0.0
      %1661 = vmatpush1.msra.mxu0 0.0
      %1662 = vmatprep.subr.mxu0 0.0
      %1663 = vmatpush1.msra.mxu0 0.0
      %1664 = vmatprep.subr.mxu0 0.0
      %1665 = vmatpush1.msra.mxu0 0.0
      %1666 = vmatprep.subr.mxu0 0.0
      %1667 = vmatpush1.msra.mxu0 0.0
      %1668 = vmatprep.subr.mxu0 0.0
      %1669 = vmatpush1.msra.mxu0 %v1631
      %1670 = vmatprep.subr.mxu0 0.0
      %1671 = vmatpush1.msra.mxu0 %v1629
      %1672 = vmatprep.subr.mxu0 0.0
      %1673 = vmatpush2.msra.mxu0 0.0
      %1674 = vmatprep.subr.mxu0 0.0
      %1675 = vmatpush2.msra.mxu0 0.0
      %1676 = vmatprep.subr.mxu0 0.0
      %1677 = vmatpush2.msra.mxu0 0.0
      %1678 = vmatprep.subr.mxu0 0.0
      %1679 = vmatpush2.msra.mxu0 0.0
      %1680 = vmatprep.subr.mxu0 0.0
      %1681 = vmatpush2.msra.mxu0 0.0
      %1682 = vmatprep.subr.mxu0 0.0
      %1683 = vmatpush2.msra.mxu0 0.0
      %1684 = vmatprep.subr.mxu0 0.0
      %1685 = vmatpush2.msra.mxu0 0.0
      %1686 = vmatprep.subr.mxu0 0.0
      %1687 = vmatpush2.msra.mxu0 0.0
      %1688 = vmatprep.subr.mxu0 0.0
      %1689 = vmatpush2.msra.mxu0 0.0
      %1690 = vmatprep.subr.mxu0 0.0
      %1691 = vmatpush2.msra.mxu0 0.0
      %1692 = vmatprep.subr.mxu0 0.0
      %1693 = vmatpush2.msra.mxu0 0.0
      %1694 = vmatprep.subr.mxu0 0.0
      %1695 = vmatpush2.msra.mxu0 0.0
      %1696 = vmatprep.subr.mxu0 0.0
      %1697 = vmatpush2.msra.mxu0 0.0
      %1698 = vmatprep.subr.mxu0 0.0
      %1699 = vmatpush2.msra.mxu0 0.0
      %1700 = vmatprep.subr.mxu0 0.0
      %1701 = vmatpush2.msra.mxu0 0.0
      %1702 = vmatprep.subr.mxu0 0.0
      %1703 = vmatpush2.msra.mxu0 0.0
      %1704 = vmatprep.mubr.f32.mxu0 0.0
      %1705 = vmatmul.mubr.f32.gmra.mxu0 %v1635
      %v1706 = vpop.f32.mrf.mxu0
      %v1707 = vadd.f32 0.0, %v1706
      %v1708 = vpop.f32.mrf.mxu0
      %1709 = vmatprep.mubr.f32.mxu0 0.0
      %1710 = vmatmul.mubr.f32.gmra.mxu0 %v1638
      %v1711 = vpop.f32.mrf.mxu0
      %v1712 = vadd.f32 0.0, %v1711
      %v1713 = vpop.f32.mrf.mxu0
      %1714 = vdwg.mxu0
      %v1715 = vrcp.pop %v1624
      %v1716 = vrcp.pop %v1627
      %v1717 = vmul.f32 %v1707, %v1715
      %v1718 = vmul.f32 %v1712, %v1716
      %1721 = vrot.lane.b32.xlu0 %v1311, 8
      %v1722 = vpop.permute.xlu0 %1721
      %1723 = vrot.lane.b32.xlu0 %v1312, 8
      %v1724 = vpop.permute.xlu0 %1723
      %1729 = vrot.lane.b32.xlu0 %v1514, 16
      %v1730 = vpop.permute.xlu0 %1729
      %1731 = vrot.lane.b32.xlu0 %v1515, 16
      %v1732 = vpop.permute.xlu0 %1731
      %1737 = vrot.lane.b32.xlu0 %v1717, 24
      %v1738 = vpop.permute.xlu0 %1737
      %1739 = vrot.lane.b32.xlu0 %v1718, 24
      %v1740 = vpop.permute.xlu0 %1739
      %v1743 = vsel %vm917, %v1108, %v1722
      %v1744 = vsel %vm917, %v1109, %v1724
      %v1745 = vsel %vm476, %v1743, %v1730
      %v1746 = vsel %vm476, %v1744, %v1732
      %vm1747 = vcmask 195584
      %v1748 = vsel %vm1747, %v1745, %v1738
      %v1749 = vsel %vm1747, %v1746, %v1740
      %v1750 = vld [vmem:[%s7] sm:$0xff]
      %v1751 = vld [vmem:[%s7 + $0x8] sm:$0xff]
      %v1752 = vld [vmem:[%s7 + $0x10] sm:$0xff]
      %v1753 = vld [vmem:[%s7 + $0x18] sm:$0xff]
      %v1755 = vsel %vm800, %v1748, 0
      %v1758 = vsel %vm800, %v1749, 0
      %1760 = vmatprep.subr.mxu0 0.0
      %1761 = vmatpush1.msra.mxu0 0.0
      %1762 = vmatprep.subr.mxu0 0.0
      %1763 = vmatpush1.msra.mxu0 0.0
      %1764 = vmatprep.subr.mxu0 0.0
      %1765 = vmatpush1.msra.mxu0 0.0
      %1766 = vmatprep.subr.mxu0 0.0
      %1767 = vmatpush1.msra.mxu0 0.0
      %1768 = vmatprep.subr.mxu0 0.0
      %1769 = vmatpush1.msra.mxu0 0.0
      %1770 = vmatprep.subr.mxu0 0.0
      %1771 = vmatpush1.msra.mxu0 0.0
      %1772 = vmatprep.subr.mxu0 0.0
      %1773 = vmatpush1.msra.mxu0 0.0
      %1774 = vmatprep.subr.mxu0 0.0
      %1775 = vmatpush1.msra.mxu0 0.0
      %1776 = vmatprep.subr.mxu0 0.0
      %1777 = vmatpush1.msra.mxu0 0.0
      %1778 = vmatprep.subr.mxu0 0.0
      %1779 = vmatpush1.msra.mxu0 0.0
      %1780 = vmatprep.subr.mxu0 0.0
      %1781 = vmatpush1.msra.mxu0 0.0
      %1782 = vmatprep.subr.mxu0 0.0
      %1783 = vmatpush1.msra.mxu0 0.0
      %1784 = vmatprep.subr.mxu0 0.0
      %1785 = vmatpush1.msra.mxu0 %v1753
      %1786 = vmatprep.subr.mxu0 0.0
      %1787 = vmatpush1.msra.mxu0 %v1752
      %1788 = vmatprep.subr.mxu0 0.0
      %1789 = vmatpush1.msra.mxu0 %v1751
      %1790 = vmatprep.subr.mxu0 0.0
      %1791 = vmatpush1.msra.mxu0 %v1750
      %1792 = vmatprep.subr.mxu0 0.0
      %1793 = vmatpush2.msra.mxu0 0.0
      %1794 = vmatprep.subr.mxu0 0.0
      %1795 = vmatpush2.msra.mxu0 0.0
      %1796 = vmatprep.subr.mxu0 0.0
      %1797 = vmatpush2.msra.mxu0 0.0
      %1798 = vmatprep.subr.mxu0 0.0
      %1799 = vmatpush2.msra.mxu0 0.0
      %1800 = vmatprep.subr.mxu0 0.0
      %1801 = vmatpush2.msra.mxu0 0.0
      %1802 = vmatprep.subr.mxu0 0.0
      %1803 = vmatpush2.msra.mxu0 0.0
      %1804 = vmatprep.subr.mxu0 0.0
      %1805 = vmatpush2.msra.mxu0 0.0
      %1806 = vmatprep.subr.mxu0 0.0
      %1807 = vmatpush2.msra.mxu0 0.0
      %1808 = vmatprep.subr.mxu0 0.0
      %1809 = vmatpush2.msra.mxu0 0.0
      %1810 = vmatprep.subr.mxu0 0.0
      %1811 = vmatpush2.msra.mxu0 0.0
      %1812 = vmatprep.subr.mxu0 0.0
      %1813 = vmatpush2.msra.mxu0 0.0
      %1814 = vmatprep.subr.mxu0 0.0
      %1815 = vmatpush2.msra.mxu0 0.0
      %1816 = vmatprep.subr.mxu0 0.0
      %1817 = vmatpush2.msra.mxu0 0.0
      %1818 = vmatprep.subr.mxu0 0.0
      %1819 = vmatpush2.msra.mxu0 0.0
      %1820 = vmatprep.subr.mxu0 0.0
      %1821 = vmatpush2.msra.mxu0 0.0
      %1822 = vmatprep.subr.mxu0 0.0
      %1823 = vmatpush2.msra.mxu0 0.0
      %1824 = vmatprep.mubr.f32.mxu0 0.0
      %1825 = vmatmul.mubr.f32.gmra.mxu0 %v1755
      %v1826 = vpop.f32.mrf.mxu0
      %v1827 = vadd.f32 0.0, %v1826
      %v1828 = vpop.f32.mrf.mxu0
      %1829 = vmatprep.mubr.f32.mxu0 0.0
      %1830 = vmatmul.mubr.f32.gmra.mxu0 %v1758
      %v1831 = vpop.f32.mrf.mxu0
      %v1832 = vadd.f32 0.0, %v1831
      %v1833 = vpop.f32.mrf.mxu0
      %1834 = vdwg.mxu0
      %v1835 = vadd.f32 %v795, %v1827
      %v1836 = vadd.f32 %v796, %v1832
      %v1837 = vld [vmem:[%s8] sm:$0x1]
      %v1838 = vmul.f32 %v1835, %v1835
      %v1839 = vmul.f32 %v1836, %v1836
      %v1840 = vsel %vm800, %v1838, 0.0
      %1841 = vadd.xlane.f32.xlu0 %v1840
      %v1842 = vpop.xlane.xlu0 %1841
      %v1843 = vsel %vm800, %v1839, 0.0
      %1844 = vadd.xlane.f32.xlu0 %v1843
      %v1845 = vpop.xlane.xlu0 %1844
      %v1846 = vmul.f32 %v1842, %v807
      %v1847 = vmul.f32 %v1845, %v807
      %v1848 = vadd.f32 %v1846, 1e-06
      %v1849 = vadd.f32 %v1847, 1e-06
      %v1850 = vrsqrt.pop %v1848
      %v1851 = vrsqrt.pop %v1849
      %v1852 = vmul.f32 %v1835, %v1850
      %v1853 = vmul.f32 %v1836, %v1851
      %v1855 = vlaneseq
      %v1856 = vshrl.u32 %v1855, 7
      %v1857 = vsub.s32 0, %v1856
      %v1858 = vrot.slane %v1837, %v1857
      %v1860 = vmul.f32 %v1852, %v1858
      %v1861 = vmul.f32 %v1853, %v1858
      %v1862 = vld [vmem:[%s9] sm:$0xff]
      %v1863 = vld [vmem:[%s9 + $0x8] sm:$0xff]
      %v1864 = vld [vmem:[%s9 + $0x10] sm:$0xff]
      %v1865 = vld [vmem:[%s9 + $0x18] sm:$0xff]
      %v1867 = vsel %vm800, %v1860, 0
      %v1870 = vsel %vm800, %v1861, 0
      %1872 = vmatprep.subr.mxu0 0.0
      %1873 = vmatpush1.msra.mxu0 0.0
      %1874 = vmatprep.subr.mxu0 0.0
      %1875 = vmatpush1.msra.mxu0 0.0
      %1876 = vmatprep.subr.mxu0 0.0
      %1877 = vmatpush1.msra.mxu0 0.0
      %1878 = vmatprep.subr.mxu0 0.0
      %1879 = vmatpush1.msra.mxu0 0.0
      %1880 = vmatprep.subr.mxu0 0.0
      %1881 = vmatpush1.msra.mxu0 0.0
      %1882 = vmatprep.subr.mxu0 0.0
      %1883 = vmatpush1.msra.mxu0 0.0
      %1884 = vmatprep.subr.mxu0 0.0
      %1885 = vmatpush1.msra.mxu0 0.0
      %1886 = vmatprep.subr.mxu0 0.0
      %1887 = vmatpush1.msra.mxu0 0.0
      %1888 = vmatprep.subr.mxu0 0.0
      %1889 = vmatpush1.msra.mxu0 0.0
      %1890 = vmatprep.subr.mxu0 0.0
      %1891 = vmatpush1.msra.mxu0 0.0
      %1892 = vmatprep.subr.mxu0 0.0
      %1893 = vmatpush1.msra.mxu0 0.0
      %1894 = vmatprep.subr.mxu0 0.0
      %1895 = vmatpush1.msra.mxu0 0.0
      %1896 = vmatprep.subr.mxu0 0.0
      %1897 = vmatpush1.msra.mxu0 %v1865
      %1898 = vmatprep.subr.mxu0 0.0
      %1899 = vmatpush1.msra.mxu0 %v1864
      %1900 = vmatprep.subr.mxu0 0.0
      %1901 = vmatpush1.msra.mxu0 %v1863
      %1902 = vmatprep.subr.mxu0 0.0
      %1903 = vmatpush1.msra.mxu0 %v1862
      %1904 = vmatprep.subr.mxu0 0.0
      %1905 = vmatpush2.msra.mxu0 0.0
      %1906 = vmatprep.subr.mxu0 0.0
      %1907 = vmatpush2.msra.mxu0 0.0
      %1908 = vmatprep.subr.mxu0 0.0
      %1909 = vmatpush2.msra.mxu0 0.0
      %1910 = vmatprep.subr.mxu0 0.0
      %1911 = vmatpush2.msra.mxu0 0.0
      %1912 = vmatprep.subr.mxu0 0.0
      %1913 = vmatpush2.msra.mxu0 0.0
      %1914 = vmatprep.subr.mxu0 0.0
      %1915 = vmatpush2.msra.mxu0 0.0
      %1916 = vmatprep.subr.mxu0 0.0
      %1917 = vmatpush2.msra.mxu0 0.0
      %1918 = vmatprep.subr.mxu0 0.0
      %1919 = vmatpush2.msra.mxu0 0.0
      %1920 = vmatprep.subr.mxu0 0.0
      %1921 = vmatpush2.msra.mxu0 0.0
      %1922 = vmatprep.subr.mxu0 0.0
      %1923 = vmatpush2.msra.mxu0 0.0
      %1924 = vmatprep.subr.mxu0 0.0
      %1925 = vmatpush2.msra.mxu0 0.0
      %1926 = vmatprep.subr.mxu0 0.0
      %1927 = vmatpush2.msra.mxu0 0.0
      %1928 = vmatprep.subr.mxu0 0.0
      %1929 = vmatpush2.msra.mxu0 0.0
      %1930 = vmatprep.subr.mxu0 0.0
      %1931 = vmatpush2.msra.mxu0 0.0
      %1932 = vmatprep.subr.mxu0 0.0
      %1933 = vmatpush2.msra.mxu0 0.0
      %1934 = vmatprep.subr.mxu0 0.0
      %1935 = vmatpush2.msra.mxu0 0.0
      %1936 = vmatprep.mubr.f32.mxu0 0.0
      %1937 = vmatmul.mubr.f32.gmra.mxu0 %v1867
      %v1938 = vpop.f32.mrf.mxu0
      %v1939 = vadd.f32 0.0, %v1938
      %v1940 = vpop.f32.mrf.mxu0
      %1941 = vmatprep.mubr.f32.mxu0 0.0
      %1942 = vmatmul.mubr.f32.gmra.mxu0 %v1870
      %v1943 = vpop.f32.mrf.mxu0
      %v1944 = vadd.f32 0.0, %v1943
      %v1945 = vpop.f32.mrf.mxu0
      %1946 = vdwg.mxu0
      %v1947 = vmax.f32 %v1939, 0.0
      %v1948 = vmax.f32 %v1944, 0.0
      %v1949 = vld [vmem:[%s10] sm:$0xff]
      %v1950 = vld [vmem:[%s10 + $0x8] sm:$0xff]
      %v1951 = vld [vmem:[%s10 + $0x10] sm:$0xff]
      %v1952 = vld [vmem:[%s10 + $0x18] sm:$0xff]
      %v1953 = vld [vmem:[%s10 + $0x20] sm:$0xff]
      %v1954 = vld [vmem:[%s10 + $0x28] sm:$0xff]
      %v1955 = vld [vmem:[%s10 + $0x30] sm:$0xff]
      %v1956 = vld [vmem:[%s10 + $0x38] sm:$0xff]
      %vm1957 = vcmask 523264
      %v1959 = vsel %vm1957, %v1947, 0
      %v1962 = vsel %vm1957, %v1948, 0
      %1964 = vmatprep.subr.mxu0 0.0
      %1965 = vmatpush1.msra.mxu0 0.0
      %1966 = vmatprep.subr.mxu0 0.0
      %1967 = vmatpush1.msra.mxu0 0.0
      %1968 = vmatprep.subr.mxu0 0.0
      %1969 = vmatpush1.msra.mxu0 0.0
      %1970 = vmatprep.subr.mxu0 0.0
      %1971 = vmatpush1.msra.mxu0 0.0
      %1972 = vmatprep.subr.mxu0 0.0
      %1973 = vmatpush1.msra.mxu0 0.0
      %1974 = vmatprep.subr.mxu0 0.0
      %1975 = vmatpush1.msra.mxu0 0.0
      %1976 = vmatprep.subr.mxu0 0.0
      %1977 = vmatpush1.msra.mxu0 0.0
      %1978 = vmatprep.subr.mxu0 0.0
      %1979 = vmatpush1.msra.mxu0 0.0
      %1980 = vmatprep.subr.mxu0 0.0
      %1981 = vmatpush1.msra.mxu0 %v1956
      %1982 = vmatprep.subr.mxu0 0.0
      %1983 = vmatpush1.msra.mxu0 %v1955
      %1984 = vmatprep.subr.mxu0 0.0
      %1985 = vmatpush1.msra.mxu0 %v1954
      %1986 = vmatprep.subr.mxu0 0.0
      %1987 = vmatpush1.msra.mxu0 %v1953
      %1988 = vmatprep.subr.mxu0 0.0
      %1989 = vmatpush1.msra.mxu0 %v1952
      %1990 = vmatprep.subr.mxu0 0.0
      %1991 = vmatpush1.msra.mxu0 %v1951
      %1992 = vmatprep.subr.mxu0 0.0
      %1993 = vmatpush1.msra.mxu0 %v1950
      %1994 = vmatprep.subr.mxu0 0.0
      %1995 = vmatpush1.msra.mxu0 %v1949
      %1996 = vmatprep.subr.mxu0 0.0
      %1997 = vmatpush2.msra.mxu0 0.0
      %1998 = vmatprep.subr.mxu0 0.0
      %1999 = vmatpush2.msra.mxu0 0.0
      %2000 = vmatprep.subr.mxu0 0.0
      %2001 = vmatpush2.msra.mxu0 0.0
      %2002 = vmatprep.subr.mxu0 0.0
      %2003 = vmatpush2.msra.mxu0 0.0
      %2004 = vmatprep.subr.mxu0 0.0
      %2005 = vmatpush2.msra.mxu0 0.0
      %2006 = vmatprep.subr.mxu0 0.0
      %2007 = vmatpush2.msra.mxu0 0.0
      %2008 = vmatprep.subr.mxu0 0.0
      %2009 = vmatpush2.msra.mxu0 0.0
      %2010 = vmatprep.subr.mxu0 0.0
      %2011 = vmatpush2.msra.mxu0 0.0
      %2012 = vmatprep.subr.mxu0 0.0
      %2013 = vmatpush2.msra.mxu0 0.0
      %2014 = vmatprep.subr.mxu0 0.0
      %2015 = vmatpush2.msra.mxu0 0.0
      %2016 = vmatprep.subr.mxu0 0.0
      %2017 = vmatpush2.msra.mxu0 0.0
      %2018 = vmatprep.subr.mxu0 0.0
      %2019 = vmatpush2.msra.mxu0 0.0
      %2020 = vmatprep.subr.mxu0 0.0
      %2021 = vmatpush2.msra.mxu0 0.0
      %2022 = vmatprep.subr.mxu0 0.0
      %2023 = vmatpush2.msra.mxu0 0.0
      %2024 = vmatprep.subr.mxu0 0.0
      %2025 = vmatpush2.msra.mxu0 0.0
      %2026 = vmatprep.subr.mxu0 0.0
      %2027 = vmatpush2.msra.mxu0 0.0
      %2028 = vmatprep.mubr.f32.mxu0 0.0
      %2029 = vmatmul.mubr.f32.gmra.mxu0 %v1959
      %v2030 = vpop.f32.mrf.mxu0
      %v2031 = vadd.f32 0.0, %v2030
      %v2032 = vpop.f32.mrf.mxu0
      %2033 = vmatprep.mubr.f32.mxu0 0.0
      %2034 = vmatmul.mubr.f32.gmra.mxu0 %v1962
      %v2035 = vpop.f32.mrf.mxu0
      %v2036 = vadd.f32 0.0, %v2035
      %v2037 = vpop.f32.mrf.mxu0
      %2038 = vdwg.mxu0
      %v2039 = vadd.f32 %v1835, %v2031
      %v2040 = vadd.f32 %v1836, %v2036
      %s2041 = scalar_lea.vmem %s5, 1
      %v2042 = vld [vmem:[%s2041] sm:$0x1]
      %v2043 = vmul.f32 %v2039, %v2039
      %v2044 = vmul.f32 %v2040, %v2040
      %v2045 = vsel %vm800, %v2043, 0.0
      %2046 = vadd.xlane.f32.xlu0 %v2045
      %v2047 = vpop.xlane.xlu0 %2046
      %v2048 = vsel %vm800, %v2044, 0.0
      %2049 = vadd.xlane.f32.xlu0 %v2048
      %v2050 = vpop.xlane.xlu0 %2049
      %v2051 = vmul.f32 %v2047, %v807
      %v2052 = vmul.f32 %v2050, %v807
      %v2053 = vadd.f32 %v2051, 1e-06
      %v2054 = vadd.f32 %v2052, 1e-06
      %v2055 = vrsqrt.pop %v2053
      %v2056 = vrsqrt.pop %v2054
      %v2057 = vmul.f32 %v2039, %v2055
      %v2058 = vmul.f32 %v2040, %v2056
      %v2060 = vlaneseq
      %v2061 = vshrl.u32 %v2060, 7
      %v2062 = vsub.s32 0, %v2061
      %v2063 = vrot.slane %v2042, %v2062
      %v2065 = vmul.f32 %v2057, %v2063
      %v2066 = vmul.f32 %v2058, %v2063
      %s2067 = scalar_lea.vmem %s6, 32
      %v2068 = vld [vmem:[%s2067] sm:$0xff]
      %v2069 = vld [vmem:[%s2067 + $0x8] sm:$0xff]
      %v2070 = vld [vmem:[%s2067 + $0x10] sm:$0xff]
      %v2071 = vld [vmem:[%s2067 + $0x18] sm:$0xff]
      %v2073 = vsel %vm800, %v2065, 0
      %v2076 = vsel %vm800, %v2066, 0
      %2078 = vmatprep.subr.mxu0 0.0
      %2079 = vmatpush1.msra.mxu0 0.0
      %2080 = vmatprep.subr.mxu0 0.0
      %2081 = vmatpush1.msra.mxu0 0.0
      %2082 = vmatprep.subr.mxu0 0.0
      %2083 = vmatpush1.msra.mxu0 0.0
      %2084 = vmatprep.subr.mxu0 0.0
      %2085 = vmatpush1.msra.mxu0 0.0
      %2086 = vmatprep.subr.mxu0 0.0
      %2087 = vmatpush1.msra.mxu0 0.0
      %2088 = vmatprep.subr.mxu0 0.0
      %2089 = vmatpush1.msra.mxu0 0.0
      %2090 = vmatprep.subr.mxu0 0.0
      %2091 = vmatpush1.msra.mxu0 0.0
      %2092 = vmatprep.subr.mxu0 0.0
      %2093 = vmatpush1.msra.mxu0 0.0
      %2094 = vmatprep.subr.mxu0 0.0
      %2095 = vmatpush1.msra.mxu0 0.0
      %2096 = vmatprep.subr.mxu0 0.0
      %2097 = vmatpush1.msra.mxu0 0.0
      %2098 = vmatprep.subr.mxu0 0.0
      %2099 = vmatpush1.msra.mxu0 0.0
      %2100 = vmatprep.subr.mxu0 0.0
      %2101 = vmatpush1.msra.mxu0 0.0
      %2102 = vmatprep.subr.mxu0 0.0
      %2103 = vmatpush1.msra.mxu0 %v2071
      %2104 = vmatprep.subr.mxu0 0.0
      %2105 = vmatpush1.msra.mxu0 %v2070
      %2106 = vmatprep.subr.mxu0 0.0
      %2107 = vmatpush1.msra.mxu0 %v2069
      %2108 = vmatprep.subr.mxu0 0.0
      %2109 = vmatpush1.msra.mxu0 %v2068
      %2110 = vmatprep.subr.mxu0 0.0
      %2111 = vmatpush2.msra.mxu0 0.0
      %2112 = vmatprep.subr.mxu0 0.0
      %2113 = vmatpush2.msra.mxu0 0.0
      %2114 = vmatprep.subr.mxu0 0.0
      %2115 = vmatpush2.msra.mxu0 0.0
      %2116 = vmatprep.subr.mxu0 0.0
      %2117 = vmatpush2.msra.mxu0 0.0
      %2118 = vmatprep.subr.mxu0 0.0
      %2119 = vmatpush2.msra.mxu0 0.0
      %2120 = vmatprep.subr.mxu0 0.0
      %2121 = vmatpush2.msra.mxu0 0.0
      %2122 = vmatprep.subr.mxu0 0.0
      %2123 = vmatpush2.msra.mxu0 0.0
      %2124 = vmatprep.subr.mxu0 0.0
      %2125 = vmatpush2.msra.mxu0 0.0
      %2126 = vmatprep.subr.mxu0 0.0
      %2127 = vmatpush2.msra.mxu0 0.0
      %2128 = vmatprep.subr.mxu0 0.0
      %2129 = vmatpush2.msra.mxu0 0.0
      %2130 = vmatprep.subr.mxu0 0.0
      %2131 = vmatpush2.msra.mxu0 0.0
      %2132 = vmatprep.subr.mxu0 0.0
      %2133 = vmatpush2.msra.mxu0 0.0
      %2134 = vmatprep.subr.mxu0 0.0
      %2135 = vmatpush2.msra.mxu0 0.0
      %2136 = vmatprep.subr.mxu0 0.0
      %2137 = vmatpush2.msra.mxu0 0.0
      %2138 = vmatprep.subr.mxu0 0.0
      %2139 = vmatpush2.msra.mxu0 0.0
      %2140 = vmatprep.subr.mxu0 0.0
      %2141 = vmatpush2.msra.mxu0 0.0
      %2142 = vmatprep.mubr.f32.mxu0 0.0
      %2143 = vmatmul.mubr.f32.gmra.mxu0 %v2073
      %v2144 = vpop.f32.mrf.mxu0
      %v2145 = vadd.f32 0.0, %v2144
      %v2146 = vpop.f32.mrf.mxu0
      %2147 = vmatprep.mubr.f32.mxu0 0.0
      %2148 = vmatmul.mubr.f32.gmra.mxu0 %v2076
      %v2149 = vpop.f32.mrf.mxu0
      %v2150 = vadd.f32 0.0, %v2149
      %v2151 = vpop.f32.mrf.mxu0
      %2152 = vdwg.mxu0
      %2155 = vrot.lane.b32.xlu0 %v2145, 96
      %v2156 = vpop.permute.xlu0 %2155
      %2157 = vrot.lane.b32.xlu0 %v2150, 96
      %v2158 = vpop.permute.xlu0 %2157
      %v2159 = vsel %vm917, %v2145, 0
      %v2161 = vsel %vm917, %v2150, 0
      %v2163 = vsel %vm917, %v2156, 0
      %v2165 = vsel %vm917, %v2158, 0
      %2167 = vmatprep.subr.mxu0 0.0
      %2168 = vmatpush1.xpose.msra.mxu0 0.0
      %2169 = vmatprep.subr.mxu0 0.0
      %2170 = vmatpush1.xpose.msra.mxu0 0.0
      %2171 = vmatprep.subr.mxu0 0.0
      %2172 = vmatpush1.xpose.msra.mxu0 0.0
      %2173 = vmatprep.subr.mxu0 0.0
      %2174 = vmatpush1.xpose.msra.mxu0 0.0
      %2175 = vmatprep.subr.mxu0 0.0
      %2176 = vmatpush1.xpose.msra.mxu0 0.0
      %2177 = vmatprep.subr.mxu0 0.0
      %2178 = vmatpush1.xpose.msra.mxu0 0.0
      %2179 = vmatprep.subr.mxu0 0.0
      %2180 = vmatpush1.xpose.msra.mxu0 0.0
      %2181 = vmatprep.subr.mxu0 0.0
      %2182 = vmatpush1.xpose.msra.mxu0 0.0
      %2183 = vmatprep.subr.mxu0 0.0
      %2184 = vmatpush1.xpose.msra.mxu0 0.0
      %2185 = vmatprep.subr.mxu0 0.0
      %2186 = vmatpush1.xpose.msra.mxu0 0.0
      %2187 = vmatprep.subr.mxu0 0.0
      %2188 = vmatpush1.xpose.msra.mxu0 0.0
      %2189 = vmatprep.subr.mxu0 0.0
      %2190 = vmatpush1.xpose.msra.mxu0 0.0
      %2191 = vmatprep.subr.mxu0 0.0
      %2192 = vmatpush1.xpose.msra.mxu0 0.0
      %2193 = vmatprep.subr.mxu0 0.0
      %2194 = vmatpush1.xpose.msra.mxu0 0.0
      %2195 = vmatprep.subr.mxu0 0.0
      %2196 = vmatpush1.xpose.msra.mxu0 %v2165
      %2197 = vmatprep.subr.mxu0 0.0
      %2198 = vmatpush1.xpose.msra.mxu0 %v2163
      %2199 = vmatprep.subr.mxu0 0.0
      %2200 = vmatpush2.xpose.msra.mxu0 0.0
      %2201 = vmatprep.subr.mxu0 0.0
      %2202 = vmatpush2.xpose.msra.mxu0 0.0
      %2203 = vmatprep.subr.mxu0 0.0
      %2204 = vmatpush2.xpose.msra.mxu0 0.0
      %2205 = vmatprep.subr.mxu0 0.0
      %2206 = vmatpush2.xpose.msra.mxu0 0.0
      %2207 = vmatprep.subr.mxu0 0.0
      %2208 = vmatpush2.xpose.msra.mxu0 0.0
      %2209 = vmatprep.subr.mxu0 0.0
      %2210 = vmatpush2.xpose.msra.mxu0 0.0
      %2211 = vmatprep.subr.mxu0 0.0
      %2212 = vmatpush2.xpose.msra.mxu0 0.0
      %2213 = vmatprep.subr.mxu0 0.0
      %2214 = vmatpush2.xpose.msra.mxu0 0.0
      %2215 = vmatprep.subr.mxu0 0.0
      %2216 = vmatpush2.xpose.msra.mxu0 0.0
      %2217 = vmatprep.subr.mxu0 0.0
      %2218 = vmatpush2.xpose.msra.mxu0 0.0
      %2219 = vmatprep.subr.mxu0 0.0
      %2220 = vmatpush2.xpose.msra.mxu0 0.0
      %2221 = vmatprep.subr.mxu0 0.0
      %2222 = vmatpush2.xpose.msra.mxu0 0.0
      %2223 = vmatprep.subr.mxu0 0.0
      %2224 = vmatpush2.xpose.msra.mxu0 0.0
      %2225 = vmatprep.subr.mxu0 0.0
      %2226 = vmatpush2.xpose.msra.mxu0 0.0
      %2227 = vmatprep.subr.mxu0 0.0
      %2228 = vmatpush2.xpose.msra.mxu0 0.0
      %2229 = vmatprep.subr.mxu0 0.0
      %2230 = vmatpush2.xpose.msra.mxu0 0.0
      %2231 = vmatprep.mubr.f32.mxu0 0.0
      %2232 = vmatmul.mubr.f32.gmra.mxu0 %v2159
      %v2233 = vpop.f32.mrf.mxu0
      %v2234 = vadd.f32 %v909, %v2233
      %v2235 = vpop.f32.mrf.mxu0
      %2236 = vmatprep.mubr.f32.mxu0 0.0
      %2237 = vmatmul.mubr.f32.gmra.mxu0 %v2161
      %v2238 = vpop.f32.mrf.mxu0
      %v2239 = vadd.f32 %v910, %v2238
      %v2240 = vpop.f32.mrf.mxu0
      %2241 = vdwg.mxu0
      %v2242 = vsel %vm476, %v2234, -inf
      %2243 = vmax.xlane.f32.xlu0 %v2242
      %v2244 = vpop.xlane.xlu0 %2243
      %v2245 = vsel %vm476, %v2239, -inf
      %2246 = vmax.xlane.f32.xlu0 %v2245
      %v2247 = vpop.xlane.xlu0 %2246
      %v2248 = vsub.f32 %v2234, %v2244
      %v2249 = vsub.f32 %v2239, %v2247
      %v2250 = vmul.f32 %v2248, 1.442695
      %v2251 = vpow.pop %v2250
      %v2252 = vmul.f32 %v2249, 1.442695
      %v2253 = vpow.pop %v2252
      %v2254 = vsel %vm476, %v2251, 0.0
      %2255 = vadd.xlane.f32.xlu0 %v2254
      %v2256 = vpop.xlane.xlu0 %2255
      %v2257 = vsel %vm476, %v2253, 0.0
      %2258 = vadd.xlane.f32.xlu0 %v2257
      %v2259 = vpop.xlane.xlu0 %2258
      %2260 = vrot.lane.b32.xlu0 %v2145, 64
      %v2261 = vpop.permute.xlu0 %2260
      %2262 = vrot.lane.b32.xlu0 %v2150, 64
      %v2263 = vpop.permute.xlu0 %2262
      %v2267 = vsel %vm476, %v2251, 0
      %v2270 = vsel %vm476, %v2253, 0
      %2272 = vmatprep.subr.mxu0 0.0
      %2273 = vmatpush1.msra.mxu0 0.0
      %2274 = vmatprep.subr.mxu0 0.0
      %2275 = vmatpush1.msra.mxu0 0.0
      %2276 = vmatprep.subr.mxu0 0.0
      %2277 = vmatpush1.msra.mxu0 0.0
      %2278 = vmatprep.subr.mxu0 0.0
      %2279 = vmatpush1.msra.mxu0 0.0
      %2280 = vmatprep.subr.mxu0 0.0
      %2281 = vmatpush1.msra.mxu0 0.0
      %2282 = vmatprep.subr.mxu0 0.0
      %2283 = vmatpush1.msra.mxu0 0.0
      %2284 = vmatprep.subr.mxu0 0.0
      %2285 = vmatpush1.msra.mxu0 0.0
      %2286 = vmatprep.subr.mxu0 0.0
      %2287 = vmatpush1.msra.mxu0 0.0
      %2288 = vmatprep.subr.mxu0 0.0
      %2289 = vmatpush1.msra.mxu0 0.0
      %2290 = vmatprep.subr.mxu0 0.0
      %2291 = vmatpush1.msra.mxu0 0.0
      %2292 = vmatprep.subr.mxu0 0.0
      %2293 = vmatpush1.msra.mxu0 0.0
      %2294 = vmatprep.subr.mxu0 0.0
      %2295 = vmatpush1.msra.mxu0 0.0
      %2296 = vmatprep.subr.mxu0 0.0
      %2297 = vmatpush1.msra.mxu0 0.0
      %2298 = vmatprep.subr.mxu0 0.0
      %2299 = vmatpush1.msra.mxu0 0.0
      %2300 = vmatprep.subr.mxu0 0.0
      %2301 = vmatpush1.msra.mxu0 %v2263
      %2302 = vmatprep.subr.mxu0 0.0
      %2303 = vmatpush1.msra.mxu0 %v2261
      %2304 = vmatprep.subr.mxu0 0.0
      %2305 = vmatpush2.msra.mxu0 0.0
      %2306 = vmatprep.subr.mxu0 0.0
      %2307 = vmatpush2.msra.mxu0 0.0
      %2308 = vmatprep.subr.mxu0 0.0
      %2309 = vmatpush2.msra.mxu0 0.0
      %2310 = vmatprep.subr.mxu0 0.0
      %2311 = vmatpush2.msra.mxu0 0.0
      %2312 = vmatprep.subr.mxu0 0.0
      %2313 = vmatpush2.msra.mxu0 0.0
      %2314 = vmatprep.subr.mxu0 0.0
      %2315 = vmatpush2.msra.mxu0 0.0
      %2316 = vmatprep.subr.mxu0 0.0
      %2317 = vmatpush2.msra.mxu0 0.0
      %2318 = vmatprep.subr.mxu0 0.0
      %2319 = vmatpush2.msra.mxu0 0.0
      %2320 = vmatprep.subr.mxu0 0.0
      %2321 = vmatpush2.msra.mxu0 0.0
      %2322 = vmatprep.subr.mxu0 0.0
      %2323 = vmatpush2.msra.mxu0 0.0
      %2324 = vmatprep.subr.mxu0 0.0
      %2325 = vmatpush2.msra.mxu0 0.0
      %2326 = vmatprep.subr.mxu0 0.0
      %2327 = vmatpush2.msra.mxu0 0.0
      %2328 = vmatprep.subr.mxu0 0.0
      %2329 = vmatpush2.msra.mxu0 0.0
      %2330 = vmatprep.subr.mxu0 0.0
      %2331 = vmatpush2.msra.mxu0 0.0
      %2332 = vmatprep.subr.mxu0 0.0
      %2333 = vmatpush2.msra.mxu0 0.0
      %2334 = vmatprep.subr.mxu0 0.0
      %2335 = vmatpush2.msra.mxu0 0.0
      %2336 = vmatprep.mubr.f32.mxu0 0.0
      %2337 = vmatmul.mubr.f32.gmra.mxu0 %v2267
      %v2338 = vpop.f32.mrf.mxu0
      %v2339 = vadd.f32 0.0, %v2338
      %v2340 = vpop.f32.mrf.mxu0
      %2341 = vmatprep.mubr.f32.mxu0 0.0
      %2342 = vmatmul.mubr.f32.gmra.mxu0 %v2270
      %v2343 = vpop.f32.mrf.mxu0
      %v2344 = vadd.f32 0.0, %v2343
      %v2345 = vpop.f32.mrf.mxu0
      %2346 = vdwg.mxu0
      %v2347 = vrcp.pop %v2256
      %v2348 = vrcp.pop %v2259
      %v2349 = vmul.f32 %v2339, %v2347
      %v2350 = vmul.f32 %v2344, %v2348
      %2351 = vrot.lane.b32.xlu0 %v2145, 120
      %v2352 = vpop.permute.xlu0 %2351
      %2353 = vrot.lane.b32.xlu0 %v2150, 120
      %v2354 = vpop.permute.xlu0 %2353
      %2355 = vrot.lane.b32.xlu0 %v2145, 88
      %v2356 = vpop.permute.xlu0 %2355
      %2357 = vrot.lane.b32.xlu0 %v2150, 88
      %v2358 = vpop.permute.xlu0 %2357
      %v2359 = vsel %vm917, %v2352, 0
      %v2361 = vsel %vm917, %v2354, 0
      %v2363 = vsel %vm917, %v2356, 0
      %v2365 = vsel %vm917, %v2358, 0
      %2367 = vmatprep.subr.mxu0 0.0
      %2368 = vmatpush1.xpose.msra.mxu0 0.0
      %2369 = vmatprep.subr.mxu0 0.0
      %2370 = vmatpush1.xpose.msra.mxu0 0.0
      %2371 = vmatprep.subr.mxu0 0.0
      %2372 = vmatpush1.xpose.msra.mxu0 0.0
      %2373 = vmatprep.subr.mxu0 0.0
      %2374 = vmatpush1.xpose.msra.mxu0 0.0
      %2375 = vmatprep.subr.mxu0 0.0
      %2376 = vmatpush1.xpose.msra.mxu0 0.0
      %2377 = vmatprep.subr.mxu0 0.0
      %2378 = vmatpush1.xpose.msra.mxu0 0.0
      %2379 = vmatprep.subr.mxu0 0.0
      %2380 = vmatpush1.xpose.msra.mxu0 0.0
      %2381 = vmatprep.subr.mxu0 0.0
      %2382 = vmatpush1.xpose.msra.mxu0 0.0
      %2383 = vmatprep.subr.mxu0 0.0
      %2384 = vmatpush1.xpose.msra.mxu0 0.0
      %2385 = vmatprep.subr.mxu0 0.0
      %2386 = vmatpush1.xpose.msra.mxu0 0.0
      %2387 = vmatprep.subr.mxu0 0.0
      %2388 = vmatpush1.xpose.msra.mxu0 0.0
      %2389 = vmatprep.subr.mxu0 0.0
      %2390 = vmatpush1.xpose.msra.mxu0 0.0
      %2391 = vmatprep.subr.mxu0 0.0
      %2392 = vmatpush1.xpose.msra.mxu0 0.0
      %2393 = vmatprep.subr.mxu0 0.0
      %2394 = vmatpush1.xpose.msra.mxu0 0.0
      %2395 = vmatprep.subr.mxu0 0.0
      %2396 = vmatpush1.xpose.msra.mxu0 %v2365
      %2397 = vmatprep.subr.mxu0 0.0
      %2398 = vmatpush1.xpose.msra.mxu0 %v2363
      %2399 = vmatprep.subr.mxu0 0.0
      %2400 = vmatpush2.xpose.msra.mxu0 0.0
      %2401 = vmatprep.subr.mxu0 0.0
      %2402 = vmatpush2.xpose.msra.mxu0 0.0
      %2403 = vmatprep.subr.mxu0 0.0
      %2404 = vmatpush2.xpose.msra.mxu0 0.0
      %2405 = vmatprep.subr.mxu0 0.0
      %2406 = vmatpush2.xpose.msra.mxu0 0.0
      %2407 = vmatprep.subr.mxu0 0.0
      %2408 = vmatpush2.xpose.msra.mxu0 0.0
      %2409 = vmatprep.subr.mxu0 0.0
      %2410 = vmatpush2.xpose.msra.mxu0 0.0
      %2411 = vmatprep.subr.mxu0 0.0
      %2412 = vmatpush2.xpose.msra.mxu0 0.0
      %2413 = vmatprep.subr.mxu0 0.0
      %2414 = vmatpush2.xpose.msra.mxu0 0.0
      %2415 = vmatprep.subr.mxu0 0.0
      %2416 = vmatpush2.xpose.msra.mxu0 0.0
      %2417 = vmatprep.subr.mxu0 0.0
      %2418 = vmatpush2.xpose.msra.mxu0 0.0
      %2419 = vmatprep.subr.mxu0 0.0
      %2420 = vmatpush2.xpose.msra.mxu0 0.0
      %2421 = vmatprep.subr.mxu0 0.0
      %2422 = vmatpush2.xpose.msra.mxu0 0.0
      %2423 = vmatprep.subr.mxu0 0.0
      %2424 = vmatpush2.xpose.msra.mxu0 0.0
      %2425 = vmatprep.subr.mxu0 0.0
      %2426 = vmatpush2.xpose.msra.mxu0 0.0
      %2427 = vmatprep.subr.mxu0 0.0
      %2428 = vmatpush2.xpose.msra.mxu0 0.0
      %2429 = vmatprep.subr.mxu0 0.0
      %2430 = vmatpush2.xpose.msra.mxu0 0.0
      %2431 = vmatprep.mubr.f32.mxu0 0.0
      %2432 = vmatmul.mubr.f32.gmra.mxu0 %v2359
      %v2433 = vpop.f32.mrf.mxu0
      %v2434 = vadd.f32 %v1111, %v2433
      %v2435 = vpop.f32.mrf.mxu0
      %2436 = vmatprep.mubr.f32.mxu0 0.0
      %2437 = vmatmul.mubr.f32.gmra.mxu0 %v2361
      %v2438 = vpop.f32.mrf.mxu0
      %v2439 = vadd.f32 %v1112, %v2438
      %v2440 = vpop.f32.mrf.mxu0
      %2441 = vdwg.mxu0
      %v2442 = vsel %vm476, %v2434, -inf
      %2443 = vmax.xlane.f32.xlu0 %v2442
      %v2444 = vpop.xlane.xlu0 %2443
      %v2445 = vsel %vm476, %v2439, -inf
      %2446 = vmax.xlane.f32.xlu0 %v2445
      %v2447 = vpop.xlane.xlu0 %2446
      %v2448 = vsub.f32 %v2434, %v2444
      %v2449 = vsub.f32 %v2439, %v2447
      %v2450 = vmul.f32 %v2448, 1.442695
      %v2451 = vpow.pop %v2450
      %v2452 = vmul.f32 %v2449, 1.442695
      %v2453 = vpow.pop %v2452
      %v2454 = vsel %vm476, %v2451, 0.0
      %2455 = vadd.xlane.f32.xlu0 %v2454
      %v2456 = vpop.xlane.xlu0 %2455
      %v2457 = vsel %vm476, %v2453, 0.0
      %2458 = vadd.xlane.f32.xlu0 %v2457
      %v2459 = vpop.xlane.xlu0 %2458
      %2460 = vrot.lane.b32.xlu0 %v2145, 56
      %v2461 = vpop.permute.xlu0 %2460
      %2462 = vrot.lane.b32.xlu0 %v2150, 56
      %v2463 = vpop.permute.xlu0 %2462
      %v2467 = vsel %vm476, %v2451, 0
      %v2470 = vsel %vm476, %v2453, 0
      %2472 = vmatprep.subr.mxu0 0.0
      %2473 = vmatpush1.msra.mxu0 0.0
      %2474 = vmatprep.subr.mxu0 0.0
      %2475 = vmatpush1.msra.mxu0 0.0
      %2476 = vmatprep.subr.mxu0 0.0
      %2477 = vmatpush1.msra.mxu0 0.0
      %2478 = vmatprep.subr.mxu0 0.0
      %2479 = vmatpush1.msra.mxu0 0.0
      %2480 = vmatprep.subr.mxu0 0.0
      %2481 = vmatpush1.msra.mxu0 0.0
      %2482 = vmatprep.subr.mxu0 0.0
      %2483 = vmatpush1.msra.mxu0 0.0
      %2484 = vmatprep.subr.mxu0 0.0
      %2485 = vmatpush1.msra.mxu0 0.0
      %2486 = vmatprep.subr.mxu0 0.0
      %2487 = vmatpush1.msra.mxu0 0.0
      %2488 = vmatprep.subr.mxu0 0.0
      %2489 = vmatpush1.msra.mxu0 0.0
      %2490 = vmatprep.subr.mxu0 0.0
      %2491 = vmatpush1.msra.mxu0 0.0
      %2492 = vmatprep.subr.mxu0 0.0
      %2493 = vmatpush1.msra.mxu0 0.0
      %2494 = vmatprep.subr.mxu0 0.0
      %2495 = vmatpush1.msra.mxu0 0.0
      %2496 = vmatprep.subr.mxu0 0.0
      %2497 = vmatpush1.msra.mxu0 0.0
      %2498 = vmatprep.subr.mxu0 0.0
      %2499 = vmatpush1.msra.mxu0 0.0
      %2500 = vmatprep.subr.mxu0 0.0
      %2501 = vmatpush1.msra.mxu0 %v2463
      %2502 = vmatprep.subr.mxu0 0.0
      %2503 = vmatpush1.msra.mxu0 %v2461
      %2504 = vmatprep.subr.mxu0 0.0
      %2505 = vmatpush2.msra.mxu0 0.0
      %2506 = vmatprep.subr.mxu0 0.0
      %2507 = vmatpush2.msra.mxu0 0.0
      %2508 = vmatprep.subr.mxu0 0.0
      %2509 = vmatpush2.msra.mxu0 0.0
      %2510 = vmatprep.subr.mxu0 0.0
      %2511 = vmatpush2.msra.mxu0 0.0
      %2512 = vmatprep.subr.mxu0 0.0
      %2513 = vmatpush2.msra.mxu0 0.0
      %2514 = vmatprep.subr.mxu0 0.0
      %2515 = vmatpush2.msra.mxu0 0.0
      %2516 = vmatprep.subr.mxu0 0.0
      %2517 = vmatpush2.msra.mxu0 0.0
      %2518 = vmatprep.subr.mxu0 0.0
      %2519 = vmatpush2.msra.mxu0 0.0
      %2520 = vmatprep.subr.mxu0 0.0
      %2521 = vmatpush2.msra.mxu0 0.0
      %2522 = vmatprep.subr.mxu0 0.0
      %2523 = vmatpush2.msra.mxu0 0.0
      %2524 = vmatprep.subr.mxu0 0.0
      %2525 = vmatpush2.msra.mxu0 0.0
      %2526 = vmatprep.subr.mxu0 0.0
      %2527 = vmatpush2.msra.mxu0 0.0
      %2528 = vmatprep.subr.mxu0 0.0
      %2529 = vmatpush2.msra.mxu0 0.0
      %2530 = vmatprep.subr.mxu0 0.0
      %2531 = vmatpush2.msra.mxu0 0.0
      %2532 = vmatprep.subr.mxu0 0.0
      %2533 = vmatpush2.msra.mxu0 0.0
      %2534 = vmatprep.subr.mxu0 0.0
      %2535 = vmatpush2.msra.mxu0 0.0
      %2536 = vmatprep.mubr.f32.mxu0 0.0
      %2537 = vmatmul.mubr.f32.gmra.mxu0 %v2467
      %v2538 = vpop.f32.mrf.mxu0
      %v2539 = vadd.f32 0.0, %v2538
      %v2540 = vpop.f32.mrf.mxu0
      %2541 = vmatprep.mubr.f32.mxu0 0.0
      %2542 = vmatmul.mubr.f32.gmra.mxu0 %v2470
      %v2543 = vpop.f32.mrf.mxu0
      %v2544 = vadd.f32 0.0, %v2543
      %v2545 = vpop.f32.mrf.mxu0
      %2546 = vdwg.mxu0
      %v2547 = vrcp.pop %v2456
      %v2548 = vrcp.pop %v2459
      %v2549 = vmul.f32 %v2539, %v2547
      %v2550 = vmul.f32 %v2544, %v2548
      %2551 = vrot.lane.b32.xlu0 %v2145, 112
      %v2552 = vpop.permute.xlu0 %2551
      %2553 = vrot.lane.b32.xlu0 %v2150, 112
      %v2554 = vpop.permute.xlu0 %2553
      %2555 = vrot.lane.b32.xlu0 %v2145, 80
      %v2556 = vpop.permute.xlu0 %2555
      %2557 = vrot.lane.b32.xlu0 %v2150, 80
      %v2558 = vpop.permute.xlu0 %2557
      %v2559 = vsel %vm917, %v2552, 0
      %v2561 = vsel %vm917, %v2554, 0
      %v2563 = vsel %vm917, %v2556, 0
      %v2565 = vsel %vm917, %v2558, 0
      %2567 = vmatprep.subr.mxu0 0.0
      %2568 = vmatpush1.xpose.msra.mxu0 0.0
      %2569 = vmatprep.subr.mxu0 0.0
      %2570 = vmatpush1.xpose.msra.mxu0 0.0
      %2571 = vmatprep.subr.mxu0 0.0
      %2572 = vmatpush1.xpose.msra.mxu0 0.0
      %2573 = vmatprep.subr.mxu0 0.0
      %2574 = vmatpush1.xpose.msra.mxu0 0.0
      %2575 = vmatprep.subr.mxu0 0.0
      %2576 = vmatpush1.xpose.msra.mxu0 0.0
      %2577 = vmatprep.subr.mxu0 0.0
      %2578 = vmatpush1.xpose.msra.mxu0 0.0
      %2579 = vmatprep.subr.mxu0 0.0
      %2580 = vmatpush1.xpose.msra.mxu0 0.0
      %2581 = vmatprep.subr.mxu0 0.0
      %2582 = vmatpush1.xpose.msra.mxu0 0.0
      %2583 = vmatprep.subr.mxu0 0.0
      %2584 = vmatpush1.xpose.msra.mxu0 0.0
      %2585 = vmatprep.subr.mxu0 0.0
      %2586 = vmatpush1.xpose.msra.mxu0 0.0
      %2587 = vmatprep.subr.mxu0 0.0
      %2588 = vmatpush1.xpose.msra.mxu0 0.0
      %2589 = vmatprep.subr.mxu0 0.0
      %2590 = vmatpush1.xpose.msra.mxu0 0.0
      %2591 = vmatprep.subr.mxu0 0.0
      %2592 = vmatpush1.xpose.msra.mxu0 0.0
      %2593 = vmatprep.subr.mxu0 0.0
      %2594 = vmatpush1.xpose.msra.mxu0 0.0
      %2595 = vmatprep.subr.mxu0 0.0
      %2596 = vmatpush1.xpose.msra.mxu0 %v2565
      %2597 = vmatprep.subr.mxu0 0.0
      %2598 = vmatpush1.xpose.msra.mxu0 %v2563
      %2599 = vmatprep.subr.mxu0 0.0
      %2600 = vmatpush2.xpose.msra.mxu0 0.0
      %2601 = vmatprep.subr.mxu0 0.0
      %2602 = vmatpush2.xpose.msra.mxu0 0.0
      %2603 = vmatprep.subr.mxu0 0.0
      %2604 = vmatpush2.xpose.msra.mxu0 0.0
      %2605 = vmatprep.subr.mxu0 0.0
      %2606 = vmatpush2.xpose.msra.mxu0 0.0
      %2607 = vmatprep.subr.mxu0 0.0
      %2608 = vmatpush2.xpose.msra.mxu0 0.0
      %2609 = vmatprep.subr.mxu0 0.0
      %2610 = vmatpush2.xpose.msra.mxu0 0.0
      %2611 = vmatprep.subr.mxu0 0.0
      %2612 = vmatpush2.xpose.msra.mxu0 0.0
      %2613 = vmatprep.subr.mxu0 0.0
      %2614 = vmatpush2.xpose.msra.mxu0 0.0
      %2615 = vmatprep.subr.mxu0 0.0
      %2616 = vmatpush2.xpose.msra.mxu0 0.0
      %2617 = vmatprep.subr.mxu0 0.0
      %2618 = vmatpush2.xpose.msra.mxu0 0.0
      %2619 = vmatprep.subr.mxu0 0.0
      %2620 = vmatpush2.xpose.msra.mxu0 0.0
      %2621 = vmatprep.subr.mxu0 0.0
      %2622 = vmatpush2.xpose.msra.mxu0 0.0
      %2623 = vmatprep.subr.mxu0 0.0
      %2624 = vmatpush2.xpose.msra.mxu0 0.0
      %2625 = vmatprep.subr.mxu0 0.0
      %2626 = vmatpush2.xpose.msra.mxu0 0.0
      %2627 = vmatprep.subr.mxu0 0.0
      %2628 = vmatpush2.xpose.msra.mxu0 0.0
      %2629 = vmatprep.subr.mxu0 0.0
      %2630 = vmatpush2.xpose.msra.mxu0 0.0
      %2631 = vmatprep.mubr.f32.mxu0 0.0
      %2632 = vmatmul.mubr.f32.gmra.mxu0 %v2559
      %v2633 = vpop.f32.mrf.mxu0
      %v2634 = vadd.f32 %v1314, %v2633
      %v2635 = vpop.f32.mrf.mxu0
      %2636 = vmatprep.mubr.f32.mxu0 0.0
      %2637 = vmatmul.mubr.f32.gmra.mxu0 %v2561
      %v2638 = vpop.f32.mrf.mxu0
      %v2639 = vadd.f32 %v1315, %v2638
      %v2640 = vpop.f32.mrf.mxu0
      %2641 = vdwg.mxu0
      %v2642 = vsel %vm476, %v2634, -inf
      %2643 = vmax.xlane.f32.xlu0 %v2642
      %v2644 = vpop.xlane.xlu0 %2643
      %v2645 = vsel %vm476, %v2639, -inf
      %2646 = vmax.xlane.f32.xlu0 %v2645
      %v2647 = vpop.xlane.xlu0 %2646
      %v2648 = vsub.f32 %v2634, %v2644
      %v2649 = vsub.f32 %v2639, %v2647
      %v2650 = vmul.f32 %v2648, 1.442695
      %v2651 = vpow.pop %v2650
      %v2652 = vmul.f32 %v2649, 1.442695
      %v2653 = vpow.pop %v2652
      %v2654 = vsel %vm476, %v2651, 0.0
      %2655 = vadd.xlane.f32.xlu0 %v2654
      %v2656 = vpop.xlane.xlu0 %2655
      %v2657 = vsel %vm476, %v2653, 0.0
      %2658 = vadd.xlane.f32.xlu0 %v2657
      %v2659 = vpop.xlane.xlu0 %2658
      %2660 = vrot.lane.b32.xlu0 %v2145, 48
      %v2661 = vpop.permute.xlu0 %2660
      %2662 = vrot.lane.b32.xlu0 %v2150, 48
      %v2663 = vpop.permute.xlu0 %2662
      %v2667 = vsel %vm476, %v2651, 0
      %v2670 = vsel %vm476, %v2653, 0
      %2672 = vmatprep.subr.mxu0 0.0
      %2673 = vmatpush1.msra.mxu0 0.0
      %2674 = vmatprep.subr.mxu0 0.0
      %2675 = vmatpush1.msra.mxu0 0.0
      %2676 = vmatprep.subr.mxu0 0.0
      %2677 = vmatpush1.msra.mxu0 0.0
      %2678 = vmatprep.subr.mxu0 0.0
      %2679 = vmatpush1.msra.mxu0 0.0
      %2680 = vmatprep.subr.mxu0 0.0
      %2681 = vmatpush1.msra.mxu0 0.0
      %2682 = vmatprep.subr.mxu0 0.0
      %2683 = vmatpush1.msra.mxu0 0.0
      %2684 = vmatprep.subr.mxu0 0.0
      %2685 = vmatpush1.msra.mxu0 0.0
      %2686 = vmatprep.subr.mxu0 0.0
      %2687 = vmatpush1.msra.mxu0 0.0
      %2688 = vmatprep.subr.mxu0 0.0
      %2689 = vmatpush1.msra.mxu0 0.0
      %2690 = vmatprep.subr.mxu0 0.0
      %2691 = vmatpush1.msra.mxu0 0.0
      %2692 = vmatprep.subr.mxu0 0.0
      %2693 = vmatpush1.msra.mxu0 0.0
      %2694 = vmatprep.subr.mxu0 0.0
      %2695 = vmatpush1.msra.mxu0 0.0
      %2696 = vmatprep.subr.mxu0 0.0
      %2697 = vmatpush1.msra.mxu0 0.0
      %2698 = vmatprep.subr.mxu0 0.0
      %2699 = vmatpush1.msra.mxu0 0.0
      %2700 = vmatprep.subr.mxu0 0.0
      %2701 = vmatpush1.msra.mxu0 %v2663
      %2702 = vmatprep.subr.mxu0 0.0
      %2703 = vmatpush1.msra.mxu0 %v2661
      %2704 = vmatprep.subr.mxu0 0.0
      %2705 = vmatpush2.msra.mxu0 0.0
      %2706 = vmatprep.subr.mxu0 0.0
      %2707 = vmatpush2.msra.mxu0 0.0
      %2708 = vmatprep.subr.mxu0 0.0
      %2709 = vmatpush2.msra.mxu0 0.0
      %2710 = vmatprep.subr.mxu0 0.0
      %2711 = vmatpush2.msra.mxu0 0.0
      %2712 = vmatprep.subr.mxu0 0.0
      %2713 = vmatpush2.msra.mxu0 0.0
      %2714 = vmatprep.subr.mxu0 0.0
      %2715 = vmatpush2.msra.mxu0 0.0
      %2716 = vmatprep.subr.mxu0 0.0
      %2717 = vmatpush2.msra.mxu0 0.0
      %2718 = vmatprep.subr.mxu0 0.0
      %2719 = vmatpush2.msra.mxu0 0.0
      %2720 = vmatprep.subr.mxu0 0.0
      %2721 = vmatpush2.msra.mxu0 0.0
      %2722 = vmatprep.subr.mxu0 0.0
      %2723 = vmatpush2.msra.mxu0 0.0
      %2724 = vmatprep.subr.mxu0 0.0
      %2725 = vmatpush2.msra.mxu0 0.0
      %2726 = vmatprep.subr.mxu0 0.0
      %2727 = vmatpush2.msra.mxu0 0.0
      %2728 = vmatprep.subr.mxu0 0.0
      %2729 = vmatpush2.msra.mxu0 0.0
      %2730 = vmatprep.subr.mxu0 0.0
      %2731 = vmatpush2.msra.mxu0 0.0
      %2732 = vmatprep.subr.mxu0 0.0
      %2733 = vmatpush2.msra.mxu0 0.0
      %2734 = vmatprep.subr.mxu0 0.0
      %2735 = vmatpush2.msra.mxu0 0.0
      %2736 = vmatprep.mubr.f32.mxu0 0.0
      %2737 = vmatmul.mubr.f32.gmra.mxu0 %v2667
      %v2738 = vpop.f32.mrf.mxu0
      %v2739 = vadd.f32 0.0, %v2738
      %v2740 = vpop.f32.mrf.mxu0
      %2741 = vmatprep.mubr.f32.mxu0 0.0
      %2742 = vmatmul.mubr.f32.gmra.mxu0 %v2670
      %v2743 = vpop.f32.mrf.mxu0
      %v2744 = vadd.f32 0.0, %v2743
      %v2745 = vpop.f32.mrf.mxu0
      %2746 = vdwg.mxu0
      %v2747 = vrcp.pop %v2656
      %v2748 = vrcp.pop %v2659
      %v2749 = vmul.f32 %v2739, %v2747
      %v2750 = vmul.f32 %v2744, %v2748
      %2751 = vrot.lane.b32.xlu0 %v2145, 104
      %v2752 = vpop.permute.xlu0 %2751
      %2753 = vrot.lane.b32.xlu0 %v2150, 104
      %v2754 = vpop.permute.xlu0 %2753
      %2755 = vrot.lane.b32.xlu0 %v2145, 72
      %v2756 = vpop.permute.xlu0 %2755
      %2757 = vrot.lane.b32.xlu0 %v2150, 72
      %v2758 = vpop.permute.xlu0 %2757
      %v2759 = vsel %vm917, %v2752, 0
      %v2761 = vsel %vm917, %v2754, 0
      %v2763 = vsel %vm917, %v2756, 0
      %v2765 = vsel %vm917, %v2758, 0
      %2767 = vmatprep.subr.mxu0 0.0
      %2768 = vmatpush1.xpose.msra.mxu0 0.0
      %2769 = vmatprep.subr.mxu0 0.0
      %2770 = vmatpush1.xpose.msra.mxu0 0.0
      %2771 = vmatprep.subr.mxu0 0.0
      %2772 = vmatpush1.xpose.msra.mxu0 0.0
      %2773 = vmatprep.subr.mxu0 0.0
      %2774 = vmatpush1.xpose.msra.mxu0 0.0
      %2775 = vmatprep.subr.mxu0 0.0
      %2776 = vmatpush1.xpose.msra.mxu0 0.0
      %2777 = vmatprep.subr.mxu0 0.0
      %2778 = vmatpush1.xpose.msra.mxu0 0.0
      %2779 = vmatprep.subr.mxu0 0.0
      %2780 = vmatpush1.xpose.msra.mxu0 0.0
      %2781 = vmatprep.subr.mxu0 0.0
      %2782 = vmatpush1.xpose.msra.mxu0 0.0
      %2783 = vmatprep.subr.mxu0 0.0
      %2784 = vmatpush1.xpose.msra.mxu0 0.0
      %2785 = vmatprep.subr.mxu0 0.0
      %2786 = vmatpush1.xpose.msra.mxu0 0.0
      %2787 = vmatprep.subr.mxu0 0.0
      %2788 = vmatpush1.xpose.msra.mxu0 0.0
      %2789 = vmatprep.subr.mxu0 0.0
      %2790 = vmatpush1.xpose.msra.mxu0 0.0
      %2791 = vmatprep.subr.mxu0 0.0
      %2792 = vmatpush1.xpose.msra.mxu0 0.0
      %2793 = vmatprep.subr.mxu0 0.0
      %2794 = vmatpush1.xpose.msra.mxu0 0.0
      %2795 = vmatprep.subr.mxu0 0.0
      %2796 = vmatpush1.xpose.msra.mxu0 %v2765
      %2797 = vmatprep.subr.mxu0 0.0
      %2798 = vmatpush1.xpose.msra.mxu0 %v2763
      %2799 = vmatprep.subr.mxu0 0.0
      %2800 = vmatpush2.xpose.msra.mxu0 0.0
      %2801 = vmatprep.subr.mxu0 0.0
      %2802 = vmatpush2.xpose.msra.mxu0 0.0
      %2803 = vmatprep.subr.mxu0 0.0
      %2804 = vmatpush2.xpose.msra.mxu0 0.0
      %2805 = vmatprep.subr.mxu0 0.0
      %2806 = vmatpush2.xpose.msra.mxu0 0.0
      %2807 = vmatprep.subr.mxu0 0.0
      %2808 = vmatpush2.xpose.msra.mxu0 0.0
      %2809 = vmatprep.subr.mxu0 0.0
      %2810 = vmatpush2.xpose.msra.mxu0 0.0
      %2811 = vmatprep.subr.mxu0 0.0
      %2812 = vmatpush2.xpose.msra.mxu0 0.0
      %2813 = vmatprep.subr.mxu0 0.0
      %2814 = vmatpush2.xpose.msra.mxu0 0.0
      %2815 = vmatprep.subr.mxu0 0.0
      %2816 = vmatpush2.xpose.msra.mxu0 0.0
      %2817 = vmatprep.subr.mxu0 0.0
      %2818 = vmatpush2.xpose.msra.mxu0 0.0
      %2819 = vmatprep.subr.mxu0 0.0
      %2820 = vmatpush2.xpose.msra.mxu0 0.0
      %2821 = vmatprep.subr.mxu0 0.0
      %2822 = vmatpush2.xpose.msra.mxu0 0.0
      %2823 = vmatprep.subr.mxu0 0.0
      %2824 = vmatpush2.xpose.msra.mxu0 0.0
      %2825 = vmatprep.subr.mxu0 0.0
      %2826 = vmatpush2.xpose.msra.mxu0 0.0
      %2827 = vmatprep.subr.mxu0 0.0
      %2828 = vmatpush2.xpose.msra.mxu0 0.0
      %2829 = vmatprep.subr.mxu0 0.0
      %2830 = vmatpush2.xpose.msra.mxu0 0.0
      %2831 = vmatprep.mubr.f32.mxu0 0.0
      %2832 = vmatmul.mubr.f32.gmra.mxu0 %v2759
      %v2833 = vpop.f32.mrf.mxu0
      %v2834 = vadd.f32 %v1517, %v2833
      %v2835 = vpop.f32.mrf.mxu0
      %2836 = vmatprep.mubr.f32.mxu0 0.0
      %2837 = vmatmul.mubr.f32.gmra.mxu0 %v2761
      %v2838 = vpop.f32.mrf.mxu0
      %v2839 = vadd.f32 %v1518, %v2838
      %v2840 = vpop.f32.mrf.mxu0
      %2841 = vdwg.mxu0
      %v2842 = vsel %vm476, %v2834, -inf
      %2843 = vmax.xlane.f32.xlu0 %v2842
      %v2844 = vpop.xlane.xlu0 %2843
      %v2845 = vsel %vm476, %v2839, -inf
      %2846 = vmax.xlane.f32.xlu0 %v2845
      %v2847 = vpop.xlane.xlu0 %2846
      %v2848 = vsub.f32 %v2834, %v2844
      %v2849 = vsub.f32 %v2839, %v2847
      %v2850 = vmul.f32 %v2848, 1.442695
      %v2851 = vpow.pop %v2850
      %v2852 = vmul.f32 %v2849, 1.442695
      %v2853 = vpow.pop %v2852
      %v2854 = vsel %vm476, %v2851, 0.0
      %2855 = vadd.xlane.f32.xlu0 %v2854
      %v2856 = vpop.xlane.xlu0 %2855
      %v2857 = vsel %vm476, %v2853, 0.0
      %2858 = vadd.xlane.f32.xlu0 %v2857
      %v2859 = vpop.xlane.xlu0 %2858
      %2860 = vrot.lane.b32.xlu0 %v2145, 40
      %v2861 = vpop.permute.xlu0 %2860
      %2862 = vrot.lane.b32.xlu0 %v2150, 40
      %v2863 = vpop.permute.xlu0 %2862
      %v2867 = vsel %vm476, %v2851, 0
      %v2870 = vsel %vm476, %v2853, 0
      %2872 = vmatprep.subr.mxu0 0.0
      %2873 = vmatpush1.msra.mxu0 0.0
      %2874 = vmatprep.subr.mxu0 0.0
      %2875 = vmatpush1.msra.mxu0 0.0
      %2876 = vmatprep.subr.mxu0 0.0
      %2877 = vmatpush1.msra.mxu0 0.0
      %2878 = vmatprep.subr.mxu0 0.0
      %2879 = vmatpush1.msra.mxu0 0.0
      %2880 = vmatprep.subr.mxu0 0.0
      %2881 = vmatpush1.msra.mxu0 0.0
      %2882 = vmatprep.subr.mxu0 0.0
      %2883 = vmatpush1.msra.mxu0 0.0
      %2884 = vmatprep.subr.mxu0 0.0
      %2885 = vmatpush1.msra.mxu0 0.0
      %2886 = vmatprep.subr.mxu0 0.0
      %2887 = vmatpush1.msra.mxu0 0.0
      %2888 = vmatprep.subr.mxu0 0.0
      %2889 = vmatpush1.msra.mxu0 0.0
      %2890 = vmatprep.subr.mxu0 0.0
      %2891 = vmatpush1.msra.mxu0 0.0
      %2892 = vmatprep.subr.mxu0 0.0
      %2893 = vmatpush1.msra.mxu0 0.0
      %2894 = vmatprep.subr.mxu0 0.0
      %2895 = vmatpush1.msra.mxu0 0.0
      %2896 = vmatprep.subr.mxu0 0.0
      %2897 = vmatpush1.msra.mxu0 0.0
      %2898 = vmatprep.subr.mxu0 0.0
      %2899 = vmatpush1.msra.mxu0 0.0
      %2900 = vmatprep.subr.mxu0 0.0
      %2901 = vmatpush1.msra.mxu0 %v2863
      %2902 = vmatprep.subr.mxu0 0.0
      %2903 = vmatpush1.msra.mxu0 %v2861
      %2904 = vmatprep.subr.mxu0 0.0
      %2905 = vmatpush2.msra.mxu0 0.0
      %2906 = vmatprep.subr.mxu0 0.0
      %2907 = vmatpush2.msra.mxu0 0.0
      %2908 = vmatprep.subr.mxu0 0.0
      %2909 = vmatpush2.msra.mxu0 0.0
      %2910 = vmatprep.subr.mxu0 0.0
      %2911 = vmatpush2.msra.mxu0 0.0
      %2912 = vmatprep.subr.mxu0 0.0
      %2913 = vmatpush2.msra.mxu0 0.0
      %2914 = vmatprep.subr.mxu0 0.0
      %2915 = vmatpush2.msra.mxu0 0.0
      %2916 = vmatprep.subr.mxu0 0.0
      %2917 = vmatpush2.msra.mxu0 0.0
      %2918 = vmatprep.subr.mxu0 0.0
      %2919 = vmatpush2.msra.mxu0 0.0
      %2920 = vmatprep.subr.mxu0 0.0
      %2921 = vmatpush2.msra.mxu0 0.0
      %2922 = vmatprep.subr.mxu0 0.0
      %2923 = vmatpush2.msra.mxu0 0.0
      %2924 = vmatprep.subr.mxu0 0.0
      %2925 = vmatpush2.msra.mxu0 0.0
      %2926 = vmatprep.subr.mxu0 0.0
      %2927 = vmatpush2.msra.mxu0 0.0
      %2928 = vmatprep.subr.mxu0 0.0
      %2929 = vmatpush2.msra.mxu0 0.0
      %2930 = vmatprep.subr.mxu0 0.0
      %2931 = vmatpush2.msra.mxu0 0.0
      %2932 = vmatprep.subr.mxu0 0.0
      %2933 = vmatpush2.msra.mxu0 0.0
      %2934 = vmatprep.subr.mxu0 0.0
      %2935 = vmatpush2.msra.mxu0 0.0
      %2936 = vmatprep.mubr.f32.mxu0 0.0
      %2937 = vmatmul.mubr.f32.gmra.mxu0 %v2867
      %v2938 = vpop.f32.mrf.mxu0
      %v2939 = vadd.f32 0.0, %v2938
      %v2940 = vpop.f32.mrf.mxu0
      %2941 = vmatprep.mubr.f32.mxu0 0.0
      %2942 = vmatmul.mubr.f32.gmra.mxu0 %v2870
      %v2943 = vpop.f32.mrf.mxu0
      %v2944 = vadd.f32 0.0, %v2943
      %v2945 = vpop.f32.mrf.mxu0
      %2946 = vdwg.mxu0
      %v2947 = vrcp.pop %v2856
      %v2948 = vrcp.pop %v2859
      %v2949 = vmul.f32 %v2939, %v2947
      %v2950 = vmul.f32 %v2944, %v2948
      %2953 = vrot.lane.b32.xlu0 %v2549, 8
      %v2954 = vpop.permute.xlu0 %2953
      %2955 = vrot.lane.b32.xlu0 %v2550, 8
      %v2956 = vpop.permute.xlu0 %2955
      %2961 = vrot.lane.b32.xlu0 %v2749, 16
      %v2962 = vpop.permute.xlu0 %2961
      %2963 = vrot.lane.b32.xlu0 %v2750, 16
      %v2964 = vpop.permute.xlu0 %2963
      %2969 = vrot.lane.b32.xlu0 %v2949, 24
      %v2970 = vpop.permute.xlu0 %2969
      %2971 = vrot.lane.b32.xlu0 %v2950, 24
      %v2972 = vpop.permute.xlu0 %2971
      %v2975 = vsel %vm917, %v2349, %v2954
      %v2976 = vsel %vm917, %v2350, %v2956
      %v2977 = vsel %vm476, %v2975, %v2962
      %v2978 = vsel %vm476, %v2976, %v2964
      %v2979 = vsel %vm1747, %v2977, %v2970
      %v2980 = vsel %vm1747, %v2978, %v2972
      %s2981 = scalar_lea.vmem %s7, 32
      %v2982 = vld [vmem:[%s2981] sm:$0xff]
      %v2983 = vld [vmem:[%s2981 + $0x8] sm:$0xff]
      %v2984 = vld [vmem:[%s2981 + $0x10] sm:$0xff]
      %v2985 = vld [vmem:[%s2981 + $0x18] sm:$0xff]
      %v2987 = vsel %vm800, %v2979, 0
      %v2990 = vsel %vm800, %v2980, 0
      %2992 = vmatprep.subr.mxu0 0.0
      %2993 = vmatpush1.msra.mxu0 0.0
      %2994 = vmatprep.subr.mxu0 0.0
      %2995 = vmatpush1.msra.mxu0 0.0
      %2996 = vmatprep.subr.mxu0 0.0
      %2997 = vmatpush1.msra.mxu0 0.0
      %2998 = vmatprep.subr.mxu0 0.0
      %2999 = vmatpush1.msra.mxu0 0.0
      %3000 = vmatprep.subr.mxu0 0.0
      %3001 = vmatpush1.msra.mxu0 0.0
      %3002 = vmatprep.subr.mxu0 0.0
      %3003 = vmatpush1.msra.mxu0 0.0
      %3004 = vmatprep.subr.mxu0 0.0
      %3005 = vmatpush1.msra.mxu0 0.0
      %3006 = vmatprep.subr.mxu0 0.0
      %3007 = vmatpush1.msra.mxu0 0.0
      %3008 = vmatprep.subr.mxu0 0.0
      %3009 = vmatpush1.msra.mxu0 0.0
      %3010 = vmatprep.subr.mxu0 0.0
      %3011 = vmatpush1.msra.mxu0 0.0
      %3012 = vmatprep.subr.mxu0 0.0
      %3013 = vmatpush1.msra.mxu0 0.0
      %3014 = vmatprep.subr.mxu0 0.0
      %3015 = vmatpush1.msra.mxu0 0.0
      %3016 = vmatprep.subr.mxu0 0.0
      %3017 = vmatpush1.msra.mxu0 %v2985
      %3018 = vmatprep.subr.mxu0 0.0
      %3019 = vmatpush1.msra.mxu0 %v2984
      %3020 = vmatprep.subr.mxu0 0.0
      %3021 = vmatpush1.msra.mxu0 %v2983
      %3022 = vmatprep.subr.mxu0 0.0
      %3023 = vmatpush1.msra.mxu0 %v2982
      %3024 = vmatprep.subr.mxu0 0.0
      %3025 = vmatpush2.msra.mxu0 0.0
      %3026 = vmatprep.subr.mxu0 0.0
      %3027 = vmatpush2.msra.mxu0 0.0
      %3028 = vmatprep.subr.mxu0 0.0
      %3029 = vmatpush2.msra.mxu0 0.0
      %3030 = vmatprep.subr.mxu0 0.0
      %3031 = vmatpush2.msra.mxu0 0.0
      %3032 = vmatprep.subr.mxu0 0.0
      %3033 = vmatpush2.msra.mxu0 0.0
      %3034 = vmatprep.subr.mxu0 0.0
      %3035 = vmatpush2.msra.mxu0 0.0
      %3036 = vmatprep.subr.mxu0 0.0
      %3037 = vmatpush2.msra.mxu0 0.0
      %3038 = vmatprep.subr.mxu0 0.0
      %3039 = vmatpush2.msra.mxu0 0.0
      %3040 = vmatprep.subr.mxu0 0.0
      %3041 = vmatpush2.msra.mxu0 0.0
      %3042 = vmatprep.subr.mxu0 0.0
      %3043 = vmatpush2.msra.mxu0 0.0
      %3044 = vmatprep.subr.mxu0 0.0
      %3045 = vmatpush2.msra.mxu0 0.0
      %3046 = vmatprep.subr.mxu0 0.0
      %3047 = vmatpush2.msra.mxu0 0.0
      %3048 = vmatprep.subr.mxu0 0.0
      %3049 = vmatpush2.msra.mxu0 0.0
      %3050 = vmatprep.subr.mxu0 0.0
      %3051 = vmatpush2.msra.mxu0 0.0
      %3052 = vmatprep.subr.mxu0 0.0
      %3053 = vmatpush2.msra.mxu0 0.0
      %3054 = vmatprep.subr.mxu0 0.0
      %3055 = vmatpush2.msra.mxu0 0.0
      %3056 = vmatprep.mubr.f32.mxu0 0.0
      %3057 = vmatmul.mubr.f32.gmra.mxu0 %v2987
      %v3058 = vpop.f32.mrf.mxu0
      %v3059 = vadd.f32 0.0, %v3058
      %v3060 = vpop.f32.mrf.mxu0
      %3061 = vmatprep.mubr.f32.mxu0 0.0
      %3062 = vmatmul.mubr.f32.gmra.mxu0 %v2990
      %v3063 = vpop.f32.mrf.mxu0
      %v3064 = vadd.f32 0.0, %v3063
      %v3065 = vpop.f32.mrf.mxu0
      %3066 = vdwg.mxu0
      %v3067 = vadd.f32 %v2039, %v3059
      %v3068 = vadd.f32 %v2040, %v3064
      %s3069 = scalar_lea.vmem %s8, 1
      %v3070 = vld [vmem:[%s3069] sm:$0x1]
      %v3071 = vmul.f32 %v3067, %v3067
      %v3072 = vmul.f32 %v3068, %v3068
      %v3073 = vsel %vm800, %v3071, 0.0
      %3074 = vadd.xlane.f32.xlu0 %v3073
      %v3075 = vpop.xlane.xlu0 %3074
      %v3076 = vsel %vm800, %v3072, 0.0
      %3077 = vadd.xlane.f32.xlu0 %v3076
      %v3078 = vpop.xlane.xlu0 %3077
      %v3079 = vmul.f32 %v3075, %v807
      %v3080 = vmul.f32 %v3078, %v807
      %v3081 = vadd.f32 %v3079, 1e-06
      %v3082 = vadd.f32 %v3080, 1e-06
      %v3083 = vrsqrt.pop %v3081
      %v3084 = vrsqrt.pop %v3082
      %v3085 = vmul.f32 %v3067, %v3083
      %v3086 = vmul.f32 %v3068, %v3084
      %v3088 = vlaneseq
      %v3089 = vshrl.u32 %v3088, 7
      %v3090 = vsub.s32 0, %v3089
      %v3091 = vrot.slane %v3070, %v3090
      %v3093 = vmul.f32 %v3085, %v3091
      %v3094 = vmul.f32 %v3086, %v3091
      %s3095 = scalar_lea.vmem %s9, 32
      %v3096 = vld [vmem:[%s3095] sm:$0xff]
      %v3097 = vld [vmem:[%s3095 + $0x8] sm:$0xff]
      %v3098 = vld [vmem:[%s3095 + $0x10] sm:$0xff]
      %v3099 = vld [vmem:[%s3095 + $0x18] sm:$0xff]
      %v3101 = vsel %vm800, %v3093, 0
      %v3104 = vsel %vm800, %v3094, 0
      %3106 = vmatprep.subr.mxu0 0.0
      %3107 = vmatpush1.msra.mxu0 0.0
      %3108 = vmatprep.subr.mxu0 0.0
      %3109 = vmatpush1.msra.mxu0 0.0
      %3110 = vmatprep.subr.mxu0 0.0
      %3111 = vmatpush1.msra.mxu0 0.0
      %3112 = vmatprep.subr.mxu0 0.0
      %3113 = vmatpush1.msra.mxu0 0.0
      %3114 = vmatprep.subr.mxu0 0.0
      %3115 = vmatpush1.msra.mxu0 0.0
      %3116 = vmatprep.subr.mxu0 0.0
      %3117 = vmatpush1.msra.mxu0 0.0
      %3118 = vmatprep.subr.mxu0 0.0
      %3119 = vmatpush1.msra.mxu0 0.0
      %3120 = vmatprep.subr.mxu0 0.0
      %3121 = vmatpush1.msra.mxu0 0.0
      %3122 = vmatprep.subr.mxu0 0.0
      %3123 = vmatpush1.msra.mxu0 0.0
      %3124 = vmatprep.subr.mxu0 0.0
      %3125 = vmatpush1.msra.mxu0 0.0
      %3126 = vmatprep.subr.mxu0 0.0
      %3127 = vmatpush1.msra.mxu0 0.0
      %3128 = vmatprep.subr.mxu0 0.0
      %3129 = vmatpush1.msra.mxu0 0.0
      %3130 = vmatprep.subr.mxu0 0.0
      %3131 = vmatpush1.msra.mxu0 %v3099
      %3132 = vmatprep.subr.mxu0 0.0
      %3133 = vmatpush1.msra.mxu0 %v3098
      %3134 = vmatprep.subr.mxu0 0.0
      %3135 = vmatpush1.msra.mxu0 %v3097
      %3136 = vmatprep.subr.mxu0 0.0
      %3137 = vmatpush1.msra.mxu0 %v3096
      %3138 = vmatprep.subr.mxu0 0.0
      %3139 = vmatpush2.msra.mxu0 0.0
      %3140 = vmatprep.subr.mxu0 0.0
      %3141 = vmatpush2.msra.mxu0 0.0
      %3142 = vmatprep.subr.mxu0 0.0
      %3143 = vmatpush2.msra.mxu0 0.0
      %3144 = vmatprep.subr.mxu0 0.0
      %3145 = vmatpush2.msra.mxu0 0.0
      %3146 = vmatprep.subr.mxu0 0.0
      %3147 = vmatpush2.msra.mxu0 0.0
      %3148 = vmatprep.subr.mxu0 0.0
      %3149 = vmatpush2.msra.mxu0 0.0
      %3150 = vmatprep.subr.mxu0 0.0
      %3151 = vmatpush2.msra.mxu0 0.0
      %3152 = vmatprep.subr.mxu0 0.0
      %3153 = vmatpush2.msra.mxu0 0.0
      %3154 = vmatprep.subr.mxu0 0.0
      %3155 = vmatpush2.msra.mxu0 0.0
      %3156 = vmatprep.subr.mxu0 0.0
      %3157 = vmatpush2.msra.mxu0 0.0
      %3158 = vmatprep.subr.mxu0 0.0
      %3159 = vmatpush2.msra.mxu0 0.0
      %3160 = vmatprep.subr.mxu0 0.0
      %3161 = vmatpush2.msra.mxu0 0.0
      %3162 = vmatprep.subr.mxu0 0.0
      %3163 = vmatpush2.msra.mxu0 0.0
      %3164 = vmatprep.subr.mxu0 0.0
      %3165 = vmatpush2.msra.mxu0 0.0
      %3166 = vmatprep.subr.mxu0 0.0
      %3167 = vmatpush2.msra.mxu0 0.0
      %3168 = vmatprep.subr.mxu0 0.0
      %3169 = vmatpush2.msra.mxu0 0.0
      %3170 = vmatprep.mubr.f32.mxu0 0.0
      %3171 = vmatmul.mubr.f32.gmra.mxu0 %v3101
      %v3172 = vpop.f32.mrf.mxu0
      %v3173 = vadd.f32 0.0, %v3172
      %v3174 = vpop.f32.mrf.mxu0
      %3175 = vmatprep.mubr.f32.mxu0 0.0
      %3176 = vmatmul.mubr.f32.gmra.mxu0 %v3104
      %v3177 = vpop.f32.mrf.mxu0
      %v3178 = vadd.f32 0.0, %v3177
      %v3179 = vpop.f32.mrf.mxu0
      %3180 = vdwg.mxu0
      %v3181 = vmax.f32 %v3173, 0.0
      %v3182 = vmax.f32 %v3178, 0.0
      %s3183 = scalar_lea.vmem %s10, 64
      %v3184 = vld [vmem:[%s3183] sm:$0xff]
      %v3185 = vld [vmem:[%s3183 + $0x8] sm:$0xff]
      %v3186 = vld [vmem:[%s3183 + $0x10] sm:$0xff]
      %v3187 = vld [vmem:[%s3183 + $0x18] sm:$0xff]
      %v3188 = vld [vmem:[%s3183 + $0x20] sm:$0xff]
      %v3189 = vld [vmem:[%s3183 + $0x28] sm:$0xff]
      %v3190 = vld [vmem:[%s3183 + $0x30] sm:$0xff]
      %v3191 = vld [vmem:[%s3183 + $0x38] sm:$0xff]
      %v3193 = vsel %vm1957, %v3181, 0
      %v3196 = vsel %vm1957, %v3182, 0
      %3198 = vmatprep.subr.mxu0 0.0
      %3199 = vmatpush1.msra.mxu0 0.0
      %3200 = vmatprep.subr.mxu0 0.0
      %3201 = vmatpush1.msra.mxu0 0.0
      %3202 = vmatprep.subr.mxu0 0.0
      %3203 = vmatpush1.msra.mxu0 0.0
      %3204 = vmatprep.subr.mxu0 0.0
      %3205 = vmatpush1.msra.mxu0 0.0
      %3206 = vmatprep.subr.mxu0 0.0
      %3207 = vmatpush1.msra.mxu0 0.0
      %3208 = vmatprep.subr.mxu0 0.0
      %3209 = vmatpush1.msra.mxu0 0.0
      %3210 = vmatprep.subr.mxu0 0.0
      %3211 = vmatpush1.msra.mxu0 0.0
      %3212 = vmatprep.subr.mxu0 0.0
      %3213 = vmatpush1.msra.mxu0 0.0
      %3214 = vmatprep.subr.mxu0 0.0
      %3215 = vmatpush1.msra.mxu0 %v3191
      %3216 = vmatprep.subr.mxu0 0.0
      %3217 = vmatpush1.msra.mxu0 %v3190
      %3218 = vmatprep.subr.mxu0 0.0
      %3219 = vmatpush1.msra.mxu0 %v3189
      %3220 = vmatprep.subr.mxu0 0.0
      %3221 = vmatpush1.msra.mxu0 %v3188
      %3222 = vmatprep.subr.mxu0 0.0
      %3223 = vmatpush1.msra.mxu0 %v3187
      %3224 = vmatprep.subr.mxu0 0.0
      %3225 = vmatpush1.msra.mxu0 %v3186
      %3226 = vmatprep.subr.mxu0 0.0
      %3227 = vmatpush1.msra.mxu0 %v3185
      %3228 = vmatprep.subr.mxu0 0.0
      %3229 = vmatpush1.msra.mxu0 %v3184
      %3230 = vmatprep.subr.mxu0 0.0
      %3231 = vmatpush2.msra.mxu0 0.0
      %3232 = vmatprep.subr.mxu0 0.0
      %3233 = vmatpush2.msra.mxu0 0.0
      %3234 = vmatprep.subr.mxu0 0.0
      %3235 = vmatpush2.msra.mxu0 0.0
      %3236 = vmatprep.subr.mxu0 0.0
      %3237 = vmatpush2.msra.mxu0 0.0
      %3238 = vmatprep.subr.mxu0 0.0
      %3239 = vmatpush2.msra.mxu0 0.0
      %3240 = vmatprep.subr.mxu0 0.0
      %3241 = vmatpush2.msra.mxu0 0.0
      %3242 = vmatprep.subr.mxu0 0.0
      %3243 = vmatpush2.msra.mxu0 0.0
      %3244 = vmatprep.subr.mxu0 0.0
      %3245 = vmatpush2.msra.mxu0 0.0
      %3246 = vmatprep.subr.mxu0 0.0
      %3247 = vmatpush2.msra.mxu0 0.0
      %3248 = vmatprep.subr.mxu0 0.0
      %3249 = vmatpush2.msra.mxu0 0.0
      %3250 = vmatprep.subr.mxu0 0.0
      %3251 = vmatpush2.msra.mxu0 0.0
      %3252 = vmatprep.subr.mxu0 0.0
      %3253 = vmatpush2.msra.mxu0 0.0
      %3254 = vmatprep.subr.mxu0 0.0
      %3255 = vmatpush2.msra.mxu0 0.0
      %3256 = vmatprep.subr.mxu0 0.0
      %3257 = vmatpush2.msra.mxu0 0.0
      %3258 = vmatprep.subr.mxu0 0.0
      %3259 = vmatpush2.msra.mxu0 0.0
      %3260 = vmatprep.subr.mxu0 0.0
      %3261 = vmatpush2.msra.mxu0 0.0
      %3262 = vmatprep.mubr.f32.mxu0 0.0
      %3263 = vmatmul.mubr.f32.gmra.mxu0 %v3193
      %v3264 = vpop.f32.mrf.mxu0
      %v3265 = vadd.f32 0.0, %v3264
      %v3266 = vpop.f32.mrf.mxu0
      %3267 = vmatprep.mubr.f32.mxu0 0.0
      %3268 = vmatmul.mubr.f32.gmra.mxu0 %v3196
      %v3269 = vpop.f32.mrf.mxu0
      %v3270 = vadd.f32 0.0, %v3269
      %v3271 = vpop.f32.mrf.mxu0
      %3272 = vdwg.mxu0
      %v3273 = vadd.f32 %v3067, %v3265
      %v3274 = vadd.f32 %v3068, %v3270
      %v3275 = vld [vmem:[%s11] sm:$0x1]
      %v3276 = vmul.f32 %v3273, %v3273
      %v3277 = vmul.f32 %v3274, %v3274
      %v3278 = vsel %vm800, %v3276, 0.0
      %3279 = vadd.xlane.f32.xlu0 %v3278
      %v3280 = vpop.xlane.xlu0 %3279
      %v3281 = vsel %vm800, %v3277, 0.0
      %3282 = vadd.xlane.f32.xlu0 %v3281
      %v3283 = vpop.xlane.xlu0 %3282
      %v3284 = vmul.f32 %v3280, %v807
      %v3285 = vmul.f32 %v3283, %v807
      %v3286 = vadd.f32 %v3284, 1e-06
      %v3287 = vadd.f32 %v3285, 1e-06
      %v3288 = vrsqrt.pop %v3286
      %v3289 = vrsqrt.pop %v3287
      %v3290 = vmul.f32 %v3273, %v3288
      %v3291 = vmul.f32 %v3274, %v3289
      %v3293 = vlaneseq
      %v3294 = vshrl.u32 %v3293, 7
      %v3295 = vsub.s32 0, %v3294
      %v3296 = vrot.slane %v3275, %v3295
      %v3298 = vmul.f32 %v3290, %v3296
      %v3299 = vmul.f32 %v3291, %v3296
      %v3300 = vld [vmem:[%s12] sm:$0xff]
      %v3301 = vld [vmem:[%s12 + $0x8] sm:$0xff]
      %v3302 = vld [vmem:[%s12 + $0x10] sm:$0xff]
      %v3303 = vld [vmem:[%s12 + $0x18] sm:$0xff]
      %v3305 = vsel %vm800, %v3298, 0
      %v3308 = vsel %vm800, %v3299, 0
      %3310 = vmatprep.subr.mxu0 0.0
      %3311 = vmatpush1.msra.mxu0 0.0
      %3312 = vmatprep.subr.mxu0 0.0
      %3313 = vmatpush1.msra.mxu0 0.0
      %3314 = vmatprep.subr.mxu0 0.0
      %3315 = vmatpush1.msra.mxu0 0.0
      %3316 = vmatprep.subr.mxu0 0.0
      %3317 = vmatpush1.msra.mxu0 0.0
      %3318 = vmatprep.subr.mxu0 0.0
      %3319 = vmatpush1.msra.mxu0 0.0
      %3320 = vmatprep.subr.mxu0 0.0
      %3321 = vmatpush1.msra.mxu0 0.0
      %3322 = vmatprep.subr.mxu0 0.0
      %3323 = vmatpush1.msra.mxu0 0.0
      %3324 = vmatprep.subr.mxu0 0.0
      %3325 = vmatpush1.msra.mxu0 0.0
      %3326 = vmatprep.subr.mxu0 0.0
      %3327 = vmatpush1.msra.mxu0 0.0
      %3328 = vmatprep.subr.mxu0 0.0
      %3329 = vmatpush1.msra.mxu0 0.0
      %3330 = vmatprep.subr.mxu0 0.0
      %3331 = vmatpush1.msra.mxu0 0.0
      %3332 = vmatprep.subr.mxu0 0.0
      %3333 = vmatpush1.msra.mxu0 0.0
      %3334 = vmatprep.subr.mxu0 0.0
      %3335 = vmatpush1.msra.mxu0 %v3303
      %3336 = vmatprep.subr.mxu0 0.0
      %3337 = vmatpush1.msra.mxu0 %v3302
      %3338 = vmatprep.subr.mxu0 0.0
      %3339 = vmatpush1.msra.mxu0 %v3301
      %3340 = vmatprep.subr.mxu0 0.0
      %3341 = vmatpush1.msra.mxu0 %v3300
      %3342 = vmatprep.subr.mxu0 0.0
      %3343 = vmatpush2.msra.mxu0 0.0
      %3344 = vmatprep.subr.mxu0 0.0
      %3345 = vmatpush2.msra.mxu0 0.0
      %3346 = vmatprep.subr.mxu0 0.0
      %3347 = vmatpush2.msra.mxu0 0.0
      %3348 = vmatprep.subr.mxu0 0.0
      %3349 = vmatpush2.msra.mxu0 0.0
      %3350 = vmatprep.subr.mxu0 0.0
      %3351 = vmatpush2.msra.mxu0 0.0
      %3352 = vmatprep.subr.mxu0 0.0
      %3353 = vmatpush2.msra.mxu0 0.0
      %3354 = vmatprep.subr.mxu0 0.0
      %3355 = vmatpush2.msra.mxu0 0.0
      %3356 = vmatprep.subr.mxu0 0.0
      %3357 = vmatpush2.msra.mxu0 0.0
      %3358 = vmatprep.subr.mxu0 0.0
      %3359 = vmatpush2.msra.mxu0 0.0
      %3360 = vmatprep.subr.mxu0 0.0
      %3361 = vmatpush2.msra.mxu0 0.0
      %3362 = vmatprep.subr.mxu0 0.0
      %3363 = vmatpush2.msra.mxu0 0.0
      %3364 = vmatprep.subr.mxu0 0.0
      %3365 = vmatpush2.msra.mxu0 0.0
      %3366 = vmatprep.subr.mxu0 0.0
      %3367 = vmatpush2.msra.mxu0 0.0
      %3368 = vmatprep.subr.mxu0 0.0
      %3369 = vmatpush2.msra.mxu0 0.0
      %3370 = vmatprep.subr.mxu0 0.0
      %3371 = vmatpush2.msra.mxu0 0.0
      %3372 = vmatprep.subr.mxu0 0.0
      %3373 = vmatpush2.msra.mxu0 0.0
      %3374 = vmatprep.mubr.f32.mxu0 0.0
      %3375 = vmatmul.mubr.f32.gmra.mxu0 %v3305
      %v3376 = vpop.f32.mrf.mxu0
      %v3377 = vadd.f32 0.0, %v3376
      %v3378 = vpop.f32.mrf.mxu0
      %3379 = vmatprep.mubr.f32.mxu0 0.0
      %3380 = vmatmul.mubr.f32.gmra.mxu0 %v3308
      %v3381 = vpop.f32.mrf.mxu0
      %v3382 = vadd.f32 0.0, %v3381
      %v3383 = vpop.f32.mrf.mxu0
      %3384 = vdwg.mxu0
      %3385 = vst [vmem:[%s471] sm:$0xff] %v3377
      %3386 = vst [vmem:[%s471 + $0x8] sm:$0xff] %v3382
      %p3387 = scmp.lt.s32.totalorder %s24, 1
      %s3388 = scalar_select %p3387, %s24, 1
      %s3389 = smul.addr %s3388, 2
      %s3390 = smul.addr %s3389, 8
      %s3391 = scalar_lea.vmem %s13, %s3390
      // Predicated region
      $region73: #{forward.1} parent=71 // pred_check
        %p3392 = pneg %p330
      $region74: #{forward.1} parent=71 // pred_check_branch
        %3394 = sbr.rel (%p3392) target = $region76
      $region75: #{forward.1} parent=71 // pred_region
        _
      $region76: #{forward.1} parent=71 // pred_fallthru
        _
    $region72: #{forward.1} parent=5 // pred_fallthru
      _
    %p3395 = scmp.le.s32.totalorder 2, %s19
    // Predicated region
    $region77: #{forward.1} parent=5 // pred_check
      %p3396 = pneg %p3395
    $region78: #{forward.1} parent=5 // pred_check_branch
      %3398 = sbr.rel (%p3396) target = $region80
    $region79: #{forward.1} parent=5 // pred_region
      %s3399 = ssub.s32 %s19, 2
      // Predicated region
      $region81: #{forward.1} parent=79 // pred_check
        %p3400 = pneg %p336
      $region82: #{forward.1} parent=79 // pred_check_branch
        %3402 = sbr.rel (%p3400) target = $region84
      $region83: #{forward.1} parent=79 // pred_region
        %p3403 = scmp.lt.s32.totalorder %s25, 1
        %s3404 = scalar_select %p3403, %s25, 1
        %s3405 = smul.addr %s3404, 2
        %s3406 = smul.addr %s3405, 8
        %s3407 = scalar_lea.vmem %s13, %s3406
      $region84: #{forward.1} parent=79 // pred_fallthru
        _
    $region80: #{forward.1} parent=5 // pred_fallthru
      _
  $region6: #{forward.1} parent=0 // loop_footer
    %s23 = sadd.s32 1, %s19
  $region7: #{forward.1} parent=0 // loop_footer_branch
    %18 = sbr.rel target = $region3
  $region8: #{forward.1} parent=0 // loop_exit
    _

</llo_original>
